<compile_context>
chip_gen: v7x
topology: tpu7x:2x2x1
jax: 0.10.0
libtpu: 0.0.40
codegen_flags: <defaults>
</compile_context>

<pallas_src>
from functools import partial

import jax
import jax.numpy as jnp
from jax.experimental import pallas as pl
from jax.experimental.pallas import tpu as pltpu

LEAKY_SLOPE = 0.2


def _attention_kernel(q_ref, kflat_ref, aq_ref, ak_ref, o_ref, *, n_paths, num_attn):
    """One batch block.

    q_ref     : [dq, bt]      pre-computed variable embedding block (query_embed[0])
    kflat_ref : [dk, n*bt]    key embeddings for this block, paths laid out along lanes
                              (column j = path (j // bt), batch col (j % bt))
    aq_ref    : [dq, K]       query half of atten_vecs
    ak_ref    : [dk, K]       key half of atten_vecs
    o_ref     : [dk, bt]      combined output block
    """
    q = q_ref[...].astype(jnp.float32)        # [dq, bt]
    kf = kflat_ref[...].astype(jnp.float32)   # [dk, n*bt]
    aq = aq_ref[...].astype(jnp.float32)      # [dq, K]
    ak = ak_ref[...].astype(jnp.float32)      # [dk, K]

    bt = q.shape[1]
    num_heads = aq.shape[1]

    # ---- attention logits -------------------------------------------------
    # Single MXU contraction over dk for ALL query paths at once -> [n*bt, K].
    key_scores = jax.lax.dot_general(
        kf, ak, (((0,), (0,)), ((), ())), preferred_element_type=jnp.float32)
    # Leading-dim split (no lane movement: bt covers whole sublane tiles).
    key_scores = key_scores.reshape(n_paths, bt, num_heads)            # [n, bt, K]
    q_scores = jax.lax.dot_general(
        q, aq, (((0,), (0,)), ((), ())), preferred_element_type=jnp.float32)  # [bt, K]
    logits = key_scores + q_scores[None, :, :]                         # [n, bt, K]

    # activation = LeakyReLU (GAT Eq. 3)
    act = jnp.where(logits >= 0, logits, LEAKY_SLOPE * logits)

    # softmax over the query-path axis (torch Softmax(dim=0)), numerically stable.
    m = jnp.max(act, axis=0, keepdims=True)
    e = jnp.exp(act - m)
    denom = jnp.sum(e, axis=0, keepdims=True)
    attn = e * pl.reciprocal(denom, approx=True)                       # divide -> EUP slot

    # Attention weights do not depend on d: reduce over heads first.   [n, bt]
    head_w = jnp.sum(attn, axis=2)

    # ---- combine ------------------------------------------------------------
    # comb[d, b] = sum_n head_w[n, b] * key[n, d, b]
    # Unrolled accumulation keeps the live set to one [dk, bt] accumulator
    # (no [n, dk, bt] temporary).
    comb = head_w[0][None, :] * kf[:, 0:bt]
    for i in range(1, n_paths):
        comb = comb + head_w[i][None, :] * kf[:, i * bt:(i + 1) * bt]
    comb = comb * (1.0 / num_attn)

    # f_activation = ReLU; torch returns combined.t() -> [dk, bt], which comb already is.
    o_ref[...] = jnp.maximum(comb, 0.0).astype(o_ref.dtype)


def _pick_batch_tile(b):
    # Keep the per-block lane dim a multiple of 128 when possible, and bound the
    # resident key slab so it fits VMEM with double-buffering (matters on v7x: 64 MiB).
    for bt in (512, 256, 128):
        if b % bt == 0:
            return bt
    return b  # small / ragged batch: one full-width block


def intersect_concat_attention(query_embed, key_embeds, atten_vecs, num_attn):
    """query_embed: [1, dq, b]; key_embeds: [n, dk, b]; atten_vecs: [dq+dk, K] -> [dk, b]."""
    q = query_embed[0]                        # [dq, b]   (mirrors torch query_embed[0])
    dq, b = q.shape
    n, dk, b_k = key_embeds.shape
    assert b_k == b
    assert atten_vecs.shape[0] == dq + dk, "atten_vecs rows must equal query_dim + key_dim"
    num_heads = atten_vecs.shape[1]
    aq = atten_vecs[:dq]                      # [dq, K]  split at query_dim (not at dk)
    ak = atten_vecs[dq:]                      # [dk, K]

    bt = _pick_batch_tile(b)
    nb = b // bt

    # Layout plumbing in plain JAX (outside the kernel): present each batch block's keys
    # as a lane-dense [dk, n*bt] slab so the kernel issues ONE contraction per block.
    key_flat = (
        jnp.transpose(key_embeds, (1, 0, 2))      # [dk, n, b]
        .reshape(dk, n, nb, bt)
        .transpose(2, 0, 1, 3)                    # [nb, dk, n, bt]
        .reshape(nb, dk, n * bt)
    )

    kernel = partial(_attention_kernel, n_paths=n, num_attn=num_attn)
    return pl.pallas_call(
        kernel,
        out_shape=jax.ShapeDtypeStruct((dk, b), jnp.float32),
        grid=(nb,),
        in_specs=[
            pl.BlockSpec((dq, bt), lambda i: (0, i)),                # q batch block
            pl.BlockSpec((None, dk, n * bt), lambda i: (i, 0, 0)),   # key slab for block i
            pl.BlockSpec((dq, num_heads), lambda i: (0, 0)),         # aq (replicated)
            pl.BlockSpec((dk, num_heads), lambda i: (0, 0)),         # ak (replicated)
        ],
        out_specs=pl.BlockSpec((dk, bt), lambda i: (0, i)),
        compiler_params=pltpu.CompilerParams(
            dimension_semantics=("parallel",)),   # batch blocks shard across v7x's 2 TCs
    )(q, key_flat, aq, ak)


def reference(query_embed, key_embeds, atten_vecs, num_attn):
    """Pure-JAX transcription of the PyTorch forward (for verification)."""
    n, d, b = key_embeds.shape
    qexp = jnp.broadcast_to(query_embed[0][None, :, :], (n, d, b))
    concat = jnp.concatenate([qexp, key_embeds], axis=1).transpose(0, 2, 1)   # [n, b, 2d]
    attn = jnp.einsum("nbd,dk->nbk", concat, atten_vecs)
    attn = jnp.where(attn >= 0, attn, LEAKY_SLOPE * attn)                     # LeakyReLU
    attn = jax.nn.softmax(attn, axis=0)                                       # Softmax(dim=0)
    attn = attn.transpose(1, 2, 0)                                            # [b, K, n]
    key_ = jnp.transpose(key_embeds, (2, 0, 1))                               # [b, n, d]
    combined = jnp.einsum("bkn,bnd->bkd", attn, key_)
    combined = jnp.sum(combined, axis=1) * (1.0 / num_attn)                   # [b, d]
    combined = jnp.maximum(combined, 0.0)                                     # ReLU
    return combined.T                                                         # [d, b]


if __name__ == "__main__":
    n_paths, d, b, num_attn = 8, 32, 16, 2

    root = jax.random.PRNGKey(0)
    k_q, k_k, k_a = jax.random.split(root, 3)

    query_embed = jax.random.normal(k_q, (1, d, b), dtype=jnp.float32)
    key_embeds = jax.random.normal(k_k, (n_paths, d, b), dtype=jnp.float32)

    # xavier_uniform_ init for atten_vecs [query_dim + key_dim, num_attn]
    fan_in, fan_out = 2 * d, num_attn
    limit = (6.0 / (fan_in + fan_out)) ** 0.5
    atten_vecs = jax.random.uniform(
        k_a, (2 * d, num_attn), minval=-limit, maxval=limit, dtype=jnp.float32
    )

    out = intersect_concat_attention(query_embed, key_embeds, atten_vecs, num_attn)
    out = jax.block_until_ready(out)

    ref = reference(query_embed, key_embeds, atten_vecs, num_attn)
    assert out.shape == (d, b), out.shape
    # Tolerance relaxed slightly because the softmax denominator uses the EUP
    # approximate reciprocal (pl.reciprocal(approx=True)).
    max_err = float(jnp.max(jnp.abs(out - ref)))
    assert max_err < 5e-3, max_err

    print("KERNEL_OK")
</pallas_src>

<mosaic_0001>
module attributes {stable_mosaic.version = 11 : i64} {
  func.func @_attention_kernel(%arg0: i32, %arg1: memref<32x16xf32, #tpu.memory_space<vmem>>, %arg2: memref<1x32x128xf32, #tpu.memory_space<vmem>>, %arg3: memref<32x2xf32, #tpu.memory_space<vmem>>, %arg4: memref<32x2xf32, #tpu.memory_space<vmem>>, %arg5: memref<32x16xf32, #tpu.memory_space<vmem>>) attributes {dimension_semantics = [#tpu.dimension_semantics<parallel>], iteration_bounds = array<i64: 1>, scalar_prefetch = 0 : i64, scratch_operands = 0 : i64, tpu.core_type = #tpu.core_type<tc>, window_params = [{transform_indices = @transform_0, window_bounds = array<i64: 32, 16>}, {transform_indices = @transform_1, window_bounds = array<i64: 1, 32, 128>}, {pipeline_mode = #tpu.pipeline_mode<synchronous>, transform_indices = @transform_2, window_bounds = array<i64: 32, 2>}, {pipeline_mode = #tpu.pipeline_mode<synchronous>, transform_indices = @transform_3, window_bounds = array<i64: 32, 2>}, {transform_indices = @transform_4, window_bounds = array<i64: 32, 16>}]} {
    %c0 = arith.constant 0 : index
    %c0_0 = arith.constant 0 : index
    %0 = vector.load %arg1[%c0, %c0_0] : memref<32x16xf32, #tpu.memory_space<vmem>>, vector<32x16xf32>
    %c0_1 = arith.constant 0 : index
    %c0_2 = arith.constant 0 : index
    %c0_3 = arith.constant 0 : index
    %1 = vector.load %arg2[%c0_1, %c0_2, %c0_3] : memref<1x32x128xf32, #tpu.memory_space<vmem>>, vector<1x32x128xf32>
    %2 = vector.shape_cast %1 : vector<1x32x128xf32> to vector<32x128xf32>
    %c0_4 = arith.constant 0 : index
    %c0_5 = arith.constant 0 : index
    %3 = vector.load %arg3[%c0_4, %c0_5] : memref<32x2xf32, #tpu.memory_space<vmem>>, vector<32x2xf32>
    %c0_6 = arith.constant 0 : index
    %c0_7 = arith.constant 0 : index
    %4 = vector.load %arg4[%c0_6, %c0_7] : memref<32x2xf32, #tpu.memory_space<vmem>>, vector<32x2xf32>
    %cst = arith.constant dense<0.000000e+00> : vector<128x2xf32>
    %5 = tpu.matmul %2, %4, %cst {dimension_numbers = #tpu.dot_dimension_numbers<[0], [0], [1], [1], [0, 1, 1, 1], [], []>} : vector<32x128xf32>, vector<32x2xf32>, vector<128x2xf32> -> vector<128x2xf32>
    %6 = vector.shape_cast %5 : vector<128x2xf32> to vector<8x16x2xf32>
    %cst_8 = arith.constant dense<0.000000e+00> : vector<16x2xf32>
    %7 = tpu.matmul %0, %3, %cst_8 {dimension_numbers = #tpu.dot_dimension_numbers<[0], [0], [1], [1], [0, 1, 1, 1], [], []>} : vector<32x16xf32>, vector<32x2xf32>, vector<16x2xf32> -> vector<16x2xf32>
    %8 = vector.shape_cast %7 : vector<16x2xf32> to vector<1x16x2xf32>
    %9 = vector.broadcast %8 : vector<1x16x2xf32> to vector<8x16x2xf32>
    %10 = arith.addf %6, %9 : vector<8x16x2xf32>
    %cst_9 = arith.constant 0.000000e+00 : f32
    %11 = vector.broadcast %cst_9 : f32 to vector<8x16x2xf32>
    %12 = arith.cmpf oge, %10, %11 : vector<8x16x2xf32>
    %cst_10 = arith.constant 2.000000e-01 : f32
    %13 = vector.broadcast %cst_10 : f32 to vector<8x16x2xf32>
    %14 = arith.mulf %13, %10 : vector<8x16x2xf32>
    %15 = arith.select %12, %10, %14 : vector<8x16x2xi1>, vector<8x16x2xf32>
    %cst_11 = arith.constant dense<0xFF800000> : vector<16x2xf32>
    %16 = vector.multi_reduction <maximumf>, %15, %cst_11 [0] : vector<8x16x2xf32> to vector<16x2xf32>
    %17 = vector.shape_cast %16 : vector<16x2xf32> to vector<1x16x2xf32>
    %18 = vector.broadcast %17 : vector<1x16x2xf32> to vector<8x16x2xf32>
    %19 = arith.subf %15, %18 : vector<8x16x2xf32>
    %20 = math.exp %19 : vector<8x16x2xf32>
    %cst_12 = arith.constant dense<0.000000e+00> : vector<16x2xf32>
    %21 = vector.multi_reduction <add>, %20, %cst_12 [0] : vector<8x16x2xf32> to vector<16x2xf32>
    %22 = vector.shape_cast %21 : vector<16x2xf32> to vector<1x16x2xf32>
    %23 = tpu.reciprocal %22 {approx = true} : vector<1x16x2xf32> -> vector<1x16x2xf32>
    %24 = vector.broadcast %23 : vector<1x16x2xf32> to vector<8x16x2xf32>
    %25 = arith.mulf %20, %24 : vector<8x16x2xf32>
    %cst_13 = arith.constant dense<0.000000e+00> : vector<8x16xf32>
    %26 = vector.multi_reduction <add>, %25, %cst_13 [2] : vector<8x16x2xf32> to vector<8x16xf32>
    %27 = vector.extract_strided_slice %26 {offsets = [0, 0], sizes = [1, 16], strides = [1, 1]} : vector<8x16xf32> to vector<1x16xf32>
    %28 = vector.shape_cast %27 : vector<1x16xf32> to vector<16xf32>
    %29 = vector.shape_cast %28 : vector<16xf32> to vector<1x16xf32>
    %30 = vector.extract_strided_slice %2 {offsets = [0, 0], sizes = [32, 16], strides = [1, 1]} : vector<32x128xf32> to vector<32x16xf32>
    %31 = vector.broadcast %29 : vector<1x16xf32> to vector<32x16xf32>
    %32 = arith.mulf %31, %30 : vector<32x16xf32>
    %33 = vector.extract_strided_slice %26 {offsets = [1, 0], sizes = [1, 16], strides = [1, 1]} : vector<8x16xf32> to vector<1x16xf32>
    %34 = vector.shape_cast %33 : vector<1x16xf32> to vector<16xf32>
    %35 = vector.shape_cast %34 : vector<16xf32> to vector<1x16xf32>
    %36 = vector.extract_strided_slice %2 {offsets = [0, 16], sizes = [32, 16], strides = [1, 1]} : vector<32x128xf32> to vector<32x16xf32>
    %37 = vector.broadcast %35 : vector<1x16xf32> to vector<32x16xf32>
    %38 = arith.mulf %37, %36 : vector<32x16xf32>
    %39 = arith.addf %32, %38 : vector<32x16xf32>
    %40 = vector.extract_strided_slice %26 {offsets = [2, 0], sizes = [1, 16], strides = [1, 1]} : vector<8x16xf32> to vector<1x16xf32>
    %41 = vector.shape_cast %40 : vector<1x16xf32> to vector<16xf32>
    %42 = vector.shape_cast %41 : vector<16xf32> to vector<1x16xf32>
    %43 = vector.extract_strided_slice %2 {offsets = [0, 32], sizes = [32, 16], strides = [1, 1]} : vector<32x128xf32> to vector<32x16xf32>
    %44 = vector.broadcast %42 : vector<1x16xf32> to vector<32x16xf32>
    %45 = arith.mulf %44, %43 : vector<32x16xf32>
    %46 = arith.addf %39, %45 : vector<32x16xf32>
    %47 = vector.extract_strided_slice %26 {offsets = [3, 0], sizes = [1, 16], strides = [1, 1]} : vector<8x16xf32> to vector<1x16xf32>
    %48 = vector.shape_cast %47 : vector<1x16xf32> to vector<16xf32>
    %49 = vector.shape_cast %48 : vector<16xf32> to vector<1x16xf32>
    %50 = vector.extract_strided_slice %2 {offsets = [0, 48], sizes = [32, 16], strides = [1, 1]} : vector<32x128xf32> to vector<32x16xf32>
    %51 = vector.broadcast %49 : vector<1x16xf32> to vector<32x16xf32>
    %52 = arith.mulf %51, %50 : vector<32x16xf32>
    %53 = arith.addf %46, %52 : vector<32x16xf32>
    %54 = vector.extract_strided_slice %26 {offsets = [4, 0], sizes = [1, 16], strides = [1, 1]} : vector<8x16xf32> to vector<1x16xf32>
    %55 = vector.shape_cast %54 : vector<1x16xf32> to vector<16xf32>
    %56 = vector.shape_cast %55 : vector<16xf32> to vector<1x16xf32>
    %57 = vector.extract_strided_slice %2 {offsets = [0, 64], sizes = [32, 16], strides = [1, 1]} : vector<32x128xf32> to vector<32x16xf32>
    %58 = vector.broadcast %56 : vector<1x16xf32> to vector<32x16xf32>
    %59 = arith.mulf %58, %57 : vector<32x16xf32>
    %60 = arith.addf %53, %59 : vector<32x16xf32>
    %61 = vector.extract_strided_slice %26 {offsets = [5, 0], sizes = [1, 16], strides = [1, 1]} : vector<8x16xf32> to vector<1x16xf32>
    %62 = vector.shape_cast %61 : vector<1x16xf32> to vector<16xf32>
    %63 = vector.shape_cast %62 : vector<16xf32> to vector<1x16xf32>
    %64 = vector.extract_strided_slice %2 {offsets = [0, 80], sizes = [32, 16], strides = [1, 1]} : vector<32x128xf32> to vector<32x16xf32>
    %65 = vector.broadcast %63 : vector<1x16xf32> to vector<32x16xf32>
    %66 = arith.mulf %65, %64 : vector<32x16xf32>
    %67 = arith.addf %60, %66 : vector<32x16xf32>
    %68 = vector.extract_strided_slice %26 {offsets = [6, 0], sizes = [1, 16], strides = [1, 1]} : vector<8x16xf32> to vector<1x16xf32>
    %69 = vector.shape_cast %68 : vector<1x16xf32> to vector<16xf32>
    %70 = vector.shape_cast %69 : vector<16xf32> to vector<1x16xf32>
    %71 = vector.extract_strided_slice %2 {offsets = [0, 96], sizes = [32, 16], strides = [1, 1]} : vector<32x128xf32> to vector<32x16xf32>
    %72 = vector.broadcast %70 : vector<1x16xf32> to vector<32x16xf32>
    %73 = arith.mulf %72, %71 : vector<32x16xf32>
    %74 = arith.addf %67, %73 : vector<32x16xf32>
    %75 = vector.extract_strided_slice %26 {offsets = [7, 0], sizes = [1, 16], strides = [1, 1]} : vector<8x16xf32> to vector<1x16xf32>
    %76 = vector.shape_cast %75 : vector<1x16xf32> to vector<16xf32>
    %77 = vector.shape_cast %76 : vector<16xf32> to vector<1x16xf32>
    %78 = vector.extract_strided_slice %2 {offsets = [0, 112], sizes = [32, 16], strides = [1, 1]} : vector<32x128xf32> to vector<32x16xf32>
    %79 = vector.broadcast %77 : vector<1x16xf32> to vector<32x16xf32>
    %80 = arith.mulf %79, %78 : vector<32x16xf32>
    %81 = arith.addf %74, %80 : vector<32x16xf32>
    %cst_14 = arith.constant 5.000000e-01 : f32
    %82 = vector.broadcast %cst_14 : f32 to vector<32x16xf32>
    %83 = arith.mulf %81, %82 : vector<32x16xf32>
    %cst_15 = arith.constant 0.000000e+00 : f32
    %84 = vector.broadcast %cst_15 : f32 to vector<32x16xf32>
    %85 = arith.maximumf %83, %84 : vector<32x16xf32>
    %c0_16 = arith.constant 0 : index
    %c0_17 = arith.constant 0 : index
    %86 = vector.load %arg5[%c0_16, %c0_17] : memref<32x16xf32, #tpu.memory_space<vmem>>, vector<32x16xf32>
    tpu.vector_store %arg5[%c0_16, %c0_17], %85 {strides = array<i32>} : memref<32x16xf32, #tpu.memory_space<vmem>>, vector<32x16xf32>,
    return
  }
  func.func @transform_0(%arg0: i32) -> (i32, i32) {
    %c0_i32 = arith.constant 0 : i32
    %c0_i32_0 = arith.constant 0 : i32
    return %c0_i32, %arg0 : i32, i32
  }
  func.func @transform_1(%arg0: i32) -> (i32, i32, i32) {
    %c0_i32 = arith.constant 0 : i32
    %c0_i32_0 = arith.constant 0 : i32
    %c0_i32_1 = arith.constant 0 : i32
    return %arg0, %c0_i32, %c0_i32_0 : i32, i32, i32
  }
  func.func @transform_2(%arg0: i32) -> (i32, i32) {
    %c0_i32 = arith.constant 0 : i32
    %c0_i32_0 = arith.constant 0 : i32
    %c0_i32_1 = arith.constant 0 : i32
    return %c0_i32, %c0_i32_0 : i32, i32
  }
  func.func @transform_3(%arg0: i32) -> (i32, i32) {
    %c0_i32 = arith.constant 0 : i32
    %c0_i32_0 = arith.constant 0 : i32
    %c0_i32_1 = arith.constant 0 : i32
    return %c0_i32, %c0_i32_0 : i32, i32
  }
  func.func @transform_4(%arg0: i32) -> (i32, i32) {
    %c0_i32 = arith.constant 0 : i32
    %c0_i32_0 = arith.constant 0 : i32
    return %c0_i32, %arg0 : i32, i32
  }
}

</mosaic_0001>

<llo_original>
// kernel: tpu_custom_call.1
$region0: #{tpu_custom_call.1}
  #allocation0 [shape = 'u32[]', space=smem, size = 0x4, offset = 0x4, fixed_abs, tag = 'smem constant byte address 0x4 - core index']
  #allocation1 [shape = 'u32[144,128]{1,0:T(1,128)}', space=vmem, size = 0x12000, scoped, tag = 'internal scratch']
  %s0 = inlined_call_operand.vmem [shape: f32[32,16], index: 0, kind: input, shape index: {}]
  %s1 = inlined_call_operand.vmem [shape: f32[1,32,128], index: 1, kind: input, shape index: {}]
  %s2 = inlined_call_operand.vmem [shape: f32[32,2], index: 2, kind: input, shape index: {}]
  %s3 = inlined_call_operand.vmem [shape: f32[32,2], index: 3, kind: input, shape index: {}]
  %s4 = inlined_call_operand.vmem [shape: f32[32,16], index: 4, kind: output, shape index: {}]
  %s5 = sld [smem:[#allocation0]]
  $region26: #{tpu_custom_call.1} parent=0
    _
  %s7 = ssub.s32 1, %s5
  %s8 = scalar_select 0, %s7, %s5
  // Predicated region
  $region2: #{tpu_custom_call.1} parent=0 // pred_check
    _
  $region3: #{tpu_custom_call.1} parent=0 // pred_check_branch
    %10 = sbr.rel (0) target = $region5
  $region4: #{tpu_custom_call.1} parent=0 // pred_region
    _
  $region5: #{tpu_custom_call.1} parent=0 // pred_fallthru
    _
  // Predicated region
  $region6: #{tpu_custom_call.1} parent=0 // pred_check
    _
  $region7: #{tpu_custom_call.1} parent=0 // pred_check_branch
    %12 = sbr.rel (0) target = $region9
  $region8: #{tpu_custom_call.1} parent=0 // pred_region
    _
  $region9: #{tpu_custom_call.1} parent=0 // pred_fallthru
    _
  // Predicated region
  $region10: #{tpu_custom_call.1} parent=0 // pred_check
    _
  $region11: #{tpu_custom_call.1} parent=0 // pred_check_branch
    %14 = sbr.rel (0) target = $region13
  $region12: #{tpu_custom_call.1} parent=0 // pred_region
    _
  $region13: #{tpu_custom_call.1} parent=0 // pred_fallthru
    _
  // Predicated region
  $region14: #{tpu_custom_call.1} parent=0 // pred_check
    _
  $region15: #{tpu_custom_call.1} parent=0 // pred_check_branch
    %16 = sbr.rel (0) target = $region17
  $region16: #{tpu_custom_call.1} parent=0 // pred_region
    _
  $region17: #{tpu_custom_call.1} parent=0 // pred_fallthru
    _
  %v17 = vld [vmem:[%s0] sm:$0xff]
  %v18 = vld [vmem:[%s0 + $0x8] sm:$0xff]
  %v19 = vld [vmem:[%s0 + $0x10] sm:$0xff]
  %v20 = vld [vmem:[%s0 + $0x18] sm:$0xff]
  %v21 = vld [vmem:[%s1] sm:$0xff]
  %v22 = vld [vmem:[%s1 + $0x8] sm:$0xff]
  %v23 = vld [vmem:[%s1 + $0x10] sm:$0xff]
  %v24 = vld [vmem:[%s1 + $0x18] sm:$0xff]
  %v25 = vld [vmem:[%s2] sm:$0xff]
  %v26 = vld [vmem:[%s2 + $0x8] sm:$0xff]
  %v27 = vld [vmem:[%s2 + $0x10] sm:$0xff]
  %v28 = vld [vmem:[%s2 + $0x18] sm:$0xff]
  %v29 = vld [vmem:[%s3] sm:$0xff]
  %v30 = vld [vmem:[%s3 + $0x8] sm:$0xff]
  %v31 = vld [vmem:[%s3 + $0x10] sm:$0xff]
  %v32 = vld [vmem:[%s3 + $0x18] sm:$0xff]
  %33 = vxpose.xlu0.b32.start [1/16] %v21, 128
  %34 = vxpose.xlu0.b32.cont [2/16] %v22, 128
  %35 = vxpose.xlu0.b32.cont [3/16] %v23, 128
  %36 = vxpose.xlu0.b32.cont [4/16] %v24, 128
  %37 = vxpose.xlu0.b32.cont [5/16] 0.0, 128
  %38 = vxpose.xlu0.b32.cont [6/16] 0.0, 128
  %39 = vxpose.xlu0.b32.cont [7/16] 0.0, 128
  %40 = vxpose.xlu0.b32.cont [8/16] 0.0, 128
  %41 = vxpose.xlu0.b32.cont [9/16] 0.0, 128
  %42 = vxpose.xlu0.b32.cont [10/16] 0.0, 128
  %43 = vxpose.xlu0.b32.cont [11/16] 0.0, 128
  %44 = vxpose.xlu0.b32.cont [12/16] 0.0, 128
  %45 = vxpose.xlu0.b32.cont [13/16] 0.0, 128
  %46 = vxpose.xlu0.b32.cont [14/16] 0.0, 128
  %47 = vxpose.xlu0.b32.cont [15/16] 0.0, 128
  %48 = vxpose.xlu0.b32.end [16/16] 0.0, 128
  %v49 = vpop.trf.xlu0
  %v50 = vpop.trf.xlu0
  %v51 = vpop.trf.xlu0
  %v52 = vpop.trf.xlu0
  %v53 = vpop.trf.xlu0
  %v54 = vpop.trf.xlu0
  %v55 = vpop.trf.xlu0
  %v56 = vpop.trf.xlu0
  %v57 = vpop.trf.xlu0
  %v58 = vpop.trf.xlu0
  %v59 = vpop.trf.xlu0
  %v60 = vpop.trf.xlu0
  %v61 = vpop.trf.xlu0
  %v62 = vpop.trf.xlu0
  %v63 = vpop.trf.xlu0
  %v64 = vpop.trf.xlu0
  %vm65 = vcmask 261120
  %v67 = vsel %vm65, %v49, 0
  %v70 = vsel %vm65, %v50, 0
  %v73 = vsel %vm65, %v51, 0
  %v76 = vsel %vm65, %v52, 0
  %v79 = vsel %vm65, %v53, 0
  %v82 = vsel %vm65, %v54, 0
  %v85 = vsel %vm65, %v55, 0
  %v88 = vsel %vm65, %v56, 0
  %v91 = vsel %vm65, %v57, 0
  %v94 = vsel %vm65, %v58, 0
  %v97 = vsel %vm65, %v59, 0
  %v100 = vsel %vm65, %v60, 0
  %v103 = vsel %vm65, %v61, 0
  %v106 = vsel %vm65, %v62, 0
  %v109 = vsel %vm65, %v63, 0
  %v112 = vsel %vm65, %v64, 0
  %114 = vmatprep.subr.mxu0 0.0
  %115 = vmatpush1.msra.mxu0 %v29
  %116 = vmatprep.subr.mxu0 0.0
  %117 = vmatpush1.msra.mxu0 %v30
  %118 = vmatprep.subr.mxu0 0.0
  %119 = vmatpush1.msra.mxu0 %v31
  %120 = vmatprep.subr.mxu0 0.0
  %121 = vmatpush1.msra.mxu0 %v32
  %122 = vmatprep.subr.mxu0 0.0
  %123 = vmatpush1.msra.mxu0 0.0
  %124 = vmatprep.subr.mxu0 0.0
  %125 = vmatpush1.msra.mxu0 0.0
  %126 = vmatprep.subr.mxu0 0.0
  %127 = vmatpush1.msra.mxu0 0.0
  %128 = vmatprep.subr.mxu0 0.0
  %129 = vmatpush1.msra.mxu0 0.0
  %130 = vmatprep.subr.mxu0 0.0
  %131 = vmatpush1.msra.mxu0 0.0
  %132 = vmatprep.subr.mxu0 0.0
  %133 = vmatpush1.msra.mxu0 0.0
  %134 = vmatprep.subr.mxu0 0.0
  %135 = vmatpush1.msra.mxu0 0.0
  %136 = vmatprep.subr.mxu0 0.0
  %137 = vmatpush1.msra.mxu0 0.0
  %138 = vmatprep.subr.mxu0 0.0
  %139 = vmatpush1.msra.mxu0 0.0
  %140 = vmatprep.subr.mxu0 0.0
  %141 = vmatpush1.msra.mxu0 0.0
  %142 = vmatprep.subr.mxu0 0.0
  %143 = vmatpush1.msra.mxu0 0.0
  %144 = vmatprep.subr.mxu0 0.0
  %145 = vmatpush1.msra.mxu0 0.0
  %146 = vmatprep.subr.mxu0 0.0
  %147 = vmatpush1.msra.mxu0 0.0
  %148 = vmatprep.subr.mxu0 0.0
  %149 = vmatpush1.msra.mxu0 0.0
  %150 = vmatprep.subr.mxu0 0.0
  %151 = vmatpush1.msra.mxu0 0.0
  %152 = vmatprep.subr.mxu0 0.0
  %153 = vmatpush1.msra.mxu0 0.0
  %154 = vmatprep.subr.mxu0 0.0
  %155 = vmatpush1.msra.mxu0 0.0
  %156 = vmatprep.subr.mxu0 0.0
  %157 = vmatpush1.msra.mxu0 0.0
  %158 = vmatprep.subr.mxu0 0.0
  %159 = vmatpush1.msra.mxu0 0.0
  %160 = vmatprep.subr.mxu0 0.0
  %161 = vmatpush1.msra.mxu0 0.0
  %162 = vmatprep.subr.mxu0 0.0
  %163 = vmatpush1.msra.mxu0 0.0
  %164 = vmatprep.subr.mxu0 0.0
  %165 = vmatpush1.msra.mxu0 0.0
  %166 = vmatprep.subr.mxu0 0.0
  %167 = vmatpush1.msra.mxu0 0.0
  %168 = vmatprep.subr.mxu0 0.0
  %169 = vmatpush1.msra.mxu0 0.0
  %170 = vmatprep.subr.mxu0 0.0
  %171 = vmatpush1.msra.mxu0 0.0
  %172 = vmatprep.subr.mxu0 0.0
  %173 = vmatpush1.msra.mxu0 0.0
  %174 = vmatprep.subr.mxu0 0.0
  %175 = vmatpush1.msra.mxu0 0.0
  %176 = vmatprep.subr.mxu0 0.0
  %177 = vmatpush1.msra.mxu0 0.0
  %178 = vmatprep.mubr.f32.mxu0 0.0
  %179 = vmatmul.mubr.f32.gmra.mrb[0].mxu0 %v67
  %v180 = vpop.f32.mrb[0].mxu0
  %v181 = vadd.f32 0.0, %v180
  %v182 = vpop.f32.mrb[0].mxu0
  %183 = vmatprep.mubr.f32.mxu0 0.0
  %184 = vmatmul.mubr.f32.gmra.mrb[0].mxu0 %v70
  %v185 = vpop.f32.mrb[0].mxu0
  %v186 = vadd.f32 0.0, %v185
  %v187 = vpop.f32.mrb[0].mxu0
  %188 = vmatprep.mubr.f32.mxu0 0.0
  %189 = vmatmul.mubr.f32.gmra.mrb[0].mxu0 %v73
  %v190 = vpop.f32.mrb[0].mxu0
  %v191 = vadd.f32 0.0, %v190
  %v192 = vpop.f32.mrb[0].mxu0
  %193 = vmatprep.mubr.f32.mxu0 0.0
  %194 = vmatmul.mubr.f32.gmra.mrb[0].mxu0 %v76
  %v195 = vpop.f32.mrb[0].mxu0
  %v196 = vadd.f32 0.0, %v195
  %v197 = vpop.f32.mrb[0].mxu0
  %198 = vmatprep.mubr.f32.mxu0 0.0
  %199 = vmatmul.mubr.f32.gmra.mrb[0].mxu0 %v79
  %v200 = vpop.f32.mrb[0].mxu0
  %v201 = vadd.f32 0.0, %v200
  %v202 = vpop.f32.mrb[0].mxu0
  %203 = vmatprep.mubr.f32.mxu0 0.0
  %204 = vmatmul.mubr.f32.gmra.mrb[0].mxu0 %v82
  %v205 = vpop.f32.mrb[0].mxu0
  %v206 = vadd.f32 0.0, %v205
  %v207 = vpop.f32.mrb[0].mxu0
  %208 = vmatprep.mubr.f32.mxu0 0.0
  %209 = vmatmul.mubr.f32.gmra.mrb[0].mxu0 %v85
  %v210 = vpop.f32.mrb[0].mxu0
  %v211 = vadd.f32 0.0, %v210
  %v212 = vpop.f32.mrb[0].mxu0
  %213 = vmatprep.mubr.f32.mxu0 0.0
  %214 = vmatmul.mubr.f32.gmra.mrb[0].mxu0 %v88
  %v215 = vpop.f32.mrb[0].mxu0
  %v216 = vadd.f32 0.0, %v215
  %v217 = vpop.f32.mrb[0].mxu0
  %218 = vmatprep.mubr.f32.mxu0 0.0
  %219 = vmatmul.mubr.f32.gmra.mrb[0].mxu0 %v91
  %v220 = vpop.f32.mrb[0].mxu0
  %v221 = vadd.f32 0.0, %v220
  %v222 = vpop.f32.mrb[0].mxu0
  %223 = vmatprep.mubr.f32.mxu0 0.0
  %224 = vmatmul.mubr.f32.gmra.mrb[0].mxu0 %v94
  %v225 = vpop.f32.mrb[0].mxu0
  %v226 = vadd.f32 0.0, %v225
  %v227 = vpop.f32.mrb[0].mxu0
  %228 = vmatprep.mubr.f32.mxu0 0.0
  %229 = vmatmul.mubr.f32.gmra.mrb[0].mxu0 %v97
  %v230 = vpop.f32.mrb[0].mxu0
  %v231 = vadd.f32 0.0, %v230
  %v232 = vpop.f32.mrb[0].mxu0
  %233 = vmatprep.mubr.f32.mxu0 0.0
  %234 = vmatmul.mubr.f32.gmra.mrb[0].mxu0 %v100
  %v235 = vpop.f32.mrb[0].mxu0
  %v236 = vadd.f32 0.0, %v235
  %v237 = vpop.f32.mrb[0].mxu0
  %238 = vmatprep.mubr.f32.mxu0 0.0
  %239 = vmatmul.mubr.f32.gmra.mrb[0].mxu0 %v103
  %v240 = vpop.f32.mrb[0].mxu0
  %v241 = vadd.f32 0.0, %v240
  %v242 = vpop.f32.mrb[0].mxu0
  %243 = vmatprep.mubr.f32.mxu0 0.0
  %244 = vmatmul.mubr.f32.gmra.mrb[0].mxu0 %v106
  %v245 = vpop.f32.mrb[0].mxu0
  %v246 = vadd.f32 0.0, %v245
  %v247 = vpop.f32.mrb[0].mxu0
  %248 = vmatprep.mubr.f32.mxu0 0.0
  %249 = vmatmul.mubr.f32.gmra.mrb[0].mxu0 %v109
  %v250 = vpop.f32.mrb[0].mxu0
  %v251 = vadd.f32 0.0, %v250
  %v252 = vpop.f32.mrb[0].mxu0
  %253 = vmatprep.mubr.f32.mxu0 0.0
  %254 = vmatmul.mubr.f32.gmra.mrb[0].mxu0 %v112
  %v255 = vpop.f32.mrb[0].mxu0
  %v256 = vadd.f32 0.0, %v255
  %v257 = vpop.f32.mrb[0].mxu0
  %258 = vdwg.mxu0
  %259 = vxpose.xlu0.b32.start [1/16] %v17, 128
  %260 = vxpose.xlu0.b32.cont [2/16] %v18, 128
  %261 = vxpose.xlu0.b32.cont [3/16] %v19, 128
  %262 = vxpose.xlu0.b32.cont [4/16] %v20, 128
  %263 = vxpose.xlu0.b32.cont [5/16] 0.0, 128
  %264 = vxpose.xlu0.b32.cont [6/16] 0.0, 128
  %265 = vxpose.xlu0.b32.cont [7/16] 0.0, 128
  %266 = vxpose.xlu0.b32.cont [8/16] 0.0, 128
  %267 = vxpose.xlu0.b32.cont [9/16] 0.0, 128
  %268 = vxpose.xlu0.b32.cont [10/16] 0.0, 128
  %269 = vxpose.xlu0.b32.cont [11/16] 0.0, 128
  %270 = vxpose.xlu0.b32.cont [12/16] 0.0, 128
  %271 = vxpose.xlu0.b32.cont [13/16] 0.0, 128
  %272 = vxpose.xlu0.b32.cont [14/16] 0.0, 128
  %273 = vxpose.xlu0.b32.cont [15/16] 0.0, 128
  %274 = vxpose.xlu0.b32.end [16/16] 0.0, 128
  %v275 = vpop.trf.xlu0
  %v276 = vpop.trf.xlu0
  %v277 = vpop.trf.xlu0
  %v278 = vpop.trf.xlu0
  %v279 = vpop.trf.xlu0
  %v280 = vpop.trf.xlu0
  %v281 = vpop.trf.xlu0
  %v282 = vpop.trf.xlu0
  %v283 = vpop.trf.xlu0
  %v284 = vpop.trf.xlu0
  %v285 = vpop.trf.xlu0
  %v286 = vpop.trf.xlu0
  %v287 = vpop.trf.xlu0
  %v288 = vpop.trf.xlu0
  %v289 = vpop.trf.xlu0
  %v290 = vpop.trf.xlu0
  %v292 = vsel %vm65, %v275, 0
  %v295 = vsel %vm65, %v276, 0
  %297 = vmatprep.subr.mxu0 0.0
  %298 = vmatpush1.msra.mxu0 %v25
  %299 = vmatprep.subr.mxu0 0.0
  %300 = vmatpush1.msra.mxu0 %v26
  %301 = vmatprep.subr.mxu0 0.0
  %302 = vmatpush1.msra.mxu0 %v27
  %303 = vmatprep.subr.mxu0 0.0
  %304 = vmatpush1.msra.mxu0 %v28
  %305 = vmatprep.subr.mxu0 0.0
  %306 = vmatpush1.msra.mxu0 0.0
  %307 = vmatprep.subr.mxu0 0.0
  %308 = vmatpush1.msra.mxu0 0.0
  %309 = vmatprep.subr.mxu0 0.0
  %310 = vmatpush1.msra.mxu0 0.0
  %311 = vmatprep.subr.mxu0 0.0
  %312 = vmatpush1.msra.mxu0 0.0
  %313 = vmatprep.subr.mxu0 0.0
  %314 = vmatpush1.msra.mxu0 0.0
  %315 = vmatprep.subr.mxu0 0.0
  %316 = vmatpush1.msra.mxu0 0.0
  %317 = vmatprep.subr.mxu0 0.0
  %318 = vmatpush1.msra.mxu0 0.0
  %319 = vmatprep.subr.mxu0 0.0
  %320 = vmatpush1.msra.mxu0 0.0
  %321 = vmatprep.subr.mxu0 0.0
  %322 = vmatpush1.msra.mxu0 0.0
  %323 = vmatprep.subr.mxu0 0.0
  %324 = vmatpush1.msra.mxu0 0.0
  %325 = vmatprep.subr.mxu0 0.0
  %326 = vmatpush1.msra.mxu0 0.0
  %327 = vmatprep.subr.mxu0 0.0
  %328 = vmatpush1.msra.mxu0 0.0
  %329 = vmatprep.subr.mxu0 0.0
  %330 = vmatpush1.msra.mxu0 0.0
  %331 = vmatprep.subr.mxu0 0.0
  %332 = vmatpush1.msra.mxu0 0.0
  %333 = vmatprep.subr.mxu0 0.0
  %334 = vmatpush1.msra.mxu0 0.0
  %335 = vmatprep.subr.mxu0 0.0
  %336 = vmatpush1.msra.mxu0 0.0
  %337 = vmatprep.subr.mxu0 0.0
  %338 = vmatpush1.msra.mxu0 0.0
  %339 = vmatprep.subr.mxu0 0.0
  %340 = vmatpush1.msra.mxu0 0.0
  %341 = vmatprep.subr.mxu0 0.0
  %342 = vmatpush1.msra.mxu0 0.0
  %343 = vmatprep.subr.mxu0 0.0
  %344 = vmatpush1.msra.mxu0 0.0
  %345 = vmatprep.subr.mxu0 0.0
  %346 = vmatpush1.msra.mxu0 0.0
  %347 = vmatprep.subr.mxu0 0.0
  %348 = vmatpush1.msra.mxu0 0.0
  %349 = vmatprep.subr.mxu0 0.0
  %350 = vmatpush1.msra.mxu0 0.0
  %351 = vmatprep.subr.mxu0 0.0
  %352 = vmatpush1.msra.mxu0 0.0
  %353 = vmatprep.subr.mxu0 0.0
  %354 = vmatpush1.msra.mxu0 0.0
  %355 = vmatprep.subr.mxu0 0.0
  %356 = vmatpush1.msra.mxu0 0.0
  %357 = vmatprep.subr.mxu0 0.0
  %358 = vmatpush1.msra.mxu0 0.0
  %359 = vmatprep.subr.mxu0 0.0
  %360 = vmatpush1.msra.mxu0 0.0
  %361 = vmatprep.mubr.f32.mxu0 0.0
  %362 = vmatmul.mubr.f32.gmra.mrb[0].mxu0 %v292
  %v363 = vpop.f32.mrb[0].mxu0
  %v364 = vadd.f32 0.0, %v363
  %v365 = vpop.f32.mrb[0].mxu0
  %366 = vmatprep.mubr.f32.mxu0 0.0
  %367 = vmatmul.mubr.f32.gmra.mrb[0].mxu0 %v295
  %v368 = vpop.f32.mrb[0].mxu0
  %v369 = vadd.f32 0.0, %v368
  %v370 = vpop.f32.mrb[0].mxu0
  %371 = vdwg.mxu0
  %v372 = vadd.f32 %v181, %v364
  %v373 = vadd.f32 %v186, %v369
  %v374 = vadd.f32 %v191, %v364
  %v375 = vadd.f32 %v196, %v369
  %v376 = vadd.f32 %v201, %v364
  %v377 = vadd.f32 %v206, %v369
  %v378 = vadd.f32 %v211, %v364
  %v379 = vadd.f32 %v216, %v369
  %v380 = vadd.f32 %v221, %v364
  %v381 = vadd.f32 %v226, %v369
  %v382 = vadd.f32 %v231, %v364
  %v383 = vadd.f32 %v236, %v369
  %v384 = vadd.f32 %v241, %v364
  %v385 = vadd.f32 %v246, %v369
  %v386 = vadd.f32 %v251, %v364
  %v387 = vadd.f32 %v256, %v369
  %vm388 = vcmp.ge.f32.partialorder %v372, 0.0
  %vm389 = vcmp.ge.f32.partialorder %v373, 0.0
  %vm390 = vcmp.ge.f32.partialorder %v374, 0.0
  %vm391 = vcmp.ge.f32.partialorder %v375, 0.0
  %vm392 = vcmp.ge.f32.partialorder %v376, 0.0
  %vm393 = vcmp.ge.f32.partialorder %v377, 0.0
  %vm394 = vcmp.ge.f32.partialorder %v378, 0.0
  %vm395 = vcmp.ge.f32.partialorder %v379, 0.0
  %vm396 = vcmp.ge.f32.partialorder %v380, 0.0
  %vm397 = vcmp.ge.f32.partialorder %v381, 0.0
  %vm398 = vcmp.ge.f32.partialorder %v382, 0.0
  %vm399 = vcmp.ge.f32.partialorder %v383, 0.0
  %vm400 = vcmp.ge.f32.partialorder %v384, 0.0
  %vm401 = vcmp.ge.f32.partialorder %v385, 0.0
  %vm402 = vcmp.ge.f32.partialorder %v386, 0.0
  %vm403 = vcmp.ge.f32.partialorder %v387, 0.0
  %v404 = vmul.f32 %v372, 0.2
  %v405 = vmul.f32 %v373, 0.2
  %v406 = vmul.f32 %v374, 0.2
  %v407 = vmul.f32 %v375, 0.2
  %v408 = vmul.f32 %v376, 0.2
  %v409 = vmul.f32 %v377, 0.2
  %v410 = vmul.f32 %v378, 0.2
  %v411 = vmul.f32 %v379, 0.2
  %v412 = vmul.f32 %v380, 0.2
  %v413 = vmul.f32 %v381, 0.2
  %v414 = vmul.f32 %v382, 0.2
  %v415 = vmul.f32 %v383, 0.2
  %v416 = vmul.f32 %v384, 0.2
  %v417 = vmul.f32 %v385, 0.2
  %v418 = vmul.f32 %v386, 0.2
  %v419 = vmul.f32 %v387, 0.2
  %v420 = vsel %vm388, %v372, %v404
  %v421 = vsel %vm389, %v373, %v405
  %v422 = vsel %vm390, %v374, %v406
  %v423 = vsel %vm391, %v375, %v407
  %v424 = vsel %vm392, %v376, %v408
  %v425 = vsel %vm393, %v377, %v409
  %v426 = vsel %vm394, %v378, %v410
  %v427 = vsel %vm395, %v379, %v411
  %v428 = vsel %vm396, %v380, %v412
  %v429 = vsel %vm397, %v381, %v413
  %v430 = vsel %vm398, %v382, %v414
  %v431 = vsel %vm399, %v383, %v415
  %v432 = vsel %vm400, %v384, %v416
  %v433 = vsel %vm401, %v385, %v417
  %v434 = vsel %vm402, %v386, %v418
  %v435 = vsel %vm403, %v387, %v419
  %vm436 = vcmask 15360
  %v437 = vsel %vm436, %v420, -inf
  %v438 = vsel %vm436, %v422, -inf
  %v439 = vsel %vm436, %v424, -inf
  %v440 = vmax.f32 %v437, %v439
  %v441 = vsel %vm436, %v426, -inf
  %v442 = vmax.f32 %v438, %v441
  %v443 = vsel %vm436, %v428, -inf
  %v444 = vmax.f32 %v440, %v443
  %v445 = vsel %vm436, %v430, -inf
  %v446 = vmax.f32 %v442, %v445
  %v447 = vsel %vm436, %v432, -inf
  %v448 = vmax.f32 %v444, %v447
  %v449 = vsel %vm436, %v434, -inf
  %v450 = vmax.f32 %v446, %v449
  %v451 = vmax.f32 %v448, %v450
  %v452 = vsel %vm436, %v421, -inf
  %v453 = vsel %vm436, %v423, -inf
  %v454 = vsel %vm436, %v425, -inf
  %v455 = vmax.f32 %v452, %v454
  %v456 = vsel %vm436, %v427, -inf
  %v457 = vmax.f32 %v453, %v456
  %v458 = vsel %vm436, %v429, -inf
  %v459 = vmax.f32 %v455, %v458
  %v460 = vsel %vm436, %v431, -inf
  %v461 = vmax.f32 %v457, %v460
  %v462 = vsel %vm436, %v433, -inf
  %v463 = vmax.f32 %v459, %v462
  %v464 = vsel %vm436, %v435, -inf
  %v465 = vmax.f32 %v461, %v464
  %v466 = vmax.f32 %v463, %v465
  %v467 = vsub.f32 %v420, %v451
  %v468 = vsub.f32 %v421, %v466
  %v469 = vsub.f32 %v422, %v451
  %v470 = vsub.f32 %v423, %v466
  %v471 = vsub.f32 %v424, %v451
  %v472 = vsub.f32 %v425, %v466
  %v473 = vsub.f32 %v426, %v451
  %v474 = vsub.f32 %v427, %v466
  %v475 = vsub.f32 %v428, %v451
  %v476 = vsub.f32 %v429, %v466
  %v477 = vsub.f32 %v430, %v451
  %v478 = vsub.f32 %v431, %v466
  %v479 = vsub.f32 %v432, %v451
  %v480 = vsub.f32 %v433, %v466
  %v481 = vsub.f32 %v434, %v451
  %v482 = vsub.f32 %v435, %v466
  %v483 = vmul.f32 %v467, 1.442695
  %v484 = vpow.pop %v483
  %v485 = vmul.f32 %v468, 1.442695
  %v486 = vpow.pop %v485
  %v487 = vmul.f32 %v469, 1.442695
  %v488 = vpow.pop %v487
  %v489 = vmul.f32 %v470, 1.442695
  %v490 = vpow.pop %v489
  %v491 = vmul.f32 %v471, 1.442695
  %v492 = vpow.pop %v491
  %v493 = vmul.f32 %v472, 1.442695
  %v494 = vpow.pop %v493
  %v495 = vmul.f32 %v473, 1.442695
  %v496 = vpow.pop %v495
  %v497 = vmul.f32 %v474, 1.442695
  %v498 = vpow.pop %v497
  %v499 = vmul.f32 %v475, 1.442695
  %v500 = vpow.pop %v499
  %v501 = vmul.f32 %v476, 1.442695
  %v502 = vpow.pop %v501
  %v503 = vmul.f32 %v477, 1.442695
  %v504 = vpow.pop %v503
  %v505 = vmul.f32 %v478, 1.442695
  %v506 = vpow.pop %v505
  %v507 = vmul.f32 %v479, 1.442695
  %v508 = vpow.pop %v507
  %v509 = vmul.f32 %v480, 1.442695
  %v510 = vpow.pop %v509
  %v511 = vmul.f32 %v481, 1.442695
  %v512 = vpow.pop %v511
  %v513 = vmul.f32 %v482, 1.442695
  %v514 = vpow.pop %v513
  %v515 = vsel %vm436, %v484, 0.0
  %v516 = vsel %vm436, %v488, 0.0
  %v517 = vadd.f32 %v515, %v516
  %v518 = vsel %vm436, %v492, 0.0
  %v519 = vadd.f32 %v517, %v518
  %v520 = vsel %vm436, %v496, 0.0
  %v521 = vadd.f32 %v519, %v520
  %v522 = vsel %vm436, %v500, 0.0
  %v523 = vadd.f32 %v521, %v522
  %v524 = vsel %vm436, %v504, 0.0
  %v525 = vadd.f32 %v523, %v524
  %v526 = vsel %vm436, %v508, 0.0
  %v527 = vadd.f32 %v525, %v526
  %v528 = vsel %vm436, %v512, 0.0
  %v529 = vadd.f32 %v527, %v528
  %v530 = vsel %vm436, %v486, 0.0
  %v531 = vsel %vm436, %v490, 0.0
  %v532 = vadd.f32 %v530, %v531
  %v533 = vsel %vm436, %v494, 0.0
  %v534 = vadd.f32 %v532, %v533
  %v535 = vsel %vm436, %v498, 0.0
  %v536 = vadd.f32 %v534, %v535
  %v537 = vsel %vm436, %v502, 0.0
  %v538 = vadd.f32 %v536, %v537
  %v539 = vsel %vm436, %v506, 0.0
  %v540 = vadd.f32 %v538, %v539
  %v541 = vsel %vm436, %v510, 0.0
  %v542 = vadd.f32 %v540, %v541
  %v543 = vsel %vm436, %v514, 0.0
  %v544 = vadd.f32 %v542, %v543
  %v545 = vrcp.pop %v529
  %v546 = vrcp.pop %v544
  %v547 = vmul.f32 %v484, %v545
  %v548 = vmul.f32 %v486, %v546
  %v549 = vmul.f32 %v488, %v545
  %v550 = vmul.f32 %v490, %v546
  %v551 = vmul.f32 %v492, %v545
  %v552 = vmul.f32 %v494, %v546
  %v553 = vmul.f32 %v496, %v545
  %v554 = vmul.f32 %v498, %v546
  %v555 = vmul.f32 %v500, %v545
  %v556 = vmul.f32 %v502, %v546
  %v557 = vmul.f32 %v504, %v545
  %v558 = vmul.f32 %v506, %v546
  %v559 = vmul.f32 %v508, %v545
  %v560 = vmul.f32 %v510, %v546
  %v561 = vmul.f32 %v512, %v545
  %v562 = vmul.f32 %v514, %v546
  %v563 = vsel %vm436, %v547, 0.0
  %564 = vadd.xlane.f32.xlu0 %v563
  %v565 = vpop.xlane.xlu0 %564
  %v566 = vsel %vm436, %v548, 0.0
  %567 = vadd.xlane.f32.xlu0 %v566
  %v568 = vpop.xlane.xlu0 %567
  %v569 = vsel %vm436, %v549, 0.0
  %570 = vadd.xlane.f32.xlu0 %v569
  %v571 = vpop.xlane.xlu0 %570
  %v572 = vsel %vm436, %v550, 0.0
  %573 = vadd.xlane.f32.xlu0 %v572
  %v574 = vpop.xlane.xlu0 %573
  %v575 = vsel %vm436, %v551, 0.0
  %576 = vadd.xlane.f32.xlu0 %v575
  %v577 = vpop.xlane.xlu0 %576
  %v578 = vsel %vm436, %v552, 0.0
  %579 = vadd.xlane.f32.xlu0 %v578
  %v580 = vpop.xlane.xlu0 %579
  %v581 = vsel %vm436, %v553, 0.0
  %582 = vadd.xlane.f32.xlu0 %v581
  %v583 = vpop.xlane.xlu0 %582
  %v584 = vsel %vm436, %v554, 0.0
  %585 = vadd.xlane.f32.xlu0 %v584
  %v586 = vpop.xlane.xlu0 %585
  %v587 = vsel %vm436, %v555, 0.0
  %588 = vadd.xlane.f32.xlu0 %v587
  %v589 = vpop.xlane.xlu0 %588
  %v590 = vsel %vm436, %v556, 0.0
  %591 = vadd.xlane.f32.xlu0 %v590
  %v592 = vpop.xlane.xlu0 %591
  %v593 = vsel %vm436, %v557, 0.0
  %594 = vadd.xlane.f32.xlu0 %v593
  %v595 = vpop.xlane.xlu0 %594
  %v596 = vsel %vm436, %v558, 0.0
  %597 = vadd.xlane.f32.xlu0 %v596
  %v598 = vpop.xlane.xlu0 %597
  %v599 = vsel %vm436, %v559, 0.0
  %600 = vadd.xlane.f32.xlu0 %v599
  %v601 = vpop.xlane.xlu0 %600
  %v602 = vsel %vm436, %v560, 0.0
  %603 = vadd.xlane.f32.xlu0 %v602
  %v604 = vpop.xlane.xlu0 %603
  %v605 = vsel %vm436, %v561, 0.0
  %606 = vadd.xlane.f32.xlu0 %v605
  %v607 = vpop.xlane.xlu0 %606
  %v608 = vsel %vm436, %v562, 0.0
  %609 = vadd.xlane.f32.xlu0 %v608
  %v610 = vpop.xlane.xlu0 %609
  %v615 = vlaneseq
  %v616 = vshrl.u32 %v615, 7
  %v617 = vsub.s32 0, %v616
  %v618 = vrot.slane %v21, %v617
  %620 = vbcast.lane.b32.xlu0 %v618, 256
  %v621 = vpop.permute.xlu0 %620
  %s623 = sor.u32 256, 8
  %624 = vbcast.lane.b32.xlu0 %v618, %s623
  %v625 = vpop.permute.xlu0 %624
  %v626 = vlaneseq
  %v627 = vshrl.u32 %v626, 7
  %v628 = vsub.s32 1, %v627
  %v629 = vrot.slane %v21, %v628
  %631 = vbcast.lane.b32.xlu0 %v629, 256
  %v632 = vpop.permute.xlu0 %631
  %s634 = sor.u32 256, 8
  %635 = vbcast.lane.b32.xlu0 %v629, %s634
  %v636 = vpop.permute.xlu0 %635
  %v637 = vlaneseq
  %v638 = vshrl.u32 %v637, 7
  %v639 = vsub.s32 2, %v638
  %v640 = vrot.slane %v21, %v639
  %642 = vbcast.lane.b32.xlu0 %v640, 256
  %v643 = vpop.permute.xlu0 %642
  %s645 = sor.u32 256, 8
  %646 = vbcast.lane.b32.xlu0 %v640, %s645
  %v647 = vpop.permute.xlu0 %646
  %v648 = vlaneseq
  %v649 = vshrl.u32 %v648, 7
  %v650 = vsub.s32 3, %v649
  %v651 = vrot.slane %v21, %v650
  %653 = vbcast.lane.b32.xlu0 %v651, 256
  %v654 = vpop.permute.xlu0 %653
  %s656 = sor.u32 256, 8
  %657 = vbcast.lane.b32.xlu0 %v651, %s656
  %v658 = vpop.permute.xlu0 %657
  %v659 = vlaneseq
  %v660 = vshrl.u32 %v659, 7
  %v661 = vsub.s32 4, %v660
  %v662 = vrot.slane %v21, %v661
  %664 = vbcast.lane.b32.xlu0 %v662, 256
  %v665 = vpop.permute.xlu0 %664
  %s667 = sor.u32 256, 8
  %668 = vbcast.lane.b32.xlu0 %v662, %s667
  %v669 = vpop.permute.xlu0 %668
  %v670 = vlaneseq
  %v671 = vshrl.u32 %v670, 7
  %v672 = vsub.s32 5, %v671
  %v673 = vrot.slane %v21, %v672
  %675 = vbcast.lane.b32.xlu0 %v673, 256
  %v676 = vpop.permute.xlu0 %675
  %s678 = sor.u32 256, 8
  %679 = vbcast.lane.b32.xlu0 %v673, %s678
  %v680 = vpop.permute.xlu0 %679
  %v681 = vlaneseq
  %v682 = vshrl.u32 %v681, 7
  %v683 = vsub.s32 6, %v682
  %v684 = vrot.slane %v21, %v683
  %686 = vbcast.lane.b32.xlu0 %v684, 256
  %v687 = vpop.permute.xlu0 %686
  %s689 = sor.u32 256, 8
  %690 = vbcast.lane.b32.xlu0 %v684, %s689
  %v691 = vpop.permute.xlu0 %690
  %v692 = vlaneseq
  %v693 = vshrl.u32 %v692, 7
  %v694 = vsub.s32 7, %v693
  %v695 = vrot.slane %v21, %v694
  %697 = vbcast.lane.b32.xlu0 %v695, 256
  %v698 = vpop.permute.xlu0 %697
  %s700 = sor.u32 256, 8
  %701 = vbcast.lane.b32.xlu0 %v695, %s700
  %v702 = vpop.permute.xlu0 %701
  %v703 = vlaneseq
  %v704 = vshrl.u32 %v703, 7
  %v705 = vsub.s32 0, %v704
  %v706 = vrot.slane %v22, %v705
  %708 = vbcast.lane.b32.xlu0 %v706, 256
  %v709 = vpop.permute.xlu0 %708
  %s711 = sor.u32 256, 8
  %712 = vbcast.lane.b32.xlu0 %v706, %s711
  %v713 = vpop.permute.xlu0 %712
  %v714 = vlaneseq
  %v715 = vshrl.u32 %v714, 7
  %v716 = vsub.s32 1, %v715
  %v717 = vrot.slane %v22, %v716
  %719 = vbcast.lane.b32.xlu0 %v717, 256
  %v720 = vpop.permute.xlu0 %719
  %s722 = sor.u32 256, 8
  %723 = vbcast.lane.b32.xlu0 %v717, %s722
  %v724 = vpop.permute.xlu0 %723
  %v725 = vlaneseq
  %v726 = vshrl.u32 %v725, 7
  %v727 = vsub.s32 2, %v726
  %v728 = vrot.slane %v22, %v727
  %730 = vbcast.lane.b32.xlu0 %v728, 256
  %v731 = vpop.permute.xlu0 %730
  %s733 = sor.u32 256, 8
  %734 = vbcast.lane.b32.xlu0 %v728, %s733
  %v735 = vpop.permute.xlu0 %734
  %v736 = vlaneseq
  %v737 = vshrl.u32 %v736, 7
  %v738 = vsub.s32 3, %v737
  %v739 = vrot.slane %v22, %v738
  %741 = vbcast.lane.b32.xlu0 %v739, 256
  %v742 = vpop.permute.xlu0 %741
  %s744 = sor.u32 256, 8
  %745 = vbcast.lane.b32.xlu0 %v739, %s744
  %v746 = vpop.permute.xlu0 %745
  %v747 = vlaneseq
  %v748 = vshrl.u32 %v747, 7
  %v749 = vsub.s32 4, %v748
  %v750 = vrot.slane %v22, %v749
  %752 = vbcast.lane.b32.xlu0 %v750, 256
  %v753 = vpop.permute.xlu0 %752
  %s755 = sor.u32 256, 8
  %756 = vbcast.lane.b32.xlu0 %v750, %s755
  %v757 = vpop.permute.xlu0 %756
  %v758 = vlaneseq
  %v759 = vshrl.u32 %v758, 7
  %v760 = vsub.s32 5, %v759
  %v761 = vrot.slane %v22, %v760
  %763 = vbcast.lane.b32.xlu0 %v761, 256
  %v764 = vpop.permute.xlu0 %763
  %s766 = sor.u32 256, 8
  %767 = vbcast.lane.b32.xlu0 %v761, %s766
  %v768 = vpop.permute.xlu0 %767
  %v769 = vlaneseq
  %v770 = vshrl.u32 %v769, 7
  %v771 = vsub.s32 6, %v770
  %v772 = vrot.slane %v22, %v771
  %774 = vbcast.lane.b32.xlu0 %v772, 256
  %v775 = vpop.permute.xlu0 %774
  %s777 = sor.u32 256, 8
  %778 = vbcast.lane.b32.xlu0 %v772, %s777
  %v779 = vpop.permute.xlu0 %778
  %v780 = vlaneseq
  %v781 = vshrl.u32 %v780, 7
  %v782 = vsub.s32 7, %v781
  %v783 = vrot.slane %v22, %v782
  %785 = vbcast.lane.b32.xlu0 %v783, 256
  %v786 = vpop.permute.xlu0 %785
  %s788 = sor.u32 256, 8
  %789 = vbcast.lane.b32.xlu0 %v783, %s788
  %v790 = vpop.permute.xlu0 %789
  %v791 = vlaneseq
  %v792 = vshrl.u32 %v791, 7
  %v793 = vsub.s32 0, %v792
  %v794 = vrot.slane %v23, %v793
  %796 = vbcast.lane.b32.xlu0 %v794, 256
  %v797 = vpop.permute.xlu0 %796
  %s799 = sor.u32 256, 8
  %800 = vbcast.lane.b32.xlu0 %v794, %s799
  %v801 = vpop.permute.xlu0 %800
  %v802 = vlaneseq
  %v803 = vshrl.u32 %v802, 7
  %v804 = vsub.s32 1, %v803
  %v805 = vrot.slane %v23, %v804
  %807 = vbcast.lane.b32.xlu0 %v805, 256
  %v808 = vpop.permute.xlu0 %807
  %s810 = sor.u32 256, 8
  %811 = vbcast.lane.b32.xlu0 %v805, %s810
  %v812 = vpop.permute.xlu0 %811
  %v813 = vlaneseq
  %v814 = vshrl.u32 %v813, 7
  %v815 = vsub.s32 2, %v814
  %v816 = vrot.slane %v23, %v815
  %818 = vbcast.lane.b32.xlu0 %v816, 256
  %v819 = vpop.permute.xlu0 %818
  %s821 = sor.u32 256, 8
  %822 = vbcast.lane.b32.xlu0 %v816, %s821
  %v823 = vpop.permute.xlu0 %822
  %v824 = vlaneseq
  %v825 = vshrl.u32 %v824, 7
  %v826 = vsub.s32 3, %v825
  %v827 = vrot.slane %v23, %v826
  %829 = vbcast.lane.b32.xlu0 %v827, 256
  %v830 = vpop.permute.xlu0 %829
  %s832 = sor.u32 256, 8
  %833 = vbcast.lane.b32.xlu0 %v827, %s832
  %v834 = vpop.permute.xlu0 %833
  %v835 = vlaneseq
  %v836 = vshrl.u32 %v835, 7
  %v837 = vsub.s32 4, %v836
  %v838 = vrot.slane %v23, %v837
  %840 = vbcast.lane.b32.xlu0 %v838, 256
  %v841 = vpop.permute.xlu0 %840
  %s843 = sor.u32 256, 8
  %844 = vbcast.lane.b32.xlu0 %v838, %s843
  %v845 = vpop.permute.xlu0 %844
  %v846 = vlaneseq
  %v847 = vshrl.u32 %v846, 7
  %v848 = vsub.s32 5, %v847
  %v849 = vrot.slane %v23, %v848
  %851 = vbcast.lane.b32.xlu0 %v849, 256
  %v852 = vpop.permute.xlu0 %851
  %s854 = sor.u32 256, 8
  %855 = vbcast.lane.b32.xlu0 %v849, %s854
  %v856 = vpop.permute.xlu0 %855
  %v857 = vlaneseq
  %v858 = vshrl.u32 %v857, 7
  %v859 = vsub.s32 6, %v858
  %v860 = vrot.slane %v23, %v859
  %862 = vbcast.lane.b32.xlu0 %v860, 256
  %v863 = vpop.permute.xlu0 %862
  %s865 = sor.u32 256, 8
  %866 = vbcast.lane.b32.xlu0 %v860, %s865
  %v867 = vpop.permute.xlu0 %866
  %v868 = vlaneseq
  %v869 = vshrl.u32 %v868, 7
  %v870 = vsub.s32 7, %v869
  %v871 = vrot.slane %v23, %v870
  %873 = vbcast.lane.b32.xlu0 %v871, 256
  %v874 = vpop.permute.xlu0 %873
  %s876 = sor.u32 256, 8
  %877 = vbcast.lane.b32.xlu0 %v871, %s876
  %v878 = vpop.permute.xlu0 %877
  %v879 = vlaneseq
  %v880 = vshrl.u32 %v879, 7
  %v881 = vsub.s32 0, %v880
  %v882 = vrot.slane %v24, %v881
  %884 = vbcast.lane.b32.xlu0 %v882, 256
  %v885 = vpop.permute.xlu0 %884
  %s887 = sor.u32 256, 8
  %888 = vbcast.lane.b32.xlu0 %v882, %s887
  %v889 = vpop.permute.xlu0 %888
  %v890 = vlaneseq
  %v891 = vshrl.u32 %v890, 7
  %v892 = vsub.s32 1, %v891
  %v893 = vrot.slane %v24, %v892
  %895 = vbcast.lane.b32.xlu0 %v893, 256
  %v896 = vpop.permute.xlu0 %895
  %s898 = sor.u32 256, 8
  %899 = vbcast.lane.b32.xlu0 %v893, %s898
  %v900 = vpop.permute.xlu0 %899
  %v901 = vlaneseq
  %v902 = vshrl.u32 %v901, 7
  %v903 = vsub.s32 2, %v902
  %v904 = vrot.slane %v24, %v903
  %906 = vbcast.lane.b32.xlu0 %v904, 256
  %v907 = vpop.permute.xlu0 %906
  %s909 = sor.u32 256, 8
  %910 = vbcast.lane.b32.xlu0 %v904, %s909
  %v911 = vpop.permute.xlu0 %910
  %v912 = vlaneseq
  %v913 = vshrl.u32 %v912, 7
  %v914 = vsub.s32 3, %v913
  %v915 = vrot.slane %v24, %v914
  %917 = vbcast.lane.b32.xlu0 %v915, 256
  %v918 = vpop.permute.xlu0 %917
  %s920 = sor.u32 256, 8
  %921 = vbcast.lane.b32.xlu0 %v915, %s920
  %v922 = vpop.permute.xlu0 %921
  %v923 = vlaneseq
  %v924 = vshrl.u32 %v923, 7
  %v925 = vsub.s32 4, %v924
  %v926 = vrot.slane %v24, %v925
  %928 = vbcast.lane.b32.xlu0 %v926, 256
  %v929 = vpop.permute.xlu0 %928
  %s931 = sor.u32 256, 8
  %932 = vbcast.lane.b32.xlu0 %v926, %s931
  %v933 = vpop.permute.xlu0 %932
  %v934 = vlaneseq
  %v935 = vshrl.u32 %v934, 7
  %v936 = vsub.s32 5, %v935
  %v937 = vrot.slane %v24, %v936
  %939 = vbcast.lane.b32.xlu0 %v937, 256
  %v940 = vpop.permute.xlu0 %939
  %s942 = sor.u32 256, 8
  %943 = vbcast.lane.b32.xlu0 %v937, %s942
  %v944 = vpop.permute.xlu0 %943
  %v945 = vlaneseq
  %v946 = vshrl.u32 %v945, 7
  %v947 = vsub.s32 6, %v946
  %v948 = vrot.slane %v24, %v947
  %950 = vbcast.lane.b32.xlu0 %v948, 256
  %v951 = vpop.permute.xlu0 %950
  %s953 = sor.u32 256, 8
  %954 = vbcast.lane.b32.xlu0 %v948, %s953
  %v955 = vpop.permute.xlu0 %954
  %v956 = vlaneseq
  %v957 = vshrl.u32 %v956, 7
  %v958 = vsub.s32 7, %v957
  %v959 = vrot.slane %v24, %v958
  %961 = vbcast.lane.b32.xlu0 %v959, 256
  %v962 = vpop.permute.xlu0 %961
  %s964 = sor.u32 256, 8
  %965 = vbcast.lane.b32.xlu0 %v959, %s964
  %v966 = vpop.permute.xlu0 %965
  %v1031 = vmul.f32 %v565, %v621
  %v1032 = vmul.f32 %v568, %v625
  %v1033 = vmul.f32 %v565, %v632
  %v1034 = vmul.f32 %v568, %v636
  %v1035 = vmul.f32 %v565, %v643
  %v1036 = vmul.f32 %v568, %v647
  %v1037 = vmul.f32 %v565, %v654
  %v1038 = vmul.f32 %v568, %v658
  %v1039 = vmul.f32 %v565, %v665
  %v1040 = vmul.f32 %v568, %v669
  %v1041 = vmul.f32 %v565, %v676
  %v1042 = vmul.f32 %v568, %v680
  %v1043 = vmul.f32 %v565, %v687
  %v1044 = vmul.f32 %v568, %v691
  %v1045 = vmul.f32 %v565, %v698
  %v1046 = vmul.f32 %v568, %v702
  %v1047 = vmul.f32 %v565, %v709
  %v1048 = vmul.f32 %v568, %v713
  %v1049 = vmul.f32 %v565, %v720
  %v1050 = vmul.f32 %v568, %v724
  %v1051 = vmul.f32 %v565, %v731
  %v1052 = vmul.f32 %v568, %v735
  %v1053 = vmul.f32 %v565, %v742
  %v1054 = vmul.f32 %v568, %v746
  %v1055 = vmul.f32 %v565, %v753
  %v1056 = vmul.f32 %v568, %v757
  %v1057 = vmul.f32 %v565, %v764
  %v1058 = vmul.f32 %v568, %v768
  %v1059 = vmul.f32 %v565, %v775
  %v1060 = vmul.f32 %v568, %v779
  %v1061 = vmul.f32 %v565, %v786
  %v1062 = vmul.f32 %v568, %v790
  %v1063 = vmul.f32 %v565, %v797
  %v1064 = vmul.f32 %v568, %v801
  %v1065 = vmul.f32 %v565, %v808
  %v1066 = vmul.f32 %v568, %v812
  %v1067 = vmul.f32 %v565, %v819
  %v1068 = vmul.f32 %v568, %v823
  %v1069 = vmul.f32 %v565, %v830
  %v1070 = vmul.f32 %v568, %v834
  %v1071 = vmul.f32 %v565, %v841
  %v1072 = vmul.f32 %v568, %v845
  %v1073 = vmul.f32 %v565, %v852
  %v1074 = vmul.f32 %v568, %v856
  %v1075 = vmul.f32 %v565, %v863
  %v1076 = vmul.f32 %v568, %v867
  %v1077 = vmul.f32 %v565, %v874
  %v1078 = vmul.f32 %v568, %v878
  %v1079 = vmul.f32 %v565, %v885
  %v1080 = vmul.f32 %v568, %v889
  %v1081 = vmul.f32 %v565, %v896
  %v1082 = vmul.f32 %v568, %v900
  %v1083 = vmul.f32 %v565, %v907
  %v1084 = vmul.f32 %v568, %v911
  %v1085 = vmul.f32 %v565, %v918
  %v1086 = vmul.f32 %v568, %v922
  %v1087 = vmul.f32 %v565, %v929
  %v1088 = vmul.f32 %v568, %v933
  %v1089 = vmul.f32 %v565, %v940
  %v1090 = vmul.f32 %v568, %v944
  %v1091 = vmul.f32 %v565, %v951
  %v1092 = vmul.f32 %v568, %v955
  %v1093 = vmul.f32 %v565, %v962
  %v1094 = vmul.f32 %v568, %v966
  %s1096 = sor.u32 256, 16
  %1097 = vbcast.lane.b32.xlu0 %v618, %s1096
  %v1098 = vpop.permute.xlu0 %1097
  %s1100 = sor.u32 256, 24
  %1101 = vbcast.lane.b32.xlu0 %v618, %s1100
  %v1102 = vpop.permute.xlu0 %1101
  %s1104 = sor.u32 256, 16
  %1105 = vbcast.lane.b32.xlu0 %v629, %s1104
  %v1106 = vpop.permute.xlu0 %1105
  %s1108 = sor.u32 256, 24
  %1109 = vbcast.lane.b32.xlu0 %v629, %s1108
  %v1110 = vpop.permute.xlu0 %1109
  %s1112 = sor.u32 256, 16
  %1113 = vbcast.lane.b32.xlu0 %v640, %s1112
  %v1114 = vpop.permute.xlu0 %1113
  %s1116 = sor.u32 256, 24
  %1117 = vbcast.lane.b32.xlu0 %v640, %s1116
  %v1118 = vpop.permute.xlu0 %1117
  %s1120 = sor.u32 256, 16
  %1121 = vbcast.lane.b32.xlu0 %v651, %s1120
  %v1122 = vpop.permute.xlu0 %1121
  %s1124 = sor.u32 256, 24
  %1125 = vbcast.lane.b32.xlu0 %v651, %s1124
  %v1126 = vpop.permute.xlu0 %1125
  %s1128 = sor.u32 256, 16
  %1129 = vbcast.lane.b32.xlu0 %v662, %s1128
  %v1130 = vpop.permute.xlu0 %1129
  %s1132 = sor.u32 256, 24
  %1133 = vbcast.lane.b32.xlu0 %v662, %s1132
  %v1134 = vpop.permute.xlu0 %1133
  %s1136 = sor.u32 256, 16
  %1137 = vbcast.lane.b32.xlu0 %v673, %s1136
  %v1138 = vpop.permute.xlu0 %1137
  %s1140 = sor.u32 256, 24
  %1141 = vbcast.lane.b32.xlu0 %v673, %s1140
  %v1142 = vpop.permute.xlu0 %1141
  %s1144 = sor.u32 256, 16
  %1145 = vbcast.lane.b32.xlu0 %v684, %s1144
  %v1146 = vpop.permute.xlu0 %1145
  %s1148 = sor.u32 256, 24
  %1149 = vbcast.lane.b32.xlu0 %v684, %s1148
  %v1150 = vpop.permute.xlu0 %1149
  %s1152 = sor.u32 256, 16
  %1153 = vbcast.lane.b32.xlu0 %v695, %s1152
  %v1154 = vpop.permute.xlu0 %1153
  %s1156 = sor.u32 256, 24
  %1157 = vbcast.lane.b32.xlu0 %v695, %s1156
  %v1158 = vpop.permute.xlu0 %1157
  %s1160 = sor.u32 256, 16
  %1161 = vbcast.lane.b32.xlu0 %v706, %s1160
  %v1162 = vpop.permute.xlu0 %1161
  %s1164 = sor.u32 256, 24
  %1165 = vbcast.lane.b32.xlu0 %v706, %s1164
  %v1166 = vpop.permute.xlu0 %1165
  %s1168 = sor.u32 256, 16
  %1169 = vbcast.lane.b32.xlu0 %v717, %s1168
  %v1170 = vpop.permute.xlu0 %1169
  %s1172 = sor.u32 256, 24
  %1173 = vbcast.lane.b32.xlu0 %v717, %s1172
  %v1174 = vpop.permute.xlu0 %1173
  %s1176 = sor.u32 256, 16
  %1177 = vbcast.lane.b32.xlu0 %v728, %s1176
  %v1178 = vpop.permute.xlu0 %1177
  %s1180 = sor.u32 256, 24
  %1181 = vbcast.lane.b32.xlu0 %v728, %s1180
  %v1182 = vpop.permute.xlu0 %1181
  %s1184 = sor.u32 256, 16
  %1185 = vbcast.lane.b32.xlu0 %v739, %s1184
  %v1186 = vpop.permute.xlu0 %1185
  %s1188 = sor.u32 256, 24
  %1189 = vbcast.lane.b32.xlu0 %v739, %s1188
  %v1190 = vpop.permute.xlu0 %1189
  %s1192 = sor.u32 256, 16
  %1193 = vbcast.lane.b32.xlu0 %v750, %s1192
  %v1194 = vpop.permute.xlu0 %1193
  %s1196 = sor.u32 256, 24
  %1197 = vbcast.lane.b32.xlu0 %v750, %s1196
  %v1198 = vpop.permute.xlu0 %1197
  %s1200 = sor.u32 256, 16
  %1201 = vbcast.lane.b32.xlu0 %v761, %s1200
  %v1202 = vpop.permute.xlu0 %1201
  %s1204 = sor.u32 256, 24
  %1205 = vbcast.lane.b32.xlu0 %v761, %s1204
  %v1206 = vpop.permute.xlu0 %1205
  %s1208 = sor.u32 256, 16
  %1209 = vbcast.lane.b32.xlu0 %v772, %s1208
  %v1210 = vpop.permute.xlu0 %1209
  %s1212 = sor.u32 256, 24
  %1213 = vbcast.lane.b32.xlu0 %v772, %s1212
  %v1214 = vpop.permute.xlu0 %1213
  %s1216 = sor.u32 256, 16
  %1217 = vbcast.lane.b32.xlu0 %v783, %s1216
  %v1218 = vpop.permute.xlu0 %1217
  %s1220 = sor.u32 256, 24
  %1221 = vbcast.lane.b32.xlu0 %v783, %s1220
  %v1222 = vpop.permute.xlu0 %1221
  %s1224 = sor.u32 256, 16
  %1225 = vbcast.lane.b32.xlu0 %v794, %s1224
  %v1226 = vpop.permute.xlu0 %1225
  %s1228 = sor.u32 256, 24
  %1229 = vbcast.lane.b32.xlu0 %v794, %s1228
  %v1230 = vpop.permute.xlu0 %1229
  %s1232 = sor.u32 256, 16
  %1233 = vbcast.lane.b32.xlu0 %v805, %s1232
  %v1234 = vpop.permute.xlu0 %1233
  %s1236 = sor.u32 256, 24
  %1237 = vbcast.lane.b32.xlu0 %v805, %s1236
  %v1238 = vpop.permute.xlu0 %1237
  %s1240 = sor.u32 256, 16
  %1241 = vbcast.lane.b32.xlu0 %v816, %s1240
  %v1242 = vpop.permute.xlu0 %1241
  %s1244 = sor.u32 256, 24
  %1245 = vbcast.lane.b32.xlu0 %v816, %s1244
  %v1246 = vpop.permute.xlu0 %1245
  %s1248 = sor.u32 256, 16
  %1249 = vbcast.lane.b32.xlu0 %v827, %s1248
  %v1250 = vpop.permute.xlu0 %1249
  %s1252 = sor.u32 256, 24
  %1253 = vbcast.lane.b32.xlu0 %v827, %s1252
  %v1254 = vpop.permute.xlu0 %1253
  %s1256 = sor.u32 256, 16
  %1257 = vbcast.lane.b32.xlu0 %v838, %s1256
  %v1258 = vpop.permute.xlu0 %1257
  %s1260 = sor.u32 256, 24
  %1261 = vbcast.lane.b32.xlu0 %v838, %s1260
  %v1262 = vpop.permute.xlu0 %1261
  %s1264 = sor.u32 256, 16
  %1265 = vbcast.lane.b32.xlu0 %v849, %s1264
  %v1266 = vpop.permute.xlu0 %1265
  %s1268 = sor.u32 256, 24
  %1269 = vbcast.lane.b32.xlu0 %v849, %s1268
  %v1270 = vpop.permute.xlu0 %1269
  %s1272 = sor.u32 256, 16
  %1273 = vbcast.lane.b32.xlu0 %v860, %s1272
  %v1274 = vpop.permute.xlu0 %1273
  %s1276 = sor.u32 256, 24
  %1277 = vbcast.lane.b32.xlu0 %v860, %s1276
  %v1278 = vpop.permute.xlu0 %1277
  %s1280 = sor.u32 256, 16
  %1281 = vbcast.lane.b32.xlu0 %v871, %s1280
  %v1282 = vpop.permute.xlu0 %1281
  %s1284 = sor.u32 256, 24
  %1285 = vbcast.lane.b32.xlu0 %v871, %s1284
  %v1286 = vpop.permute.xlu0 %1285
  %s1288 = sor.u32 256, 16
  %1289 = vbcast.lane.b32.xlu0 %v882, %s1288
  %v1290 = vpop.permute.xlu0 %1289
  %s1292 = sor.u32 256, 24
  %1293 = vbcast.lane.b32.xlu0 %v882, %s1292
  %v1294 = vpop.permute.xlu0 %1293
  %s1296 = sor.u32 256, 16
  %1297 = vbcast.lane.b32.xlu0 %v893, %s1296
  %v1298 = vpop.permute.xlu0 %1297
  %s1300 = sor.u32 256, 24
  %1301 = vbcast.lane.b32.xlu0 %v893, %s1300
  %v1302 = vpop.permute.xlu0 %1301
  %s1304 = sor.u32 256, 16
  %1305 = vbcast.lane.b32.xlu0 %v904, %s1304
  %v1306 = vpop.permute.xlu0 %1305
  %s1308 = sor.u32 256, 24
  %1309 = vbcast.lane.b32.xlu0 %v904, %s1308
  %v1310 = vpop.permute.xlu0 %1309
  %s1312 = sor.u32 256, 16
  %1313 = vbcast.lane.b32.xlu0 %v915, %s1312
  %v1314 = vpop.permute.xlu0 %1313
  %s1316 = sor.u32 256, 24
  %1317 = vbcast.lane.b32.xlu0 %v915, %s1316
  %v1318 = vpop.permute.xlu0 %1317
  %s1320 = sor.u32 256, 16
  %1321 = vbcast.lane.b32.xlu0 %v926, %s1320
  %v1322 = vpop.permute.xlu0 %1321
  %s1324 = sor.u32 256, 24
  %1325 = vbcast.lane.b32.xlu0 %v926, %s1324
  %v1326 = vpop.permute.xlu0 %1325
  %s1328 = sor.u32 256, 16
  %1329 = vbcast.lane.b32.xlu0 %v937, %s1328
  %v1330 = vpop.permute.xlu0 %1329
  %s1332 = sor.u32 256, 24
  %1333 = vbcast.lane.b32.xlu0 %v937, %s1332
  %v1334 = vpop.permute.xlu0 %1333
  %s1336 = sor.u32 256, 16
  %1337 = vbcast.lane.b32.xlu0 %v948, %s1336
  %v1338 = vpop.permute.xlu0 %1337
  %s1340 = sor.u32 256, 24
  %1341 = vbcast.lane.b32.xlu0 %v948, %s1340
  %v1342 = vpop.permute.xlu0 %1341
  %s1344 = sor.u32 256, 16
  %1345 = vbcast.lane.b32.xlu0 %v959, %s1344
  %v1346 = vpop.permute.xlu0 %1345
  %s1348 = sor.u32 256, 24
  %1349 = vbcast.lane.b32.xlu0 %v959, %s1348
  %v1350 = vpop.permute.xlu0 %1349
  %v1415 = vmul.f32 %v571, %v1098
  %v1416 = vmul.f32 %v574, %v1102
  %v1417 = vmul.f32 %v571, %v1106
  %v1418 = vmul.f32 %v574, %v1110
  %v1419 = vmul.f32 %v571, %v1114
  %v1420 = vmul.f32 %v574, %v1118
  %v1421 = vmul.f32 %v571, %v1122
  %v1422 = vmul.f32 %v574, %v1126
  %v1423 = vmul.f32 %v571, %v1130
  %v1424 = vmul.f32 %v574, %v1134
  %v1425 = vmul.f32 %v571, %v1138
  %v1426 = vmul.f32 %v574, %v1142
  %v1427 = vmul.f32 %v571, %v1146
  %v1428 = vmul.f32 %v574, %v1150
  %v1429 = vmul.f32 %v571, %v1154
  %v1430 = vmul.f32 %v574, %v1158
  %v1431 = vmul.f32 %v571, %v1162
  %v1432 = vmul.f32 %v574, %v1166
  %v1433 = vmul.f32 %v571, %v1170
  %v1434 = vmul.f32 %v574, %v1174
  %v1435 = vmul.f32 %v571, %v1178
  %v1436 = vmul.f32 %v574, %v1182
  %v1437 = vmul.f32 %v571, %v1186
  %v1438 = vmul.f32 %v574, %v1190
  %v1439 = vmul.f32 %v571, %v1194
  %v1440 = vmul.f32 %v574, %v1198
  %v1441 = vmul.f32 %v571, %v1202
  %v1442 = vmul.f32 %v574, %v1206
  %v1443 = vmul.f32 %v571, %v1210
  %v1444 = vmul.f32 %v574, %v1214
  %v1445 = vmul.f32 %v571, %v1218
  %v1446 = vmul.f32 %v574, %v1222
  %v1447 = vmul.f32 %v571, %v1226
  %v1448 = vmul.f32 %v574, %v1230
  %v1449 = vmul.f32 %v571, %v1234
  %v1450 = vmul.f32 %v574, %v1238
  %v1451 = vmul.f32 %v571, %v1242
  %v1452 = vmul.f32 %v574, %v1246
  %v1453 = vmul.f32 %v571, %v1250
  %v1454 = vmul.f32 %v574, %v1254
  %v1455 = vmul.f32 %v571, %v1258
  %v1456 = vmul.f32 %v574, %v1262
  %v1457 = vmul.f32 %v571, %v1266
  %v1458 = vmul.f32 %v574, %v1270
  %v1459 = vmul.f32 %v571, %v1274
  %v1460 = vmul.f32 %v574, %v1278
  %v1461 = vmul.f32 %v571, %v1282
  %v1462 = vmul.f32 %v574, %v1286
  %v1463 = vmul.f32 %v571, %v1290
  %v1464 = vmul.f32 %v574, %v1294
  %v1465 = vmul.f32 %v571, %v1298
  %v1466 = vmul.f32 %v574, %v1302
  %v1467 = vmul.f32 %v571, %v1306
  %v1468 = vmul.f32 %v574, %v1310
  %v1469 = vmul.f32 %v571, %v1314
  %v1470 = vmul.f32 %v574, %v1318
  %v1471 = vmul.f32 %v571, %v1322
  %v1472 = vmul.f32 %v574, %v1326
  %v1473 = vmul.f32 %v571, %v1330
  %v1474 = vmul.f32 %v574, %v1334
  %v1475 = vmul.f32 %v571, %v1338
  %v1476 = vmul.f32 %v574, %v1342
  %v1477 = vmul.f32 %v571, %v1346
  %v1478 = vmul.f32 %v574, %v1350
  %v1479 = vadd.f32 %v1031, %v1415
  %v1480 = vadd.f32 %v1032, %v1416
  %v1481 = vadd.f32 %v1033, %v1417
  %v1482 = vadd.f32 %v1034, %v1418
  %v1483 = vadd.f32 %v1035, %v1419
  %v1484 = vadd.f32 %v1036, %v1420
  %v1485 = vadd.f32 %v1037, %v1421
  %v1486 = vadd.f32 %v1038, %v1422
  %v1487 = vadd.f32 %v1039, %v1423
  %v1488 = vadd.f32 %v1040, %v1424
  %v1489 = vadd.f32 %v1041, %v1425
  %v1490 = vadd.f32 %v1042, %v1426
  %v1491 = vadd.f32 %v1043, %v1427
  %v1492 = vadd.f32 %v1044, %v1428
  %v1493 = vadd.f32 %v1045, %v1429
  %v1494 = vadd.f32 %v1046, %v1430
  %v1495 = vadd.f32 %v1047, %v1431
  %v1496 = vadd.f32 %v1048, %v1432
  %v1497 = vadd.f32 %v1049, %v1433
  %v1498 = vadd.f32 %v1050, %v1434
  %v1499 = vadd.f32 %v1051, %v1435
  %v1500 = vadd.f32 %v1052, %v1436
  %v1501 = vadd.f32 %v1053, %v1437
  %v1502 = vadd.f32 %v1054, %v1438
  %v1503 = vadd.f32 %v1055, %v1439
  %v1504 = vadd.f32 %v1056, %v1440
  %v1505 = vadd.f32 %v1057, %v1441
  %v1506 = vadd.f32 %v1058, %v1442
  %v1507 = vadd.f32 %v1059, %v1443
  %v1508 = vadd.f32 %v1060, %v1444
  %v1509 = vadd.f32 %v1061, %v1445
  %v1510 = vadd.f32 %v1062, %v1446
  %v1511 = vadd.f32 %v1063, %v1447
  %v1512 = vadd.f32 %v1064, %v1448
  %v1513 = vadd.f32 %v1065, %v1449
  %v1514 = vadd.f32 %v1066, %v1450
  %v1515 = vadd.f32 %v1067, %v1451
  %v1516 = vadd.f32 %v1068, %v1452
  %v1517 = vadd.f32 %v1069, %v1453
  %v1518 = vadd.f32 %v1070, %v1454
  %v1519 = vadd.f32 %v1071, %v1455
  %v1520 = vadd.f32 %v1072, %v1456
  %v1521 = vadd.f32 %v1073, %v1457
  %v1522 = vadd.f32 %v1074, %v1458
  %v1523 = vadd.f32 %v1075, %v1459
  %v1524 = vadd.f32 %v1076, %v1460
  %v1525 = vadd.f32 %v1077, %v1461
  %v1526 = vadd.f32 %v1078, %v1462
  %v1527 = vadd.f32 %v1079, %v1463
  %v1528 = vadd.f32 %v1080, %v1464
  %v1529 = vadd.f32 %v1081, %v1465
  %v1530 = vadd.f32 %v1082, %v1466
  %v1531 = vadd.f32 %v1083, %v1467
  %v1532 = vadd.f32 %v1084, %v1468
  %v1533 = vadd.f32 %v1085, %v1469
  %v1534 = vadd.f32 %v1086, %v1470
  %v1535 = vadd.f32 %v1087, %v1471
  %v1536 = vadd.f32 %v1088, %v1472
  %v1537 = vadd.f32 %v1089, %v1473
  %v1538 = vadd.f32 %v1090, %v1474
  %v1539 = vadd.f32 %v1091, %v1475
  %v1540 = vadd.f32 %v1092, %v1476
  %v1541 = vadd.f32 %v1093, %v1477
  %v1542 = vadd.f32 %v1094, %v1478
  %s1544 = sor.u32 256, 32
  %1545 = vbcast.lane.b32.xlu0 %v618, %s1544
  %v1546 = vpop.permute.xlu0 %1545
  %s1548 = sor.u32 256, 40
  %1549 = vbcast.lane.b32.xlu0 %v618, %s1548
  %v1550 = vpop.permute.xlu0 %1549
  %s1552 = sor.u32 256, 32
  %1553 = vbcast.lane.b32.xlu0 %v629, %s1552
  %v1554 = vpop.permute.xlu0 %1553
  %s1556 = sor.u32 256, 40
  %1557 = vbcast.lane.b32.xlu0 %v629, %s1556
  %v1558 = vpop.permute.xlu0 %1557
  %s1560 = sor.u32 256, 32
  %1561 = vbcast.lane.b32.xlu0 %v640, %s1560
  %v1562 = vpop.permute.xlu0 %1561
  %s1564 = sor.u32 256, 40
  %1565 = vbcast.lane.b32.xlu0 %v640, %s1564
  %v1566 = vpop.permute.xlu0 %1565
  %s1568 = sor.u32 256, 32
  %1569 = vbcast.lane.b32.xlu0 %v651, %s1568
  %v1570 = vpop.permute.xlu0 %1569
  %s1572 = sor.u32 256, 40
  %1573 = vbcast.lane.b32.xlu0 %v651, %s1572
  %v1574 = vpop.permute.xlu0 %1573
  %s1576 = sor.u32 256, 32
  %1577 = vbcast.lane.b32.xlu0 %v662, %s1576
  %v1578 = vpop.permute.xlu0 %1577
  %s1580 = sor.u32 256, 40
  %1581 = vbcast.lane.b32.xlu0 %v662, %s1580
  %v1582 = vpop.permute.xlu0 %1581
  %s1584 = sor.u32 256, 32
  %1585 = vbcast.lane.b32.xlu0 %v673, %s1584
  %v1586 = vpop.permute.xlu0 %1585
  %s1588 = sor.u32 256, 40
  %1589 = vbcast.lane.b32.xlu0 %v673, %s1588
  %v1590 = vpop.permute.xlu0 %1589
  %s1592 = sor.u32 256, 32
  %1593 = vbcast.lane.b32.xlu0 %v684, %s1592
  %v1594 = vpop.permute.xlu0 %1593
  %s1596 = sor.u32 256, 40
  %1597 = vbcast.lane.b32.xlu0 %v684, %s1596
  %v1598 = vpop.permute.xlu0 %1597
  %s1600 = sor.u32 256, 32
  %1601 = vbcast.lane.b32.xlu0 %v695, %s1600
  %v1602 = vpop.permute.xlu0 %1601
  %s1604 = sor.u32 256, 40
  %1605 = vbcast.lane.b32.xlu0 %v695, %s1604
  %v1606 = vpop.permute.xlu0 %1605
  %s1608 = sor.u32 256, 32
  %1609 = vbcast.lane.b32.xlu0 %v706, %s1608
  %v1610 = vpop.permute.xlu0 %1609
  %s1612 = sor.u32 256, 40
  %1613 = vbcast.lane.b32.xlu0 %v706, %s1612
  %v1614 = vpop.permute.xlu0 %1613
  %s1616 = sor.u32 256, 32
  %1617 = vbcast.lane.b32.xlu0 %v717, %s1616
  %v1618 = vpop.permute.xlu0 %1617
  %s1620 = sor.u32 256, 40
  %1621 = vbcast.lane.b32.xlu0 %v717, %s1620
  %v1622 = vpop.permute.xlu0 %1621
  %s1624 = sor.u32 256, 32
  %1625 = vbcast.lane.b32.xlu0 %v728, %s1624
  %v1626 = vpop.permute.xlu0 %1625
  %s1628 = sor.u32 256, 40
  %1629 = vbcast.lane.b32.xlu0 %v728, %s1628
  %v1630 = vpop.permute.xlu0 %1629
  %s1632 = sor.u32 256, 32
  %1633 = vbcast.lane.b32.xlu0 %v739, %s1632
  %v1634 = vpop.permute.xlu0 %1633
  %s1636 = sor.u32 256, 40
  %1637 = vbcast.lane.b32.xlu0 %v739, %s1636
  %v1638 = vpop.permute.xlu0 %1637
  %s1640 = sor.u32 256, 32
  %1641 = vbcast.lane.b32.xlu0 %v750, %s1640
  %v1642 = vpop.permute.xlu0 %1641
  %s1644 = sor.u32 256, 40
  %1645 = vbcast.lane.b32.xlu0 %v750, %s1644
  %v1646 = vpop.permute.xlu0 %1645
  %s1648 = sor.u32 256, 32
  %1649 = vbcast.lane.b32.xlu0 %v761, %s1648
  %v1650 = vpop.permute.xlu0 %1649
  %s1652 = sor.u32 256, 40
  %1653 = vbcast.lane.b32.xlu0 %v761, %s1652
  %v1654 = vpop.permute.xlu0 %1653
  %s1656 = sor.u32 256, 32
  %1657 = vbcast.lane.b32.xlu0 %v772, %s1656
  %v1658 = vpop.permute.xlu0 %1657
  %s1660 = sor.u32 256, 40
  %1661 = vbcast.lane.b32.xlu0 %v772, %s1660
  %v1662 = vpop.permute.xlu0 %1661
  %s1664 = sor.u32 256, 32
  %1665 = vbcast.lane.b32.xlu0 %v783, %s1664
  %v1666 = vpop.permute.xlu0 %1665
  %s1668 = sor.u32 256, 40
  %1669 = vbcast.lane.b32.xlu0 %v783, %s1668
  %v1670 = vpop.permute.xlu0 %1669
  %s1672 = sor.u32 256, 32
  %1673 = vbcast.lane.b32.xlu0 %v794, %s1672
  %v1674 = vpop.permute.xlu0 %1673
  %s1676 = sor.u32 256, 40
  %1677 = vbcast.lane.b32.xlu0 %v794, %s1676
  %v1678 = vpop.permute.xlu0 %1677
  %s1680 = sor.u32 256, 32
  %1681 = vbcast.lane.b32.xlu0 %v805, %s1680
  %v1682 = vpop.permute.xlu0 %1681
  %s1684 = sor.u32 256, 40
  %1685 = vbcast.lane.b32.xlu0 %v805, %s1684
  %v1686 = vpop.permute.xlu0 %1685
  %s1688 = sor.u32 256, 32
  %1689 = vbcast.lane.b32.xlu0 %v816, %s1688
  %v1690 = vpop.permute.xlu0 %1689
  %s1692 = sor.u32 256, 40
  %1693 = vbcast.lane.b32.xlu0 %v816, %s1692
  %v1694 = vpop.permute.xlu0 %1693
  %s1696 = sor.u32 256, 32
  %1697 = vbcast.lane.b32.xlu0 %v827, %s1696
  %v1698 = vpop.permute.xlu0 %1697
  %s1700 = sor.u32 256, 40
  %1701 = vbcast.lane.b32.xlu0 %v827, %s1700
  %v1702 = vpop.permute.xlu0 %1701
  %s1704 = sor.u32 256, 32
  %1705 = vbcast.lane.b32.xlu0 %v838, %s1704
  %v1706 = vpop.permute.xlu0 %1705
  %s1708 = sor.u32 256, 40
  %1709 = vbcast.lane.b32.xlu0 %v838, %s1708
  %v1710 = vpop.permute.xlu0 %1709
  %s1712 = sor.u32 256, 32
  %1713 = vbcast.lane.b32.xlu0 %v849, %s1712
  %v1714 = vpop.permute.xlu0 %1713
  %s1716 = sor.u32 256, 40
  %1717 = vbcast.lane.b32.xlu0 %v849, %s1716
  %v1718 = vpop.permute.xlu0 %1717
  %s1720 = sor.u32 256, 32
  %1721 = vbcast.lane.b32.xlu0 %v860, %s1720
  %v1722 = vpop.permute.xlu0 %1721
  %s1724 = sor.u32 256, 40
  %1725 = vbcast.lane.b32.xlu0 %v860, %s1724
  %v1726 = vpop.permute.xlu0 %1725
  %s1728 = sor.u32 256, 32
  %1729 = vbcast.lane.b32.xlu0 %v871, %s1728
  %v1730 = vpop.permute.xlu0 %1729
  %s1732 = sor.u32 256, 40
  %1733 = vbcast.lane.b32.xlu0 %v871, %s1732
  %v1734 = vpop.permute.xlu0 %1733
  %s1736 = sor.u32 256, 32
  %1737 = vbcast.lane.b32.xlu0 %v882, %s1736
  %v1738 = vpop.permute.xlu0 %1737
  %s1740 = sor.u32 256, 40
  %1741 = vbcast.lane.b32.xlu0 %v882, %s1740
  %v1742 = vpop.permute.xlu0 %1741
  %s1744 = sor.u32 256, 32
  %1745 = vbcast.lane.b32.xlu0 %v893, %s1744
  %v1746 = vpop.permute.xlu0 %1745
  %s1748 = sor.u32 256, 40
  %1749 = vbcast.lane.b32.xlu0 %v893, %s1748
  %v1750 = vpop.permute.xlu0 %1749
  %s1752 = sor.u32 256, 32
  %1753 = vbcast.lane.b32.xlu0 %v904, %s1752
  %v1754 = vpop.permute.xlu0 %1753
  %s1756 = sor.u32 256, 40
  %1757 = vbcast.lane.b32.xlu0 %v904, %s1756
  %v1758 = vpop.permute.xlu0 %1757
  %s1760 = sor.u32 256, 32
  %1761 = vbcast.lane.b32.xlu0 %v915, %s1760
  %v1762 = vpop.permute.xlu0 %1761
  %s1764 = sor.u32 256, 40
  %1765 = vbcast.lane.b32.xlu0 %v915, %s1764
  %v1766 = vpop.permute.xlu0 %1765
  %s1768 = sor.u32 256, 32
  %1769 = vbcast.lane.b32.xlu0 %v926, %s1768
  %v1770 = vpop.permute.xlu0 %1769
  %s1772 = sor.u32 256, 40
  %1773 = vbcast.lane.b32.xlu0 %v926, %s1772
  %v1774 = vpop.permute.xlu0 %1773
  %s1776 = sor.u32 256, 32
  %1777 = vbcast.lane.b32.xlu0 %v937, %s1776
  %v1778 = vpop.permute.xlu0 %1777
  %s1780 = sor.u32 256, 40
  %1781 = vbcast.lane.b32.xlu0 %v937, %s1780
  %v1782 = vpop.permute.xlu0 %1781
  %s1784 = sor.u32 256, 32
  %1785 = vbcast.lane.b32.xlu0 %v948, %s1784
  %v1786 = vpop.permute.xlu0 %1785
  %s1788 = sor.u32 256, 40
  %1789 = vbcast.lane.b32.xlu0 %v948, %s1788
  %v1790 = vpop.permute.xlu0 %1789
  %s1792 = sor.u32 256, 32
  %1793 = vbcast.lane.b32.xlu0 %v959, %s1792
  %v1794 = vpop.permute.xlu0 %1793
  %s1796 = sor.u32 256, 40
  %1797 = vbcast.lane.b32.xlu0 %v959, %s1796
  %v1798 = vpop.permute.xlu0 %1797
  %v1863 = vmul.f32 %v577, %v1546
  %v1864 = vmul.f32 %v580, %v1550
  %v1865 = vmul.f32 %v577, %v1554
  %v1866 = vmul.f32 %v580, %v1558
  %v1867 = vmul.f32 %v577, %v1562
  %v1868 = vmul.f32 %v580, %v1566
  %v1869 = vmul.f32 %v577, %v1570
  %v1870 = vmul.f32 %v580, %v1574
  %v1871 = vmul.f32 %v577, %v1578
  %v1872 = vmul.f32 %v580, %v1582
  %v1873 = vmul.f32 %v577, %v1586
  %v1874 = vmul.f32 %v580, %v1590
  %v1875 = vmul.f32 %v577, %v1594
  %v1876 = vmul.f32 %v580, %v1598
  %v1877 = vmul.f32 %v577, %v1602
  %v1878 = vmul.f32 %v580, %v1606
  %v1879 = vmul.f32 %v577, %v1610
  %v1880 = vmul.f32 %v580, %v1614
  %v1881 = vmul.f32 %v577, %v1618
  %v1882 = vmul.f32 %v580, %v1622
  %v1883 = vmul.f32 %v577, %v1626
  %v1884 = vmul.f32 %v580, %v1630
  %v1885 = vmul.f32 %v577, %v1634
  %v1886 = vmul.f32 %v580, %v1638
  %v1887 = vmul.f32 %v577, %v1642
  %v1888 = vmul.f32 %v580, %v1646
  %v1889 = vmul.f32 %v577, %v1650
  %v1890 = vmul.f32 %v580, %v1654
  %v1891 = vmul.f32 %v577, %v1658
  %v1892 = vmul.f32 %v580, %v1662
  %v1893 = vmul.f32 %v577, %v1666
  %v1894 = vmul.f32 %v580, %v1670
  %v1895 = vmul.f32 %v577, %v1674
  %v1896 = vmul.f32 %v580, %v1678
  %v1897 = vmul.f32 %v577, %v1682
  %v1898 = vmul.f32 %v580, %v1686
  %v1899 = vmul.f32 %v577, %v1690
  %v1900 = vmul.f32 %v580, %v1694
  %v1901 = vmul.f32 %v577, %v1698
  %v1902 = vmul.f32 %v580, %v1702
  %v1903 = vmul.f32 %v577, %v1706
  %v1904 = vmul.f32 %v580, %v1710
  %v1905 = vmul.f32 %v577, %v1714
  %v1906 = vmul.f32 %v580, %v1718
  %v1907 = vmul.f32 %v577, %v1722
  %v1908 = vmul.f32 %v580, %v1726
  %v1909 = vmul.f32 %v577, %v1730
  %v1910 = vmul.f32 %v580, %v1734
  %v1911 = vmul.f32 %v577, %v1738
  %v1912 = vmul.f32 %v580, %v1742
  %v1913 = vmul.f32 %v577, %v1746
  %v1914 = vmul.f32 %v580, %v1750
  %v1915 = vmul.f32 %v577, %v1754
  %v1916 = vmul.f32 %v580, %v1758
  %v1917 = vmul.f32 %v577, %v1762
  %v1918 = vmul.f32 %v580, %v1766
  %v1919 = vmul.f32 %v577, %v1770
  %v1920 = vmul.f32 %v580, %v1774
  %v1921 = vmul.f32 %v577, %v1778
  %v1922 = vmul.f32 %v580, %v1782
  %v1923 = vmul.f32 %v577, %v1786
  %v1924 = vmul.f32 %v580, %v1790
  %v1925 = vmul.f32 %v577, %v1794
  %v1926 = vmul.f32 %v580, %v1798
  %v1927 = vadd.f32 %v1479, %v1863
  %v1928 = vadd.f32 %v1480, %v1864
  %v1929 = vadd.f32 %v1481, %v1865
  %v1930 = vadd.f32 %v1482, %v1866
  %v1931 = vadd.f32 %v1483, %v1867
  %v1932 = vadd.f32 %v1484, %v1868
  %v1933 = vadd.f32 %v1485, %v1869
  %v1934 = vadd.f32 %v1486, %v1870
  %v1935 = vadd.f32 %v1487, %v1871
  %v1936 = vadd.f32 %v1488, %v1872
  %v1937 = vadd.f32 %v1489, %v1873
  %v1938 = vadd.f32 %v1490, %v1874
  %v1939 = vadd.f32 %v1491, %v1875
  %v1940 = vadd.f32 %v1492, %v1876
  %v1941 = vadd.f32 %v1493, %v1877
  %v1942 = vadd.f32 %v1494, %v1878
  %v1943 = vadd.f32 %v1495, %v1879
  %v1944 = vadd.f32 %v1496, %v1880
  %v1945 = vadd.f32 %v1497, %v1881
  %v1946 = vadd.f32 %v1498, %v1882
  %v1947 = vadd.f32 %v1499, %v1883
  %v1948 = vadd.f32 %v1500, %v1884
  %v1949 = vadd.f32 %v1501, %v1885
  %v1950 = vadd.f32 %v1502, %v1886
  %v1951 = vadd.f32 %v1503, %v1887
  %v1952 = vadd.f32 %v1504, %v1888
  %v1953 = vadd.f32 %v1505, %v1889
  %v1954 = vadd.f32 %v1506, %v1890
  %v1955 = vadd.f32 %v1507, %v1891
  %v1956 = vadd.f32 %v1508, %v1892
  %v1957 = vadd.f32 %v1509, %v1893
  %v1958 = vadd.f32 %v1510, %v1894
  %v1959 = vadd.f32 %v1511, %v1895
  %v1960 = vadd.f32 %v1512, %v1896
  %v1961 = vadd.f32 %v1513, %v1897
  %v1962 = vadd.f32 %v1514, %v1898
  %v1963 = vadd.f32 %v1515, %v1899
  %v1964 = vadd.f32 %v1516, %v1900
  %v1965 = vadd.f32 %v1517, %v1901
  %v1966 = vadd.f32 %v1518, %v1902
  %v1967 = vadd.f32 %v1519, %v1903
  %v1968 = vadd.f32 %v1520, %v1904
  %v1969 = vadd.f32 %v1521, %v1905
  %v1970 = vadd.f32 %v1522, %v1906
  %v1971 = vadd.f32 %v1523, %v1907
  %v1972 = vadd.f32 %v1524, %v1908
  %v1973 = vadd.f32 %v1525, %v1909
  %v1974 = vadd.f32 %v1526, %v1910
  %v1975 = vadd.f32 %v1527, %v1911
  %v1976 = vadd.f32 %v1528, %v1912
  %v1977 = vadd.f32 %v1529, %v1913
  %v1978 = vadd.f32 %v1530, %v1914
  %v1979 = vadd.f32 %v1531, %v1915
  %v1980 = vadd.f32 %v1532, %v1916
  %v1981 = vadd.f32 %v1533, %v1917
  %v1982 = vadd.f32 %v1534, %v1918
  %v1983 = vadd.f32 %v1535, %v1919
  %v1984 = vadd.f32 %v1536, %v1920
  %v1985 = vadd.f32 %v1537, %v1921
  %v1986 = vadd.f32 %v1538, %v1922
  %v1987 = vadd.f32 %v1539, %v1923
  %v1988 = vadd.f32 %v1540, %v1924
  %v1989 = vadd.f32 %v1541, %v1925
  %v1990 = vadd.f32 %v1542, %v1926
  %s1992 = sor.u32 256, 48
  %1993 = vbcast.lane.b32.xlu0 %v618, %s1992
  %v1994 = vpop.permute.xlu0 %1993
  %s1996 = sor.u32 256, 56
  %1997 = vbcast.lane.b32.xlu0 %v618, %s1996
  %v1998 = vpop.permute.xlu0 %1997
  %s2000 = sor.u32 256, 48
  %2001 = vbcast.lane.b32.xlu0 %v629, %s2000
  %v2002 = vpop.permute.xlu0 %2001
  %s2004 = sor.u32 256, 56
  %2005 = vbcast.lane.b32.xlu0 %v629, %s2004
  %v2006 = vpop.permute.xlu0 %2005
  %s2008 = sor.u32 256, 48
  %2009 = vbcast.lane.b32.xlu0 %v640, %s2008
  %v2010 = vpop.permute.xlu0 %2009
  %s2012 = sor.u32 256, 56
  %2013 = vbcast.lane.b32.xlu0 %v640, %s2012
  %v2014 = vpop.permute.xlu0 %2013
  %s2016 = sor.u32 256, 48
  %2017 = vbcast.lane.b32.xlu0 %v651, %s2016
  %v2018 = vpop.permute.xlu0 %2017
  %s2020 = sor.u32 256, 56
  %2021 = vbcast.lane.b32.xlu0 %v651, %s2020
  %v2022 = vpop.permute.xlu0 %2021
  %s2024 = sor.u32 256, 48
  %2025 = vbcast.lane.b32.xlu0 %v662, %s2024
  %v2026 = vpop.permute.xlu0 %2025
  %s2028 = sor.u32 256, 56
  %2029 = vbcast.lane.b32.xlu0 %v662, %s2028
  %v2030 = vpop.permute.xlu0 %2029
  %s2032 = sor.u32 256, 48
  %2033 = vbcast.lane.b32.xlu0 %v673, %s2032
  %v2034 = vpop.permute.xlu0 %2033
  %s2036 = sor.u32 256, 56
  %2037 = vbcast.lane.b32.xlu0 %v673, %s2036
  %v2038 = vpop.permute.xlu0 %2037
  %s2040 = sor.u32 256, 48
  %2041 = vbcast.lane.b32.xlu0 %v684, %s2040
  %v2042 = vpop.permute.xlu0 %2041
  %s2044 = sor.u32 256, 56
  %2045 = vbcast.lane.b32.xlu0 %v684, %s2044
  %v2046 = vpop.permute.xlu0 %2045
  %s2048 = sor.u32 256, 48
  %2049 = vbcast.lane.b32.xlu0 %v695, %s2048
  %v2050 = vpop.permute.xlu0 %2049
  %s2052 = sor.u32 256, 56
  %2053 = vbcast.lane.b32.xlu0 %v695, %s2052
  %v2054 = vpop.permute.xlu0 %2053
  %s2056 = sor.u32 256, 48
  %2057 = vbcast.lane.b32.xlu0 %v706, %s2056
  %v2058 = vpop.permute.xlu0 %2057
  %s2060 = sor.u32 256, 56
  %2061 = vbcast.lane.b32.xlu0 %v706, %s2060
  %v2062 = vpop.permute.xlu0 %2061
  %s2064 = sor.u32 256, 48
  %2065 = vbcast.lane.b32.xlu0 %v717, %s2064
  %v2066 = vpop.permute.xlu0 %2065
  %s2068 = sor.u32 256, 56
  %2069 = vbcast.lane.b32.xlu0 %v717, %s2068
  %v2070 = vpop.permute.xlu0 %2069
  %s2072 = sor.u32 256, 48
  %2073 = vbcast.lane.b32.xlu0 %v728, %s2072
  %v2074 = vpop.permute.xlu0 %2073
  %s2076 = sor.u32 256, 56
  %2077 = vbcast.lane.b32.xlu0 %v728, %s2076
  %v2078 = vpop.permute.xlu0 %2077
  %s2080 = sor.u32 256, 48
  %2081 = vbcast.lane.b32.xlu0 %v739, %s2080
  %v2082 = vpop.permute.xlu0 %2081
  %s2084 = sor.u32 256, 56
  %2085 = vbcast.lane.b32.xlu0 %v739, %s2084
  %v2086 = vpop.permute.xlu0 %2085
  %s2088 = sor.u32 256, 48
  %2089 = vbcast.lane.b32.xlu0 %v750, %s2088
  %v2090 = vpop.permute.xlu0 %2089
  %s2092 = sor.u32 256, 56
  %2093 = vbcast.lane.b32.xlu0 %v750, %s2092
  %v2094 = vpop.permute.xlu0 %2093
  %s2096 = sor.u32 256, 48
  %2097 = vbcast.lane.b32.xlu0 %v761, %s2096
  %v2098 = vpop.permute.xlu0 %2097
  %s2100 = sor.u32 256, 56
  %2101 = vbcast.lane.b32.xlu0 %v761, %s2100
  %v2102 = vpop.permute.xlu0 %2101
  %s2104 = sor.u32 256, 48
  %2105 = vbcast.lane.b32.xlu0 %v772, %s2104
  %v2106 = vpop.permute.xlu0 %2105
  %s2108 = sor.u32 256, 56
  %2109 = vbcast.lane.b32.xlu0 %v772, %s2108
  %v2110 = vpop.permute.xlu0 %2109
  %s2112 = sor.u32 256, 48
  %2113 = vbcast.lane.b32.xlu0 %v783, %s2112
  %v2114 = vpop.permute.xlu0 %2113
  %s2116 = sor.u32 256, 56
  %2117 = vbcast.lane.b32.xlu0 %v783, %s2116
  %v2118 = vpop.permute.xlu0 %2117
  %s2120 = sor.u32 256, 48
  %2121 = vbcast.lane.b32.xlu0 %v794, %s2120
  %v2122 = vpop.permute.xlu0 %2121
  %s2124 = sor.u32 256, 56
  %2125 = vbcast.lane.b32.xlu0 %v794, %s2124
  %v2126 = vpop.permute.xlu0 %2125
  %s2128 = sor.u32 256, 48
  %2129 = vbcast.lane.b32.xlu0 %v805, %s2128
  %v2130 = vpop.permute.xlu0 %2129
  %s2132 = sor.u32 256, 56
  %2133 = vbcast.lane.b32.xlu0 %v805, %s2132
  %v2134 = vpop.permute.xlu0 %2133
  %s2136 = sor.u32 256, 48
  %2137 = vbcast.lane.b32.xlu0 %v816, %s2136
  %v2138 = vpop.permute.xlu0 %2137
  %s2140 = sor.u32 256, 56
  %2141 = vbcast.lane.b32.xlu0 %v816, %s2140
  %v2142 = vpop.permute.xlu0 %2141
  %s2144 = sor.u32 256, 48
  %2145 = vbcast.lane.b32.xlu0 %v827, %s2144
  %v2146 = vpop.permute.xlu0 %2145
  %s2148 = sor.u32 256, 56
  %2149 = vbcast.lane.b32.xlu0 %v827, %s2148
  %v2150 = vpop.permute.xlu0 %2149
  %s2152 = sor.u32 256, 48
  %2153 = vbcast.lane.b32.xlu0 %v838, %s2152
  %v2154 = vpop.permute.xlu0 %2153
  %s2156 = sor.u32 256, 56
  %2157 = vbcast.lane.b32.xlu0 %v838, %s2156
  %v2158 = vpop.permute.xlu0 %2157
  %s2160 = sor.u32 256, 48
  %2161 = vbcast.lane.b32.xlu0 %v849, %s2160
  %v2162 = vpop.permute.xlu0 %2161
  %s2164 = sor.u32 256, 56
  %2165 = vbcast.lane.b32.xlu0 %v849, %s2164
  %v2166 = vpop.permute.xlu0 %2165
  %s2168 = sor.u32 256, 48
  %2169 = vbcast.lane.b32.xlu0 %v860, %s2168
  %v2170 = vpop.permute.xlu0 %2169
  %s2172 = sor.u32 256, 56
  %2173 = vbcast.lane.b32.xlu0 %v860, %s2172
  %v2174 = vpop.permute.xlu0 %2173
  %s2176 = sor.u32 256, 48
  %2177 = vbcast.lane.b32.xlu0 %v871, %s2176
  %v2178 = vpop.permute.xlu0 %2177
  %s2180 = sor.u32 256, 56
  %2181 = vbcast.lane.b32.xlu0 %v871, %s2180
  %v2182 = vpop.permute.xlu0 %2181
  %s2184 = sor.u32 256, 48
  %2185 = vbcast.lane.b32.xlu0 %v882, %s2184
  %v2186 = vpop.permute.xlu0 %2185
  %s2188 = sor.u32 256, 56
  %2189 = vbcast.lane.b32.xlu0 %v882, %s2188
  %v2190 = vpop.permute.xlu0 %2189
  %s2192 = sor.u32 256, 48
  %2193 = vbcast.lane.b32.xlu0 %v893, %s2192
  %v2194 = vpop.permute.xlu0 %2193
  %s2196 = sor.u32 256, 56
  %2197 = vbcast.lane.b32.xlu0 %v893, %s2196
  %v2198 = vpop.permute.xlu0 %2197
  %s2200 = sor.u32 256, 48
  %2201 = vbcast.lane.b32.xlu0 %v904, %s2200
  %v2202 = vpop.permute.xlu0 %2201
  %s2204 = sor.u32 256, 56
  %2205 = vbcast.lane.b32.xlu0 %v904, %s2204
  %v2206 = vpop.permute.xlu0 %2205
  %s2208 = sor.u32 256, 48
  %2209 = vbcast.lane.b32.xlu0 %v915, %s2208
  %v2210 = vpop.permute.xlu0 %2209
  %s2212 = sor.u32 256, 56
  %2213 = vbcast.lane.b32.xlu0 %v915, %s2212
  %v2214 = vpop.permute.xlu0 %2213
  %s2216 = sor.u32 256, 48
  %2217 = vbcast.lane.b32.xlu0 %v926, %s2216
  %v2218 = vpop.permute.xlu0 %2217
  %s2220 = sor.u32 256, 56
  %2221 = vbcast.lane.b32.xlu0 %v926, %s2220
  %v2222 = vpop.permute.xlu0 %2221
  %s2224 = sor.u32 256, 48
  %2225 = vbcast.lane.b32.xlu0 %v937, %s2224
  %v2226 = vpop.permute.xlu0 %2225
  %s2228 = sor.u32 256, 56
  %2229 = vbcast.lane.b32.xlu0 %v937, %s2228
  %v2230 = vpop.permute.xlu0 %2229
  %s2232 = sor.u32 256, 48
  %2233 = vbcast.lane.b32.xlu0 %v948, %s2232
  %v2234 = vpop.permute.xlu0 %2233
  %s2236 = sor.u32 256, 56
  %2237 = vbcast.lane.b32.xlu0 %v948, %s2236
  %v2238 = vpop.permute.xlu0 %2237
  %s2240 = sor.u32 256, 48
  %2241 = vbcast.lane.b32.xlu0 %v959, %s2240
  %v2242 = vpop.permute.xlu0 %2241
  %s2244 = sor.u32 256, 56
  %2245 = vbcast.lane.b32.xlu0 %v959, %s2244
  %v2246 = vpop.permute.xlu0 %2245
  %v2311 = vmul.f32 %v583, %v1994
  %v2312 = vmul.f32 %v586, %v1998
  %v2313 = vmul.f32 %v583, %v2002
  %v2314 = vmul.f32 %v586, %v2006
  %v2315 = vmul.f32 %v583, %v2010
  %v2316 = vmul.f32 %v586, %v2014
  %v2317 = vmul.f32 %v583, %v2018
  %v2318 = vmul.f32 %v586, %v2022
  %v2319 = vmul.f32 %v583, %v2026
  %v2320 = vmul.f32 %v586, %v2030
  %v2321 = vmul.f32 %v583, %v2034
  %v2322 = vmul.f32 %v586, %v2038
  %v2323 = vmul.f32 %v583, %v2042
  %v2324 = vmul.f32 %v586, %v2046
  %v2325 = vmul.f32 %v583, %v2050
  %v2326 = vmul.f32 %v586, %v2054
  %v2327 = vmul.f32 %v583, %v2058
  %v2328 = vmul.f32 %v586, %v2062
  %v2329 = vmul.f32 %v583, %v2066
  %v2330 = vmul.f32 %v586, %v2070
  %v2331 = vmul.f32 %v583, %v2074
  %v2332 = vmul.f32 %v586, %v2078
  %v2333 = vmul.f32 %v583, %v2082
  %v2334 = vmul.f32 %v586, %v2086
  %v2335 = vmul.f32 %v583, %v2090
  %v2336 = vmul.f32 %v586, %v2094
  %v2337 = vmul.f32 %v583, %v2098
  %v2338 = vmul.f32 %v586, %v2102
  %v2339 = vmul.f32 %v583, %v2106
  %v2340 = vmul.f32 %v586, %v2110
  %v2341 = vmul.f32 %v583, %v2114
  %v2342 = vmul.f32 %v586, %v2118
  %v2343 = vmul.f32 %v583, %v2122
  %v2344 = vmul.f32 %v586, %v2126
  %v2345 = vmul.f32 %v583, %v2130
  %v2346 = vmul.f32 %v586, %v2134
  %v2347 = vmul.f32 %v583, %v2138
  %v2348 = vmul.f32 %v586, %v2142
  %v2349 = vmul.f32 %v583, %v2146
  %v2350 = vmul.f32 %v586, %v2150
  %v2351 = vmul.f32 %v583, %v2154
  %v2352 = vmul.f32 %v586, %v2158
  %v2353 = vmul.f32 %v583, %v2162
  %v2354 = vmul.f32 %v586, %v2166
  %v2355 = vmul.f32 %v583, %v2170
  %v2356 = vmul.f32 %v586, %v2174
  %v2357 = vmul.f32 %v583, %v2178
  %v2358 = vmul.f32 %v586, %v2182
  %v2359 = vmul.f32 %v583, %v2186
  %v2360 = vmul.f32 %v586, %v2190
  %v2361 = vmul.f32 %v583, %v2194
  %v2362 = vmul.f32 %v586, %v2198
  %v2363 = vmul.f32 %v583, %v2202
  %v2364 = vmul.f32 %v586, %v2206
  %v2365 = vmul.f32 %v583, %v2210
  %v2366 = vmul.f32 %v586, %v2214
  %v2367 = vmul.f32 %v583, %v2218
  %v2368 = vmul.f32 %v586, %v2222
  %v2369 = vmul.f32 %v583, %v2226
  %v2370 = vmul.f32 %v586, %v2230
  %v2371 = vmul.f32 %v583, %v2234
  %v2372 = vmul.f32 %v586, %v2238
  %v2373 = vmul.f32 %v583, %v2242
  %v2374 = vmul.f32 %v586, %v2246
  %v2375 = vadd.f32 %v1927, %v2311
  %v2376 = vadd.f32 %v1928, %v2312
  %v2377 = vadd.f32 %v1929, %v2313
  %v2378 = vadd.f32 %v1930, %v2314
  %v2379 = vadd.f32 %v1931, %v2315
  %v2380 = vadd.f32 %v1932, %v2316
  %v2381 = vadd.f32 %v1933, %v2317
  %v2382 = vadd.f32 %v1934, %v2318
  %v2383 = vadd.f32 %v1935, %v2319
  %v2384 = vadd.f32 %v1936, %v2320
  %v2385 = vadd.f32 %v1937, %v2321
  %v2386 = vadd.f32 %v1938, %v2322
  %v2387 = vadd.f32 %v1939, %v2323
  %v2388 = vadd.f32 %v1940, %v2324
  %v2389 = vadd.f32 %v1941, %v2325
  %v2390 = vadd.f32 %v1942, %v2326
  %v2391 = vadd.f32 %v1943, %v2327
  %v2392 = vadd.f32 %v1944, %v2328
  %v2393 = vadd.f32 %v1945, %v2329
  %v2394 = vadd.f32 %v1946, %v2330
  %v2395 = vadd.f32 %v1947, %v2331
  %v2396 = vadd.f32 %v1948, %v2332
  %v2397 = vadd.f32 %v1949, %v2333
  %v2398 = vadd.f32 %v1950, %v2334
  %v2399 = vadd.f32 %v1951, %v2335
  %v2400 = vadd.f32 %v1952, %v2336
  %v2401 = vadd.f32 %v1953, %v2337
  %v2402 = vadd.f32 %v1954, %v2338
  %v2403 = vadd.f32 %v1955, %v2339
  %v2404 = vadd.f32 %v1956, %v2340
  %v2405 = vadd.f32 %v1957, %v2341
  %v2406 = vadd.f32 %v1958, %v2342
  %v2407 = vadd.f32 %v1959, %v2343
  %v2408 = vadd.f32 %v1960, %v2344
  %v2409 = vadd.f32 %v1961, %v2345
  %v2410 = vadd.f32 %v1962, %v2346
  %v2411 = vadd.f32 %v1963, %v2347
  %v2412 = vadd.f32 %v1964, %v2348
  %v2413 = vadd.f32 %v1965, %v2349
  %v2414 = vadd.f32 %v1966, %v2350
  %v2415 = vadd.f32 %v1967, %v2351
  %v2416 = vadd.f32 %v1968, %v2352
  %v2417 = vadd.f32 %v1969, %v2353
  %v2418 = vadd.f32 %v1970, %v2354
  %v2419 = vadd.f32 %v1971, %v2355
  %v2420 = vadd.f32 %v1972, %v2356
  %v2421 = vadd.f32 %v1973, %v2357
  %v2422 = vadd.f32 %v1974, %v2358
  %v2423 = vadd.f32 %v1975, %v2359
  %v2424 = vadd.f32 %v1976, %v2360
  %v2425 = vadd.f32 %v1977, %v2361
  %v2426 = vadd.f32 %v1978, %v2362
  %v2427 = vadd.f32 %v1979, %v2363
  %v2428 = vadd.f32 %v1980, %v2364
  %v2429 = vadd.f32 %v1981, %v2365
  %v2430 = vadd.f32 %v1982, %v2366
  %v2431 = vadd.f32 %v1983, %v2367
  %v2432 = vadd.f32 %v1984, %v2368
  %v2433 = vadd.f32 %v1985, %v2369
  %v2434 = vadd.f32 %v1986, %v2370
  %v2435 = vadd.f32 %v1987, %v2371
  %v2436 = vadd.f32 %v1988, %v2372
  %v2437 = vadd.f32 %v1989, %v2373
  %v2438 = vadd.f32 %v1990, %v2374
  %s2440 = sor.u32 256, 64
  %2441 = vbcast.lane.b32.xlu0 %v618, %s2440
  %v2442 = vpop.permute.xlu0 %2441
  %s2444 = sor.u32 256, 72
  %2445 = vbcast.lane.b32.xlu0 %v618, %s2444
  %v2446 = vpop.permute.xlu0 %2445
  %s2448 = sor.u32 256, 64
  %2449 = vbcast.lane.b32.xlu0 %v629, %s2448
  %v2450 = vpop.permute.xlu0 %2449
  %s2452 = sor.u32 256, 72
  %2453 = vbcast.lane.b32.xlu0 %v629, %s2452
  %v2454 = vpop.permute.xlu0 %2453
  %s2456 = sor.u32 256, 64
  %2457 = vbcast.lane.b32.xlu0 %v640, %s2456
  %v2458 = vpop.permute.xlu0 %2457
  %s2460 = sor.u32 256, 72
  %2461 = vbcast.lane.b32.xlu0 %v640, %s2460
  %v2462 = vpop.permute.xlu0 %2461
  %s2464 = sor.u32 256, 64
  %2465 = vbcast.lane.b32.xlu0 %v651, %s2464
  %v2466 = vpop.permute.xlu0 %2465
  %s2468 = sor.u32 256, 72
  %2469 = vbcast.lane.b32.xlu0 %v651, %s2468
  %v2470 = vpop.permute.xlu0 %2469
  %s2472 = sor.u32 256, 64
  %2473 = vbcast.lane.b32.xlu0 %v662, %s2472
  %v2474 = vpop.permute.xlu0 %2473
  %s2476 = sor.u32 256, 72
  %2477 = vbcast.lane.b32.xlu0 %v662, %s2476
  %v2478 = vpop.permute.xlu0 %2477
  %s2480 = sor.u32 256, 64
  %2481 = vbcast.lane.b32.xlu0 %v673, %s2480
  %v2482 = vpop.permute.xlu0 %2481
  %s2484 = sor.u32 256, 72
  %2485 = vbcast.lane.b32.xlu0 %v673, %s2484
  %v2486 = vpop.permute.xlu0 %2485
  %s2488 = sor.u32 256, 64
  %2489 = vbcast.lane.b32.xlu0 %v684, %s2488
  %v2490 = vpop.permute.xlu0 %2489
  %s2492 = sor.u32 256, 72
  %2493 = vbcast.lane.b32.xlu0 %v684, %s2492
  %v2494 = vpop.permute.xlu0 %2493
  %s2496 = sor.u32 256, 64
  %2497 = vbcast.lane.b32.xlu0 %v695, %s2496
  %v2498 = vpop.permute.xlu0 %2497
  %s2500 = sor.u32 256, 72
  %2501 = vbcast.lane.b32.xlu0 %v695, %s2500
  %v2502 = vpop.permute.xlu0 %2501
  %s2504 = sor.u32 256, 64
  %2505 = vbcast.lane.b32.xlu0 %v706, %s2504
  %v2506 = vpop.permute.xlu0 %2505
  %s2508 = sor.u32 256, 72
  %2509 = vbcast.lane.b32.xlu0 %v706, %s2508
  %v2510 = vpop.permute.xlu0 %2509
  %s2512 = sor.u32 256, 64
  %2513 = vbcast.lane.b32.xlu0 %v717, %s2512
  %v2514 = vpop.permute.xlu0 %2513
  %s2516 = sor.u32 256, 72
  %2517 = vbcast.lane.b32.xlu0 %v717, %s2516
  %v2518 = vpop.permute.xlu0 %2517
  %s2520 = sor.u32 256, 64
  %2521 = vbcast.lane.b32.xlu0 %v728, %s2520
  %v2522 = vpop.permute.xlu0 %2521
  %s2524 = sor.u32 256, 72
  %2525 = vbcast.lane.b32.xlu0 %v728, %s2524
  %v2526 = vpop.permute.xlu0 %2525
  %s2528 = sor.u32 256, 64
  %2529 = vbcast.lane.b32.xlu0 %v739, %s2528
  %v2530 = vpop.permute.xlu0 %2529
  %s2532 = sor.u32 256, 72
  %2533 = vbcast.lane.b32.xlu0 %v739, %s2532
  %v2534 = vpop.permute.xlu0 %2533
  %s2536 = sor.u32 256, 64
  %2537 = vbcast.lane.b32.xlu0 %v750, %s2536
  %v2538 = vpop.permute.xlu0 %2537
  %s2540 = sor.u32 256, 72
  %2541 = vbcast.lane.b32.xlu0 %v750, %s2540
  %v2542 = vpop.permute.xlu0 %2541
  %s2544 = sor.u32 256, 64
  %2545 = vbcast.lane.b32.xlu0 %v761, %s2544
  %v2546 = vpop.permute.xlu0 %2545
  %s2548 = sor.u32 256, 72
  %2549 = vbcast.lane.b32.xlu0 %v761, %s2548
  %v2550 = vpop.permute.xlu0 %2549
  %s2552 = sor.u32 256, 64
  %2553 = vbcast.lane.b32.xlu0 %v772, %s2552
  %v2554 = vpop.permute.xlu0 %2553
  %s2556 = sor.u32 256, 72
  %2557 = vbcast.lane.b32.xlu0 %v772, %s2556
  %v2558 = vpop.permute.xlu0 %2557
  %s2560 = sor.u32 256, 64
  %2561 = vbcast.lane.b32.xlu0 %v783, %s2560
  %v2562 = vpop.permute.xlu0 %2561
  %s2564 = sor.u32 256, 72
  %2565 = vbcast.lane.b32.xlu0 %v783, %s2564
  %v2566 = vpop.permute.xlu0 %2565
  %s2568 = sor.u32 256, 64
  %2569 = vbcast.lane.b32.xlu0 %v794, %s2568
  %v2570 = vpop.permute.xlu0 %2569
  %s2572 = sor.u32 256, 72
  %2573 = vbcast.lane.b32.xlu0 %v794, %s2572
  %v2574 = vpop.permute.xlu0 %2573
  %s2576 = sor.u32 256, 64
  %2577 = vbcast.lane.b32.xlu0 %v805, %s2576
  %v2578 = vpop.permute.xlu0 %2577
  %s2580 = sor.u32 256, 72
  %2581 = vbcast.lane.b32.xlu0 %v805, %s2580
  %v2582 = vpop.permute.xlu0 %2581
  %s2584 = sor.u32 256, 64
  %2585 = vbcast.lane.b32.xlu0 %v816, %s2584
  %v2586 = vpop.permute.xlu0 %2585
  %s2588 = sor.u32 256, 72
  %2589 = vbcast.lane.b32.xlu0 %v816, %s2588
  %v2590 = vpop.permute.xlu0 %2589
  %s2592 = sor.u32 256, 64
  %2593 = vbcast.lane.b32.xlu0 %v827, %s2592
  %v2594 = vpop.permute.xlu0 %2593
  %s2596 = sor.u32 256, 72
  %2597 = vbcast.lane.b32.xlu0 %v827, %s2596
  %v2598 = vpop.permute.xlu0 %2597
  %s2600 = sor.u32 256, 64
  %2601 = vbcast.lane.b32.xlu0 %v838, %s2600
  %v2602 = vpop.permute.xlu0 %2601
  %s2604 = sor.u32 256, 72
  %2605 = vbcast.lane.b32.xlu0 %v838, %s2604
  %v2606 = vpop.permute.xlu0 %2605
  %s2608 = sor.u32 256, 64
  %2609 = vbcast.lane.b32.xlu0 %v849, %s2608
  %v2610 = vpop.permute.xlu0 %2609
  %s2612 = sor.u32 256, 72
  %2613 = vbcast.lane.b32.xlu0 %v849, %s2612
  %v2614 = vpop.permute.xlu0 %2613
  %s2616 = sor.u32 256, 64
  %2617 = vbcast.lane.b32.xlu0 %v860, %s2616
  %v2618 = vpop.permute.xlu0 %2617
  %s2620 = sor.u32 256, 72
  %2621 = vbcast.lane.b32.xlu0 %v860, %s2620
  %v2622 = vpop.permute.xlu0 %2621
  %s2624 = sor.u32 256, 64
  %2625 = vbcast.lane.b32.xlu0 %v871, %s2624
  %v2626 = vpop.permute.xlu0 %2625
  %s2628 = sor.u32 256, 72
  %2629 = vbcast.lane.b32.xlu0 %v871, %s2628
  %v2630 = vpop.permute.xlu0 %2629
  %s2632 = sor.u32 256, 64
  %2633 = vbcast.lane.b32.xlu0 %v882, %s2632
  %v2634 = vpop.permute.xlu0 %2633
  %s2636 = sor.u32 256, 72
  %2637 = vbcast.lane.b32.xlu0 %v882, %s2636
  %v2638 = vpop.permute.xlu0 %2637
  %s2640 = sor.u32 256, 64
  %2641 = vbcast.lane.b32.xlu0 %v893, %s2640
  %v2642 = vpop.permute.xlu0 %2641
  %s2644 = sor.u32 256, 72
  %2645 = vbcast.lane.b32.xlu0 %v893, %s2644
  %v2646 = vpop.permute.xlu0 %2645
  %s2648 = sor.u32 256, 64
  %2649 = vbcast.lane.b32.xlu0 %v904, %s2648
  %v2650 = vpop.permute.xlu0 %2649
  %s2652 = sor.u32 256, 72
  %2653 = vbcast.lane.b32.xlu0 %v904, %s2652
  %v2654 = vpop.permute.xlu0 %2653
  %s2656 = sor.u32 256, 64
  %2657 = vbcast.lane.b32.xlu0 %v915, %s2656
  %v2658 = vpop.permute.xlu0 %2657
  %s2660 = sor.u32 256, 72
  %2661 = vbcast.lane.b32.xlu0 %v915, %s2660
  %v2662 = vpop.permute.xlu0 %2661
  %s2664 = sor.u32 256, 64
  %2665 = vbcast.lane.b32.xlu0 %v926, %s2664
  %v2666 = vpop.permute.xlu0 %2665
  %s2668 = sor.u32 256, 72
  %2669 = vbcast.lane.b32.xlu0 %v926, %s2668
  %v2670 = vpop.permute.xlu0 %2669
  %s2672 = sor.u32 256, 64
  %2673 = vbcast.lane.b32.xlu0 %v937, %s2672
  %v2674 = vpop.permute.xlu0 %2673
  %s2676 = sor.u32 256, 72
  %2677 = vbcast.lane.b32.xlu0 %v937, %s2676
  %v2678 = vpop.permute.xlu0 %2677
  %s2680 = sor.u32 256, 64
  %2681 = vbcast.lane.b32.xlu0 %v948, %s2680
  %v2682 = vpop.permute.xlu0 %2681
  %s2684 = sor.u32 256, 72
  %2685 = vbcast.lane.b32.xlu0 %v948, %s2684
  %v2686 = vpop.permute.xlu0 %2685
  %s2688 = sor.u32 256, 64
  %2689 = vbcast.lane.b32.xlu0 %v959, %s2688
  %v2690 = vpop.permute.xlu0 %2689
  %s2692 = sor.u32 256, 72
  %2693 = vbcast.lane.b32.xlu0 %v959, %s2692
  %v2694 = vpop.permute.xlu0 %2693
  %v2759 = vmul.f32 %v589, %v2442
  %v2760 = vmul.f32 %v592, %v2446
  %v2761 = vmul.f32 %v589, %v2450
  %v2762 = vmul.f32 %v592, %v2454
  %v2763 = vmul.f32 %v589, %v2458
  %v2764 = vmul.f32 %v592, %v2462
  %v2765 = vmul.f32 %v589, %v2466
  %v2766 = vmul.f32 %v592, %v2470
  %v2767 = vmul.f32 %v589, %v2474
  %v2768 = vmul.f32 %v592, %v2478
  %v2769 = vmul.f32 %v589, %v2482
  %v2770 = vmul.f32 %v592, %v2486
  %v2771 = vmul.f32 %v589, %v2490
  %v2772 = vmul.f32 %v592, %v2494
  %v2773 = vmul.f32 %v589, %v2498
  %v2774 = vmul.f32 %v592, %v2502
  %v2775 = vmul.f32 %v589, %v2506
  %v2776 = vmul.f32 %v592, %v2510
  %v2777 = vmul.f32 %v589, %v2514
  %v2778 = vmul.f32 %v592, %v2518
  %v2779 = vmul.f32 %v589, %v2522
  %v2780 = vmul.f32 %v592, %v2526
  %v2781 = vmul.f32 %v589, %v2530
  %v2782 = vmul.f32 %v592, %v2534
  %v2783 = vmul.f32 %v589, %v2538
  %v2784 = vmul.f32 %v592, %v2542
  %v2785 = vmul.f32 %v589, %v2546
  %v2786 = vmul.f32 %v592, %v2550
  %v2787 = vmul.f32 %v589, %v2554
  %v2788 = vmul.f32 %v592, %v2558
  %v2789 = vmul.f32 %v589, %v2562
  %v2790 = vmul.f32 %v592, %v2566
  %v2791 = vmul.f32 %v589, %v2570
  %v2792 = vmul.f32 %v592, %v2574
  %v2793 = vmul.f32 %v589, %v2578
  %v2794 = vmul.f32 %v592, %v2582
  %v2795 = vmul.f32 %v589, %v2586
  %v2796 = vmul.f32 %v592, %v2590
  %v2797 = vmul.f32 %v589, %v2594
  %v2798 = vmul.f32 %v592, %v2598
  %v2799 = vmul.f32 %v589, %v2602
  %v2800 = vmul.f32 %v592, %v2606
  %v2801 = vmul.f32 %v589, %v2610
  %v2802 = vmul.f32 %v592, %v2614
  %v2803 = vmul.f32 %v589, %v2618
  %v2804 = vmul.f32 %v592, %v2622
  %v2805 = vmul.f32 %v589, %v2626
  %v2806 = vmul.f32 %v592, %v2630
  %v2807 = vmul.f32 %v589, %v2634
  %v2808 = vmul.f32 %v592, %v2638
  %v2809 = vmul.f32 %v589, %v2642
  %v2810 = vmul.f32 %v592, %v2646
  %v2811 = vmul.f32 %v589, %v2650
  %v2812 = vmul.f32 %v592, %v2654
  %v2813 = vmul.f32 %v589, %v2658
  %v2814 = vmul.f32 %v592, %v2662
  %v2815 = vmul.f32 %v589, %v2666
  %v2816 = vmul.f32 %v592, %v2670
  %v2817 = vmul.f32 %v589, %v2674
  %v2818 = vmul.f32 %v592, %v2678
  %v2819 = vmul.f32 %v589, %v2682
  %v2820 = vmul.f32 %v592, %v2686
  %v2821 = vmul.f32 %v589, %v2690
  %v2822 = vmul.f32 %v592, %v2694
  %v2823 = vadd.f32 %v2375, %v2759
  %v2824 = vadd.f32 %v2376, %v2760
  %v2825 = vadd.f32 %v2377, %v2761
  %v2826 = vadd.f32 %v2378, %v2762
  %v2827 = vadd.f32 %v2379, %v2763
  %v2828 = vadd.f32 %v2380, %v2764
  %v2829 = vadd.f32 %v2381, %v2765
  %v2830 = vadd.f32 %v2382, %v2766
  %v2831 = vadd.f32 %v2383, %v2767
  %v2832 = vadd.f32 %v2384, %v2768
  %v2833 = vadd.f32 %v2385, %v2769
  %v2834 = vadd.f32 %v2386, %v2770
  %v2835 = vadd.f32 %v2387, %v2771
  %v2836 = vadd.f32 %v2388, %v2772
  %v2837 = vadd.f32 %v2389, %v2773
  %v2838 = vadd.f32 %v2390, %v2774
  %v2839 = vadd.f32 %v2391, %v2775
  %v2840 = vadd.f32 %v2392, %v2776
  %v2841 = vadd.f32 %v2393, %v2777
  %v2842 = vadd.f32 %v2394, %v2778
  %v2843 = vadd.f32 %v2395, %v2779
  %v2844 = vadd.f32 %v2396, %v2780
  %v2845 = vadd.f32 %v2397, %v2781
  %v2846 = vadd.f32 %v2398, %v2782
  %v2847 = vadd.f32 %v2399, %v2783
  %v2848 = vadd.f32 %v2400, %v2784
  %v2849 = vadd.f32 %v2401, %v2785
  %v2850 = vadd.f32 %v2402, %v2786
  %v2851 = vadd.f32 %v2403, %v2787
  %v2852 = vadd.f32 %v2404, %v2788
  %v2853 = vadd.f32 %v2405, %v2789
  %v2854 = vadd.f32 %v2406, %v2790
  %v2855 = vadd.f32 %v2407, %v2791
  %v2856 = vadd.f32 %v2408, %v2792
  %v2857 = vadd.f32 %v2409, %v2793
  %v2858 = vadd.f32 %v2410, %v2794
  %v2859 = vadd.f32 %v2411, %v2795
  %v2860 = vadd.f32 %v2412, %v2796
  %v2861 = vadd.f32 %v2413, %v2797
  %v2862 = vadd.f32 %v2414, %v2798
  %v2863 = vadd.f32 %v2415, %v2799
  %v2864 = vadd.f32 %v2416, %v2800
  %v2865 = vadd.f32 %v2417, %v2801
  %v2866 = vadd.f32 %v2418, %v2802
  %v2867 = vadd.f32 %v2419, %v2803
  %v2868 = vadd.f32 %v2420, %v2804
  %v2869 = vadd.f32 %v2421, %v2805
  %v2870 = vadd.f32 %v2422, %v2806
  %v2871 = vadd.f32 %v2423, %v2807
  %v2872 = vadd.f32 %v2424, %v2808
  %v2873 = vadd.f32 %v2425, %v2809
  %v2874 = vadd.f32 %v2426, %v2810
  %v2875 = vadd.f32 %v2427, %v2811
  %v2876 = vadd.f32 %v2428, %v2812
  %v2877 = vadd.f32 %v2429, %v2813
  %v2878 = vadd.f32 %v2430, %v2814
  %v2879 = vadd.f32 %v2431, %v2815
  %v2880 = vadd.f32 %v2432, %v2816
  %v2881 = vadd.f32 %v2433, %v2817
  %v2882 = vadd.f32 %v2434, %v2818
  %v2883 = vadd.f32 %v2435, %v2819
  %v2884 = vadd.f32 %v2436, %v2820
  %v2885 = vadd.f32 %v2437, %v2821
  %v2886 = vadd.f32 %v2438, %v2822
  %s2888 = sor.u32 256, 80
  %2889 = vbcast.lane.b32.xlu0 %v618, %s2888
  %v2890 = vpop.permute.xlu0 %2889
  %s2892 = sor.u32 256, 88
  %2893 = vbcast.lane.b32.xlu0 %v618, %s2892
  %v2894 = vpop.permute.xlu0 %2893
  %s2896 = sor.u32 256, 80
  %2897 = vbcast.lane.b32.xlu0 %v629, %s2896
  %v2898 = vpop.permute.xlu0 %2897
  %s2900 = sor.u32 256, 88
  %2901 = vbcast.lane.b32.xlu0 %v629, %s2900
  %v2902 = vpop.permute.xlu0 %2901
  %s2904 = sor.u32 256, 80
  %2905 = vbcast.lane.b32.xlu0 %v640, %s2904
  %v2906 = vpop.permute.xlu0 %2905
  %s2908 = sor.u32 256, 88
  %2909 = vbcast.lane.b32.xlu0 %v640, %s2908
  %v2910 = vpop.permute.xlu0 %2909
  %s2912 = sor.u32 256, 80
  %2913 = vbcast.lane.b32.xlu0 %v651, %s2912
  %v2914 = vpop.permute.xlu0 %2913
  %s2916 = sor.u32 256, 88
  %2917 = vbcast.lane.b32.xlu0 %v651, %s2916
  %v2918 = vpop.permute.xlu0 %2917
  %s2920 = sor.u32 256, 80
  %2921 = vbcast.lane.b32.xlu0 %v662, %s2920
  %v2922 = vpop.permute.xlu0 %2921
  %s2924 = sor.u32 256, 88
  %2925 = vbcast.lane.b32.xlu0 %v662, %s2924
  %v2926 = vpop.permute.xlu0 %2925
  %s2928 = sor.u32 256, 80
  %2929 = vbcast.lane.b32.xlu0 %v673, %s2928
  %v2930 = vpop.permute.xlu0 %2929
  %s2932 = sor.u32 256, 88
  %2933 = vbcast.lane.b32.xlu0 %v673, %s2932
  %v2934 = vpop.permute.xlu0 %2933
  %s2936 = sor.u32 256, 80
  %2937 = vbcast.lane.b32.xlu0 %v684, %s2936
  %v2938 = vpop.permute.xlu0 %2937
  %s2940 = sor.u32 256, 88
  %2941 = vbcast.lane.b32.xlu0 %v684, %s2940
  %v2942 = vpop.permute.xlu0 %2941
  %s2944 = sor.u32 256, 80
  %2945 = vbcast.lane.b32.xlu0 %v695, %s2944
  %v2946 = vpop.permute.xlu0 %2945
  %s2948 = sor.u32 256, 88
  %2949 = vbcast.lane.b32.xlu0 %v695, %s2948
  %v2950 = vpop.permute.xlu0 %2949
  %s2952 = sor.u32 256, 80
  %2953 = vbcast.lane.b32.xlu0 %v706, %s2952
  %v2954 = vpop.permute.xlu0 %2953
  %s2956 = sor.u32 256, 88
  %2957 = vbcast.lane.b32.xlu0 %v706, %s2956
  %v2958 = vpop.permute.xlu0 %2957
  %s2960 = sor.u32 256, 80
  %2961 = vbcast.lane.b32.xlu0 %v717, %s2960
  %v2962 = vpop.permute.xlu0 %2961
  %s2964 = sor.u32 256, 88
  %2965 = vbcast.lane.b32.xlu0 %v717, %s2964
  %v2966 = vpop.permute.xlu0 %2965
  %s2968 = sor.u32 256, 80
  %2969 = vbcast.lane.b32.xlu0 %v728, %s2968
  %v2970 = vpop.permute.xlu0 %2969
  %s2972 = sor.u32 256, 88
  %2973 = vbcast.lane.b32.xlu0 %v728, %s2972
  %v2974 = vpop.permute.xlu0 %2973
  %s2976 = sor.u32 256, 80
  %2977 = vbcast.lane.b32.xlu0 %v739, %s2976
  %v2978 = vpop.permute.xlu0 %2977
  %s2980 = sor.u32 256, 88
  %2981 = vbcast.lane.b32.xlu0 %v739, %s2980
  %v2982 = vpop.permute.xlu0 %2981
  %s2984 = sor.u32 256, 80
  %2985 = vbcast.lane.b32.xlu0 %v750, %s2984
  %v2986 = vpop.permute.xlu0 %2985
  %s2988 = sor.u32 256, 88
  %2989 = vbcast.lane.b32.xlu0 %v750, %s2988
  %v2990 = vpop.permute.xlu0 %2989
  %s2992 = sor.u32 256, 80
  %2993 = vbcast.lane.b32.xlu0 %v761, %s2992
  %v2994 = vpop.permute.xlu0 %2993
  %s2996 = sor.u32 256, 88
  %2997 = vbcast.lane.b32.xlu0 %v761, %s2996
  %v2998 = vpop.permute.xlu0 %2997
  %s3000 = sor.u32 256, 80
  %3001 = vbcast.lane.b32.xlu0 %v772, %s3000
  %v3002 = vpop.permute.xlu0 %3001
  %s3004 = sor.u32 256, 88
  %3005 = vbcast.lane.b32.xlu0 %v772, %s3004
  %v3006 = vpop.permute.xlu0 %3005
  %s3008 = sor.u32 256, 80
  %3009 = vbcast.lane.b32.xlu0 %v783, %s3008
  %v3010 = vpop.permute.xlu0 %3009
  %s3012 = sor.u32 256, 88
  %3013 = vbcast.lane.b32.xlu0 %v783, %s3012
  %v3014 = vpop.permute.xlu0 %3013
  %s3016 = sor.u32 256, 80
  %3017 = vbcast.lane.b32.xlu0 %v794, %s3016
  %v3018 = vpop.permute.xlu0 %3017
  %s3020 = sor.u32 256, 88
  %3021 = vbcast.lane.b32.xlu0 %v794, %s3020
  %v3022 = vpop.permute.xlu0 %3021
  %s3024 = sor.u32 256, 80
  %3025 = vbcast.lane.b32.xlu0 %v805, %s3024
  %v3026 = vpop.permute.xlu0 %3025
  %s3028 = sor.u32 256, 88
  %3029 = vbcast.lane.b32.xlu0 %v805, %s3028
  %v3030 = vpop.permute.xlu0 %3029
  %s3032 = sor.u32 256, 80
  %3033 = vbcast.lane.b32.xlu0 %v816, %s3032
  %v3034 = vpop.permute.xlu0 %3033
  %s3036 = sor.u32 256, 88
  %3037 = vbcast.lane.b32.xlu0 %v816, %s3036
  %v3038 = vpop.permute.xlu0 %3037
  %s3040 = sor.u32 256, 80
  %3041 = vbcast.lane.b32.xlu0 %v827, %s3040
  %v3042 = vpop.permute.xlu0 %3041
  %s3044 = sor.u32 256, 88
  %3045 = vbcast.lane.b32.xlu0 %v827, %s3044
  %v3046 = vpop.permute.xlu0 %3045
  %s3048 = sor.u32 256, 80
  %3049 = vbcast.lane.b32.xlu0 %v838, %s3048
  %v3050 = vpop.permute.xlu0 %3049
  %s3052 = sor.u32 256, 88
  %3053 = vbcast.lane.b32.xlu0 %v838, %s3052
  %v3054 = vpop.permute.xlu0 %3053
  %s3056 = sor.u32 256, 80
  %3057 = vbcast.lane.b32.xlu0 %v849, %s3056
  %v3058 = vpop.permute.xlu0 %3057
  %s3060 = sor.u32 256, 88
  %3061 = vbcast.lane.b32.xlu0 %v849, %s3060
  %v3062 = vpop.permute.xlu0 %3061
  %s3064 = sor.u32 256, 80
  %3065 = vbcast.lane.b32.xlu0 %v860, %s3064
  %v3066 = vpop.permute.xlu0 %3065
  %s3068 = sor.u32 256, 88
  %3069 = vbcast.lane.b32.xlu0 %v860, %s3068
  %v3070 = vpop.permute.xlu0 %3069
  %s3072 = sor.u32 256, 80
  %3073 = vbcast.lane.b32.xlu0 %v871, %s3072
  %v3074 = vpop.permute.xlu0 %3073
  %s3076 = sor.u32 256, 88
  %3077 = vbcast.lane.b32.xlu0 %v871, %s3076
  %v3078 = vpop.permute.xlu0 %3077
  %s3080 = sor.u32 256, 80
  %3081 = vbcast.lane.b32.xlu0 %v882, %s3080
  %v3082 = vpop.permute.xlu0 %3081
  %s3084 = sor.u32 256, 88
  %3085 = vbcast.lane.b32.xlu0 %v882, %s3084
  %v3086 = vpop.permute.xlu0 %3085
  %s3088 = sor.u32 256, 80
  %3089 = vbcast.lane.b32.xlu0 %v893, %s3088
  %v3090 = vpop.permute.xlu0 %3089
  %s3092 = sor.u32 256, 88
  %3093 = vbcast.lane.b32.xlu0 %v893, %s3092
  %v3094 = vpop.permute.xlu0 %3093
  %s3096 = sor.u32 256, 80
  %3097 = vbcast.lane.b32.xlu0 %v904, %s3096
  %v3098 = vpop.permute.xlu0 %3097
  %s3100 = sor.u32 256, 88
  %3101 = vbcast.lane.b32.xlu0 %v904, %s3100
  %v3102 = vpop.permute.xlu0 %3101
  %s3104 = sor.u32 256, 80
  %3105 = vbcast.lane.b32.xlu0 %v915, %s3104
  %v3106 = vpop.permute.xlu0 %3105
  %s3108 = sor.u32 256, 88
  %3109 = vbcast.lane.b32.xlu0 %v915, %s3108
  %v3110 = vpop.permute.xlu0 %3109
  %s3112 = sor.u32 256, 80
  %3113 = vbcast.lane.b32.xlu0 %v926, %s3112
  %v3114 = vpop.permute.xlu0 %3113
  %s3116 = sor.u32 256, 88
  %3117 = vbcast.lane.b32.xlu0 %v926, %s3116
  %v3118 = vpop.permute.xlu0 %3117
  %s3120 = sor.u32 256, 80
  %3121 = vbcast.lane.b32.xlu0 %v937, %s3120
  %v3122 = vpop.permute.xlu0 %3121
  %s3124 = sor.u32 256, 88
  %3125 = vbcast.lane.b32.xlu0 %v937, %s3124
  %v3126 = vpop.permute.xlu0 %3125
  %s3128 = sor.u32 256, 80
  %3129 = vbcast.lane.b32.xlu0 %v948, %s3128
  %v3130 = vpop.permute.xlu0 %3129
  %s3132 = sor.u32 256, 88
  %3133 = vbcast.lane.b32.xlu0 %v948, %s3132
  %v3134 = vpop.permute.xlu0 %3133
  %s3136 = sor.u32 256, 80
  %3137 = vbcast.lane.b32.xlu0 %v959, %s3136
  %v3138 = vpop.permute.xlu0 %3137
  %s3140 = sor.u32 256, 88
  %3141 = vbcast.lane.b32.xlu0 %v959, %s3140
  %v3142 = vpop.permute.xlu0 %3141
  %v3207 = vmul.f32 %v595, %v2890
  %v3208 = vmul.f32 %v598, %v2894
  %v3209 = vmul.f32 %v595, %v2898
  %v3210 = vmul.f32 %v598, %v2902
  %v3211 = vmul.f32 %v595, %v2906
  %v3212 = vmul.f32 %v598, %v2910
  %v3213 = vmul.f32 %v595, %v2914
  %v3214 = vmul.f32 %v598, %v2918
  %v3215 = vmul.f32 %v595, %v2922
  %v3216 = vmul.f32 %v598, %v2926
  %v3217 = vmul.f32 %v595, %v2930
  %v3218 = vmul.f32 %v598, %v2934
  %v3219 = vmul.f32 %v595, %v2938
  %v3220 = vmul.f32 %v598, %v2942
  %v3221 = vmul.f32 %v595, %v2946
  %v3222 = vmul.f32 %v598, %v2950
  %v3223 = vmul.f32 %v595, %v2954
  %v3224 = vmul.f32 %v598, %v2958
  %v3225 = vmul.f32 %v595, %v2962
  %v3226 = vmul.f32 %v598, %v2966
  %v3227 = vmul.f32 %v595, %v2970
  %v3228 = vmul.f32 %v598, %v2974
  %v3229 = vmul.f32 %v595, %v2978
  %v3230 = vmul.f32 %v598, %v2982
  %v3231 = vmul.f32 %v595, %v2986
  %v3232 = vmul.f32 %v598, %v2990
  %v3233 = vmul.f32 %v595, %v2994
  %v3234 = vmul.f32 %v598, %v2998
  %v3235 = vmul.f32 %v595, %v3002
  %v3236 = vmul.f32 %v598, %v3006
  %v3237 = vmul.f32 %v595, %v3010
  %v3238 = vmul.f32 %v598, %v3014
  %v3239 = vmul.f32 %v595, %v3018
  %v3240 = vmul.f32 %v598, %v3022
  %v3241 = vmul.f32 %v595, %v3026
  %v3242 = vmul.f32 %v598, %v3030
  %v3243 = vmul.f32 %v595, %v3034
  %v3244 = vmul.f32 %v598, %v3038
  %v3245 = vmul.f32 %v595, %v3042
  %v3246 = vmul.f32 %v598, %v3046
  %v3247 = vmul.f32 %v595, %v3050
  %v3248 = vmul.f32 %v598, %v3054
  %v3249 = vmul.f32 %v595, %v3058
  %v3250 = vmul.f32 %v598, %v3062
  %v3251 = vmul.f32 %v595, %v3066
  %v3252 = vmul.f32 %v598, %v3070
  %v3253 = vmul.f32 %v595, %v3074
  %v3254 = vmul.f32 %v598, %v3078
  %v3255 = vmul.f32 %v595, %v3082
  %v3256 = vmul.f32 %v598, %v3086
  %v3257 = vmul.f32 %v595, %v3090
  %v3258 = vmul.f32 %v598, %v3094
  %v3259 = vmul.f32 %v595, %v3098
  %v3260 = vmul.f32 %v598, %v3102
  %v3261 = vmul.f32 %v595, %v3106
  %v3262 = vmul.f32 %v598, %v3110
  %v3263 = vmul.f32 %v595, %v3114
  %v3264 = vmul.f32 %v598, %v3118
  %v3265 = vmul.f32 %v595, %v3122
  %v3266 = vmul.f32 %v598, %v3126
  %v3267 = vmul.f32 %v595, %v3130
  %v3268 = vmul.f32 %v598, %v3134
  %v3269 = vmul.f32 %v595, %v3138
  %v3270 = vmul.f32 %v598, %v3142
  %v3271 = vadd.f32 %v2823, %v3207
  %v3272 = vadd.f32 %v2824, %v3208
  %v3273 = vadd.f32 %v2825, %v3209
  %v3274 = vadd.f32 %v2826, %v3210
  %v3275 = vadd.f32 %v2827, %v3211
  %v3276 = vadd.f32 %v2828, %v3212
  %v3277 = vadd.f32 %v2829, %v3213
  %v3278 = vadd.f32 %v2830, %v3214
  %v3279 = vadd.f32 %v2831, %v3215
  %v3280 = vadd.f32 %v2832, %v3216
  %v3281 = vadd.f32 %v2833, %v3217
  %v3282 = vadd.f32 %v2834, %v3218
  %v3283 = vadd.f32 %v2835, %v3219
  %v3284 = vadd.f32 %v2836, %v3220
  %v3285 = vadd.f32 %v2837, %v3221
  %v3286 = vadd.f32 %v2838, %v3222
  %v3287 = vadd.f32 %v2839, %v3223
  %v3288 = vadd.f32 %v2840, %v3224
  %v3289 = vadd.f32 %v2841, %v3225
  %v3290 = vadd.f32 %v2842, %v3226
  %v3291 = vadd.f32 %v2843, %v3227
  %v3292 = vadd.f32 %v2844, %v3228
  %v3293 = vadd.f32 %v2845, %v3229
  %v3294 = vadd.f32 %v2846, %v3230
  %v3295 = vadd.f32 %v2847, %v3231
  %v3296 = vadd.f32 %v2848, %v3232
  %v3297 = vadd.f32 %v2849, %v3233
  %v3298 = vadd.f32 %v2850, %v3234
  %v3299 = vadd.f32 %v2851, %v3235
  %v3300 = vadd.f32 %v2852, %v3236
  %v3301 = vadd.f32 %v2853, %v3237
  %v3302 = vadd.f32 %v2854, %v3238
  %v3303 = vadd.f32 %v2855, %v3239
  %v3304 = vadd.f32 %v2856, %v3240
  %v3305 = vadd.f32 %v2857, %v3241
  %v3306 = vadd.f32 %v2858, %v3242
  %v3307 = vadd.f32 %v2859, %v3243
  %v3308 = vadd.f32 %v2860, %v3244
  %v3309 = vadd.f32 %v2861, %v3245
  %v3310 = vadd.f32 %v2862, %v3246
  %v3311 = vadd.f32 %v2863, %v3247
  %v3312 = vadd.f32 %v2864, %v3248
  %v3313 = vadd.f32 %v2865, %v3249
  %v3314 = vadd.f32 %v2866, %v3250
  %v3315 = vadd.f32 %v2867, %v3251
  %v3316 = vadd.f32 %v2868, %v3252
  %v3317 = vadd.f32 %v2869, %v3253
  %v3318 = vadd.f32 %v2870, %v3254
  %v3319 = vadd.f32 %v2871, %v3255
  %v3320 = vadd.f32 %v2872, %v3256
  %v3321 = vadd.f32 %v2873, %v3257
  %v3322 = vadd.f32 %v2874, %v3258
  %v3323 = vadd.f32 %v2875, %v3259
  %v3324 = vadd.f32 %v2876, %v3260
  %v3325 = vadd.f32 %v2877, %v3261
  %v3326 = vadd.f32 %v2878, %v3262
  %v3327 = vadd.f32 %v2879, %v3263
  %v3328 = vadd.f32 %v2880, %v3264
  %v3329 = vadd.f32 %v2881, %v3265
  %v3330 = vadd.f32 %v2882, %v3266
  %v3331 = vadd.f32 %v2883, %v3267
  %v3332 = vadd.f32 %v2884, %v3268
  %v3333 = vadd.f32 %v2885, %v3269
  %v3334 = vadd.f32 %v2886, %v3270
  %s3336 = sor.u32 256, 96
  %3337 = vbcast.lane.b32.xlu0 %v618, %s3336
  %v3338 = vpop.permute.xlu0 %3337
  %s3340 = sor.u32 256, 104
  %3341 = vbcast.lane.b32.xlu0 %v618, %s3340
  %v3342 = vpop.permute.xlu0 %3341
  %s3344 = sor.u32 256, 96
  %3345 = vbcast.lane.b32.xlu0 %v629, %s3344
  %v3346 = vpop.permute.xlu0 %3345
  %s3348 = sor.u32 256, 104
  %3349 = vbcast.lane.b32.xlu0 %v629, %s3348
  %v3350 = vpop.permute.xlu0 %3349
  %s3352 = sor.u32 256, 96
  %3353 = vbcast.lane.b32.xlu0 %v640, %s3352
  %v3354 = vpop.permute.xlu0 %3353
  %s3356 = sor.u32 256, 104
  %3357 = vbcast.lane.b32.xlu0 %v640, %s3356
  %v3358 = vpop.permute.xlu0 %3357
  %s3360 = sor.u32 256, 96
  %3361 = vbcast.lane.b32.xlu0 %v651, %s3360
  %v3362 = vpop.permute.xlu0 %3361
  %s3364 = sor.u32 256, 104
  %3365 = vbcast.lane.b32.xlu0 %v651, %s3364
  %v3366 = vpop.permute.xlu0 %3365
  %s3368 = sor.u32 256, 96
  %3369 = vbcast.lane.b32.xlu0 %v662, %s3368
  %v3370 = vpop.permute.xlu0 %3369
  %s3372 = sor.u32 256, 104
  %3373 = vbcast.lane.b32.xlu0 %v662, %s3372
  %v3374 = vpop.permute.xlu0 %3373
  %s3376 = sor.u32 256, 96
  %3377 = vbcast.lane.b32.xlu0 %v673, %s3376
  %v3378 = vpop.permute.xlu0 %3377
  %s3380 = sor.u32 256, 104
  %3381 = vbcast.lane.b32.xlu0 %v673, %s3380
  %v3382 = vpop.permute.xlu0 %3381
  %s3384 = sor.u32 256, 96
  %3385 = vbcast.lane.b32.xlu0 %v684, %s3384
  %v3386 = vpop.permute.xlu0 %3385
  %s3388 = sor.u32 256, 104
  %3389 = vbcast.lane.b32.xlu0 %v684, %s3388
  %v3390 = vpop.permute.xlu0 %3389
  %s3392 = sor.u32 256, 96
  %3393 = vbcast.lane.b32.xlu0 %v695, %s3392
  %v3394 = vpop.permute.xlu0 %3393
  %s3396 = sor.u32 256, 104
  %3397 = vbcast.lane.b32.xlu0 %v695, %s3396
  %v3398 = vpop.permute.xlu0 %3397
  %s3400 = sor.u32 256, 96
  %3401 = vbcast.lane.b32.xlu0 %v706, %s3400
  %v3402 = vpop.permute.xlu0 %3401
  %s3404 = sor.u32 256, 104
  %3405 = vbcast.lane.b32.xlu0 %v706, %s3404
  %v3406 = vpop.permute.xlu0 %3405
  %s3408 = sor.u32 256, 96
  %3409 = vbcast.lane.b32.xlu0 %v717, %s3408
  %v3410 = vpop.permute.xlu0 %3409
  %s3412 = sor.u32 256, 104
  %3413 = vbcast.lane.b32.xlu0 %v717, %s3412
  %v3414 = vpop.permute.xlu0 %3413
  %s3416 = sor.u32 256, 96
  %3417 = vbcast.lane.b32.xlu0 %v728, %s3416
  %v3418 = vpop.permute.xlu0 %3417
  %s3420 = sor.u32 256, 104
  %3421 = vbcast.lane.b32.xlu0 %v728, %s3420
  %v3422 = vpop.permute.xlu0 %3421
  %s3424 = sor.u32 256, 96
  %3425 = vbcast.lane.b32.xlu0 %v739, %s3424
  %v3426 = vpop.permute.xlu0 %3425
  %s3428 = sor.u32 256, 104
  %3429 = vbcast.lane.b32.xlu0 %v739, %s3428
  %v3430 = vpop.permute.xlu0 %3429
  %s3432 = sor.u32 256, 96
  %3433 = vbcast.lane.b32.xlu0 %v750, %s3432
  %v3434 = vpop.permute.xlu0 %3433
  %s3436 = sor.u32 256, 104
  %3437 = vbcast.lane.b32.xlu0 %v750, %s3436
  %v3438 = vpop.permute.xlu0 %3437
  %s3440 = sor.u32 256, 96
  %3441 = vbcast.lane.b32.xlu0 %v761, %s3440
  %v3442 = vpop.permute.xlu0 %3441
  %s3444 = sor.u32 256, 104
  %3445 = vbcast.lane.b32.xlu0 %v761, %s3444
  %v3446 = vpop.permute.xlu0 %3445
  %s3448 = sor.u32 256, 96
  %3449 = vbcast.lane.b32.xlu0 %v772, %s3448
  %v3450 = vpop.permute.xlu0 %3449
  %s3452 = sor.u32 256, 104
  %3453 = vbcast.lane.b32.xlu0 %v772, %s3452
  %v3454 = vpop.permute.xlu0 %3453
  %s3456 = sor.u32 256, 96
  %3457 = vbcast.lane.b32.xlu0 %v783, %s3456
  %v3458 = vpop.permute.xlu0 %3457
  %s3460 = sor.u32 256, 104
  %3461 = vbcast.lane.b32.xlu0 %v783, %s3460
  %v3462 = vpop.permute.xlu0 %3461
  %s3464 = sor.u32 256, 96
  %3465 = vbcast.lane.b32.xlu0 %v794, %s3464
  %v3466 = vpop.permute.xlu0 %3465
  %s3468 = sor.u32 256, 104
  %3469 = vbcast.lane.b32.xlu0 %v794, %s3468
  %v3470 = vpop.permute.xlu0 %3469
  %s3472 = sor.u32 256, 96
  %3473 = vbcast.lane.b32.xlu0 %v805, %s3472
  %v3474 = vpop.permute.xlu0 %3473
  %s3476 = sor.u32 256, 104
  %3477 = vbcast.lane.b32.xlu0 %v805, %s3476
  %v3478 = vpop.permute.xlu0 %3477
  %s3480 = sor.u32 256, 96
  %3481 = vbcast.lane.b32.xlu0 %v816, %s3480
  %v3482 = vpop.permute.xlu0 %3481
  %s3484 = sor.u32 256, 104
  %3485 = vbcast.lane.b32.xlu0 %v816, %s3484
  %v3486 = vpop.permute.xlu0 %3485
  %s3488 = sor.u32 256, 96
  %3489 = vbcast.lane.b32.xlu0 %v827, %s3488
  %v3490 = vpop.permute.xlu0 %3489
  %s3492 = sor.u32 256, 104
  %3493 = vbcast.lane.b32.xlu0 %v827, %s3492
  %v3494 = vpop.permute.xlu0 %3493
  %s3496 = sor.u32 256, 96
  %3497 = vbcast.lane.b32.xlu0 %v838, %s3496
  %v3498 = vpop.permute.xlu0 %3497
  %s3500 = sor.u32 256, 104
  %3501 = vbcast.lane.b32.xlu0 %v838, %s3500
  %v3502 = vpop.permute.xlu0 %3501
  %s3504 = sor.u32 256, 96
  %3505 = vbcast.lane.b32.xlu0 %v849, %s3504
  %v3506 = vpop.permute.xlu0 %3505
  %s3508 = sor.u32 256, 104
  %3509 = vbcast.lane.b32.xlu0 %v849, %s3508
  %v3510 = vpop.permute.xlu0 %3509
  %s3512 = sor.u32 256, 96
  %3513 = vbcast.lane.b32.xlu0 %v860, %s3512
  %v3514 = vpop.permute.xlu0 %3513
  %s3516 = sor.u32 256, 104
  %3517 = vbcast.lane.b32.xlu0 %v860, %s3516
  %v3518 = vpop.permute.xlu0 %3517
  %s3520 = sor.u32 256, 96
  %3521 = vbcast.lane.b32.xlu0 %v871, %s3520
  %v3522 = vpop.permute.xlu0 %3521
  %s3524 = sor.u32 256, 104
  %3525 = vbcast.lane.b32.xlu0 %v871, %s3524
  %v3526 = vpop.permute.xlu0 %3525
  %s3528 = sor.u32 256, 96
  %3529 = vbcast.lane.b32.xlu0 %v882, %s3528
  %v3530 = vpop.permute.xlu0 %3529
  %s3532 = sor.u32 256, 104
  %3533 = vbcast.lane.b32.xlu0 %v882, %s3532
  %v3534 = vpop.permute.xlu0 %3533
  %s3536 = sor.u32 256, 96
  %3537 = vbcast.lane.b32.xlu0 %v893, %s3536
  %v3538 = vpop.permute.xlu0 %3537
  %s3540 = sor.u32 256, 104
  %3541 = vbcast.lane.b32.xlu0 %v893, %s3540
  %v3542 = vpop.permute.xlu0 %3541
  %s3544 = sor.u32 256, 96
  %3545 = vbcast.lane.b32.xlu0 %v904, %s3544
  %v3546 = vpop.permute.xlu0 %3545
  %s3548 = sor.u32 256, 104
  %3549 = vbcast.lane.b32.xlu0 %v904, %s3548
  %v3550 = vpop.permute.xlu0 %3549
  %s3552 = sor.u32 256, 96
  %3553 = vbcast.lane.b32.xlu0 %v915, %s3552
  %v3554 = vpop.permute.xlu0 %3553
  %s3556 = sor.u32 256, 104
  %3557 = vbcast.lane.b32.xlu0 %v915, %s3556
  %v3558 = vpop.permute.xlu0 %3557
  %s3560 = sor.u32 256, 96
  %3561 = vbcast.lane.b32.xlu0 %v926, %s3560
  %v3562 = vpop.permute.xlu0 %3561
  %s3564 = sor.u32 256, 104
  %3565 = vbcast.lane.b32.xlu0 %v926, %s3564
  %v3566 = vpop.permute.xlu0 %3565
  %s3568 = sor.u32 256, 96
  %3569 = vbcast.lane.b32.xlu0 %v937, %s3568
  %v3570 = vpop.permute.xlu0 %3569
  %s3572 = sor.u32 256, 104
  %3573 = vbcast.lane.b32.xlu0 %v937, %s3572
  %v3574 = vpop.permute.xlu0 %3573
  %s3576 = sor.u32 256, 96
  %3577 = vbcast.lane.b32.xlu0 %v948, %s3576
  %v3578 = vpop.permute.xlu0 %3577
  %s3580 = sor.u32 256, 104
  %3581 = vbcast.lane.b32.xlu0 %v948, %s3580
  %v3582 = vpop.permute.xlu0 %3581
  %s3584 = sor.u32 256, 96
  %3585 = vbcast.lane.b32.xlu0 %v959, %s3584
  %v3586 = vpop.permute.xlu0 %3585
  %s3588 = sor.u32 256, 104
  %3589 = vbcast.lane.b32.xlu0 %v959, %s3588
  %v3590 = vpop.permute.xlu0 %3589
  %v3655 = vmul.f32 %v601, %v3338
  %v3656 = vmul.f32 %v604, %v3342
  %v3657 = vmul.f32 %v601, %v3346
  %v3658 = vmul.f32 %v604, %v3350
  %v3659 = vmul.f32 %v601, %v3354
  %v3660 = vmul.f32 %v604, %v3358
  %v3661 = vmul.f32 %v601, %v3362
  %v3662 = vmul.f32 %v604, %v3366
  %v3663 = vmul.f32 %v601, %v3370
  %v3664 = vmul.f32 %v604, %v3374
  %v3665 = vmul.f32 %v601, %v3378
  %v3666 = vmul.f32 %v604, %v3382
  %v3667 = vmul.f32 %v601, %v3386
  %v3668 = vmul.f32 %v604, %v3390
  %v3669 = vmul.f32 %v601, %v3394
  %v3670 = vmul.f32 %v604, %v3398
  %v3671 = vmul.f32 %v601, %v3402
  %v3672 = vmul.f32 %v604, %v3406
  %v3673 = vmul.f32 %v601, %v3410
  %v3674 = vmul.f32 %v604, %v3414
  %v3675 = vmul.f32 %v601, %v3418
  %v3676 = vmul.f32 %v604, %v3422
  %v3677 = vmul.f32 %v601, %v3426
  %v3678 = vmul.f32 %v604, %v3430
  %v3679 = vmul.f32 %v601, %v3434
  %v3680 = vmul.f32 %v604, %v3438
  %v3681 = vmul.f32 %v601, %v3442
  %v3682 = vmul.f32 %v604, %v3446
  %v3683 = vmul.f32 %v601, %v3450
  %v3684 = vmul.f32 %v604, %v3454
  %v3685 = vmul.f32 %v601, %v3458
  %v3686 = vmul.f32 %v604, %v3462
  %v3687 = vmul.f32 %v601, %v3466
  %v3688 = vmul.f32 %v604, %v3470
  %v3689 = vmul.f32 %v601, %v3474
  %v3690 = vmul.f32 %v604, %v3478
  %v3691 = vmul.f32 %v601, %v3482
  %v3692 = vmul.f32 %v604, %v3486
  %v3693 = vmul.f32 %v601, %v3490
  %v3694 = vmul.f32 %v604, %v3494
  %v3695 = vmul.f32 %v601, %v3498
  %v3696 = vmul.f32 %v604, %v3502
  %v3697 = vmul.f32 %v601, %v3506
  %v3698 = vmul.f32 %v604, %v3510
  %v3699 = vmul.f32 %v601, %v3514
  %v3700 = vmul.f32 %v604, %v3518
  %v3701 = vmul.f32 %v601, %v3522
  %v3702 = vmul.f32 %v604, %v3526
  %v3703 = vmul.f32 %v601, %v3530
  %v3704 = vmul.f32 %v604, %v3534
  %v3705 = vmul.f32 %v601, %v3538
  %v3706 = vmul.f32 %v604, %v3542
  %v3707 = vmul.f32 %v601, %v3546
  %v3708 = vmul.f32 %v604, %v3550
  %v3709 = vmul.f32 %v601, %v3554
  %v3710 = vmul.f32 %v604, %v3558
  %v3711 = vmul.f32 %v601, %v3562
  %v3712 = vmul.f32 %v604, %v3566
  %v3713 = vmul.f32 %v601, %v3570
  %v3714 = vmul.f32 %v604, %v3574
  %v3715 = vmul.f32 %v601, %v3578
  %v3716 = vmul.f32 %v604, %v3582
  %v3717 = vmul.f32 %v601, %v3586
  %v3718 = vmul.f32 %v604, %v3590
  %v3719 = vadd.f32 %v3271, %v3655
  %v3720 = vadd.f32 %v3272, %v3656
  %v3721 = vadd.f32 %v3273, %v3657
  %v3722 = vadd.f32 %v3274, %v3658
  %v3723 = vadd.f32 %v3275, %v3659
  %v3724 = vadd.f32 %v3276, %v3660
  %v3725 = vadd.f32 %v3277, %v3661
  %v3726 = vadd.f32 %v3278, %v3662
  %v3727 = vadd.f32 %v3279, %v3663
  %v3728 = vadd.f32 %v3280, %v3664
  %v3729 = vadd.f32 %v3281, %v3665
  %v3730 = vadd.f32 %v3282, %v3666
  %v3731 = vadd.f32 %v3283, %v3667
  %v3732 = vadd.f32 %v3284, %v3668
  %v3733 = vadd.f32 %v3285, %v3669
  %v3734 = vadd.f32 %v3286, %v3670
  %v3735 = vadd.f32 %v3287, %v3671
  %v3736 = vadd.f32 %v3288, %v3672
  %v3737 = vadd.f32 %v3289, %v3673
  %v3738 = vadd.f32 %v3290, %v3674
  %v3739 = vadd.f32 %v3291, %v3675
  %v3740 = vadd.f32 %v3292, %v3676
  %v3741 = vadd.f32 %v3293, %v3677
  %v3742 = vadd.f32 %v3294, %v3678
  %v3743 = vadd.f32 %v3295, %v3679
  %v3744 = vadd.f32 %v3296, %v3680
  %v3745 = vadd.f32 %v3297, %v3681
  %v3746 = vadd.f32 %v3298, %v3682
  %v3747 = vadd.f32 %v3299, %v3683
  %v3748 = vadd.f32 %v3300, %v3684
  %v3749 = vadd.f32 %v3301, %v3685
  %v3750 = vadd.f32 %v3302, %v3686
  %v3751 = vadd.f32 %v3303, %v3687
  %v3752 = vadd.f32 %v3304, %v3688
  %v3753 = vadd.f32 %v3305, %v3689
  %v3754 = vadd.f32 %v3306, %v3690
  %v3755 = vadd.f32 %v3307, %v3691
  %v3756 = vadd.f32 %v3308, %v3692
  %v3757 = vadd.f32 %v3309, %v3693
  %v3758 = vadd.f32 %v3310, %v3694
  %v3759 = vadd.f32 %v3311, %v3695
  %v3760 = vadd.f32 %v3312, %v3696
  %v3761 = vadd.f32 %v3313, %v3697
  %v3762 = vadd.f32 %v3314, %v3698
  %v3763 = vadd.f32 %v3315, %v3699
  %v3764 = vadd.f32 %v3316, %v3700
  %v3765 = vadd.f32 %v3317, %v3701
  %v3766 = vadd.f32 %v3318, %v3702
  %v3767 = vadd.f32 %v3319, %v3703
  %v3768 = vadd.f32 %v3320, %v3704
  %v3769 = vadd.f32 %v3321, %v3705
  %v3770 = vadd.f32 %v3322, %v3706
  %v3771 = vadd.f32 %v3323, %v3707
  %v3772 = vadd.f32 %v3324, %v3708
  %v3773 = vadd.f32 %v3325, %v3709
  %v3774 = vadd.f32 %v3326, %v3710
  %v3775 = vadd.f32 %v3327, %v3711
  %v3776 = vadd.f32 %v3328, %v3712
  %v3777 = vadd.f32 %v3329, %v3713
  %v3778 = vadd.f32 %v3330, %v3714
  %v3779 = vadd.f32 %v3331, %v3715
  %v3780 = vadd.f32 %v3332, %v3716
  %v3781 = vadd.f32 %v3333, %v3717
  %v3782 = vadd.f32 %v3334, %v3718
  %s3784 = sor.u32 256, 112
  %3785 = vbcast.lane.b32.xlu0 %v618, %s3784
  %v3786 = vpop.permute.xlu0 %3785
  %s3788 = sor.u32 256, 120
  %3789 = vbcast.lane.b32.xlu0 %v618, %s3788
  %v3790 = vpop.permute.xlu0 %3789
  %s3792 = sor.u32 256, 112
  %3793 = vbcast.lane.b32.xlu0 %v629, %s3792
  %v3794 = vpop.permute.xlu0 %3793
  %s3796 = sor.u32 256, 120
  %3797 = vbcast.lane.b32.xlu0 %v629, %s3796
  %v3798 = vpop.permute.xlu0 %3797
  %s3800 = sor.u32 256, 112
  %3801 = vbcast.lane.b32.xlu0 %v640, %s3800
  %v3802 = vpop.permute.xlu0 %3801
  %s3804 = sor.u32 256, 120
  %3805 = vbcast.lane.b32.xlu0 %v640, %s3804
  %v3806 = vpop.permute.xlu0 %3805
  %s3808 = sor.u32 256, 112
  %3809 = vbcast.lane.b32.xlu0 %v651, %s3808
  %v3810 = vpop.permute.xlu0 %3809
  %s3812 = sor.u32 256, 120
  %3813 = vbcast.lane.b32.xlu0 %v651, %s3812
  %v3814 = vpop.permute.xlu0 %3813
  %s3816 = sor.u32 256, 112
  %3817 = vbcast.lane.b32.xlu0 %v662, %s3816
  %v3818 = vpop.permute.xlu0 %3817
  %s3820 = sor.u32 256, 120
  %3821 = vbcast.lane.b32.xlu0 %v662, %s3820
  %v3822 = vpop.permute.xlu0 %3821
  %s3824 = sor.u32 256, 112
  %3825 = vbcast.lane.b32.xlu0 %v673, %s3824
  %v3826 = vpop.permute.xlu0 %3825
  %s3828 = sor.u32 256, 120
  %3829 = vbcast.lane.b32.xlu0 %v673, %s3828
  %v3830 = vpop.permute.xlu0 %3829
  %s3832 = sor.u32 256, 112
  %3833 = vbcast.lane.b32.xlu0 %v684, %s3832
  %v3834 = vpop.permute.xlu0 %3833
  %s3836 = sor.u32 256, 120
  %3837 = vbcast.lane.b32.xlu0 %v684, %s3836
  %v3838 = vpop.permute.xlu0 %3837
  %s3840 = sor.u32 256, 112
  %3841 = vbcast.lane.b32.xlu0 %v695, %s3840
  %v3842 = vpop.permute.xlu0 %3841
  %s3844 = sor.u32 256, 120
  %3845 = vbcast.lane.b32.xlu0 %v695, %s3844
  %v3846 = vpop.permute.xlu0 %3845
  %s3848 = sor.u32 256, 112
  %3849 = vbcast.lane.b32.xlu0 %v706, %s3848
  %v3850 = vpop.permute.xlu0 %3849
  %s3852 = sor.u32 256, 120
  %3853 = vbcast.lane.b32.xlu0 %v706, %s3852
  %v3854 = vpop.permute.xlu0 %3853
  %s3856 = sor.u32 256, 112
  %3857 = vbcast.lane.b32.xlu0 %v717, %s3856
  %v3858 = vpop.permute.xlu0 %3857
  %s3860 = sor.u32 256, 120
  %3861 = vbcast.lane.b32.xlu0 %v717, %s3860
  %v3862 = vpop.permute.xlu0 %3861
  %s3864 = sor.u32 256, 112
  %3865 = vbcast.lane.b32.xlu0 %v728, %s3864
  %v3866 = vpop.permute.xlu0 %3865
  %s3868 = sor.u32 256, 120
  %3869 = vbcast.lane.b32.xlu0 %v728, %s3868
  %v3870 = vpop.permute.xlu0 %3869
  %s3872 = sor.u32 256, 112
  %3873 = vbcast.lane.b32.xlu0 %v739, %s3872
  %v3874 = vpop.permute.xlu0 %3873
  %s3876 = sor.u32 256, 120
  %3877 = vbcast.lane.b32.xlu0 %v739, %s3876
  %v3878 = vpop.permute.xlu0 %3877
  %s3880 = sor.u32 256, 112
  %3881 = vbcast.lane.b32.xlu0 %v750, %s3880
  %v3882 = vpop.permute.xlu0 %3881
  %s3884 = sor.u32 256, 120
  %3885 = vbcast.lane.b32.xlu0 %v750, %s3884
  %v3886 = vpop.permute.xlu0 %3885
  %s3888 = sor.u32 256, 112
  %3889 = vbcast.lane.b32.xlu0 %v761, %s3888
  %v3890 = vpop.permute.xlu0 %3889
  %s3892 = sor.u32 256, 120
  %3893 = vbcast.lane.b32.xlu0 %v761, %s3892
  %v3894 = vpop.permute.xlu0 %3893
  %s3896 = sor.u32 256, 112
  %3897 = vbcast.lane.b32.xlu0 %v772, %s3896
  %v3898 = vpop.permute.xlu0 %3897
  %s3900 = sor.u32 256, 120
  %3901 = vbcast.lane.b32.xlu0 %v772, %s3900
  %v3902 = vpop.permute.xlu0 %3901
  %s3904 = sor.u32 256, 112
  %3905 = vbcast.lane.b32.xlu0 %v783, %s3904
  %v3906 = vpop.permute.xlu0 %3905
  %s3908 = sor.u32 256, 120
  %3909 = vbcast.lane.b32.xlu0 %v783, %s3908
  %v3910 = vpop.permute.xlu0 %3909
  %s3912 = sor.u32 256, 112
  %3913 = vbcast.lane.b32.xlu0 %v794, %s3912
  %v3914 = vpop.permute.xlu0 %3913
  %s3916 = sor.u32 256, 120
  %3917 = vbcast.lane.b32.xlu0 %v794, %s3916
  %v3918 = vpop.permute.xlu0 %3917
  %s3920 = sor.u32 256, 112
  %3921 = vbcast.lane.b32.xlu0 %v805, %s3920
  %v3922 = vpop.permute.xlu0 %3921
  %s3924 = sor.u32 256, 120
  %3925 = vbcast.lane.b32.xlu0 %v805, %s3924
  %v3926 = vpop.permute.xlu0 %3925
  %s3928 = sor.u32 256, 112
  %3929 = vbcast.lane.b32.xlu0 %v816, %s3928
  %v3930 = vpop.permute.xlu0 %3929
  %s3932 = sor.u32 256, 120
  %3933 = vbcast.lane.b32.xlu0 %v816, %s3932
  %v3934 = vpop.permute.xlu0 %3933
  %s3936 = sor.u32 256, 112
  %3937 = vbcast.lane.b32.xlu0 %v827, %s3936
  %v3938 = vpop.permute.xlu0 %3937
  %s3940 = sor.u32 256, 120
  %3941 = vbcast.lane.b32.xlu0 %v827, %s3940
  %v3942 = vpop.permute.xlu0 %3941
  %s3944 = sor.u32 256, 112
  %3945 = vbcast.lane.b32.xlu0 %v838, %s3944
  %v3946 = vpop.permute.xlu0 %3945
  %s3948 = sor.u32 256, 120
  %3949 = vbcast.lane.b32.xlu0 %v838, %s3948
  %v3950 = vpop.permute.xlu0 %3949
  %s3952 = sor.u32 256, 112
  %3953 = vbcast.lane.b32.xlu0 %v849, %s3952
  %v3954 = vpop.permute.xlu0 %3953
  %s3956 = sor.u32 256, 120
  %3957 = vbcast.lane.b32.xlu0 %v849, %s3956
  %v3958 = vpop.permute.xlu0 %3957
  %s3960 = sor.u32 256, 112
  %3961 = vbcast.lane.b32.xlu0 %v860, %s3960
  %v3962 = vpop.permute.xlu0 %3961
  %s3964 = sor.u32 256, 120
  %3965 = vbcast.lane.b32.xlu0 %v860, %s3964
  %v3966 = vpop.permute.xlu0 %3965
  %s3968 = sor.u32 256, 112
  %3969 = vbcast.lane.b32.xlu0 %v871, %s3968
  %v3970 = vpop.permute.xlu0 %3969
  %s3972 = sor.u32 256, 120
  %3973 = vbcast.lane.b32.xlu0 %v871, %s3972
  %v3974 = vpop.permute.xlu0 %3973
  %s3976 = sor.u32 256, 112
  %3977 = vbcast.lane.b32.xlu0 %v882, %s3976
  %v3978 = vpop.permute.xlu0 %3977
  %s3980 = sor.u32 256, 120
  %3981 = vbcast.lane.b32.xlu0 %v882, %s3980
  %v3982 = vpop.permute.xlu0 %3981
  %s3984 = sor.u32 256, 112
  %3985 = vbcast.lane.b32.xlu0 %v893, %s3984
  %v3986 = vpop.permute.xlu0 %3985
  %s3988 = sor.u32 256, 120
  %3989 = vbcast.lane.b32.xlu0 %v893, %s3988
  %v3990 = vpop.permute.xlu0 %3989
  %s3992 = sor.u32 256, 112
  %3993 = vbcast.lane.b32.xlu0 %v904, %s3992
  %v3994 = vpop.permute.xlu0 %3993
  %s3996 = sor.u32 256, 120
  %3997 = vbcast.lane.b32.xlu0 %v904, %s3996
  %v3998 = vpop.permute.xlu0 %3997
  %s4000 = sor.u32 256, 112
  %4001 = vbcast.lane.b32.xlu0 %v915, %s4000
  %v4002 = vpop.permute.xlu0 %4001
  %s4004 = sor.u32 256, 120
  %4005 = vbcast.lane.b32.xlu0 %v915, %s4004
  %v4006 = vpop.permute.xlu0 %4005
  %s4008 = sor.u32 256, 112
  %4009 = vbcast.lane.b32.xlu0 %v926, %s4008
  %v4010 = vpop.permute.xlu0 %4009
  %s4012 = sor.u32 256, 120
  %4013 = vbcast.lane.b32.xlu0 %v926, %s4012
  %v4014 = vpop.permute.xlu0 %4013
  %s4016 = sor.u32 256, 112
  %4017 = vbcast.lane.b32.xlu0 %v937, %s4016
  %v4018 = vpop.permute.xlu0 %4017
  %s4020 = sor.u32 256, 120
  %4021 = vbcast.lane.b32.xlu0 %v937, %s4020
  %v4022 = vpop.permute.xlu0 %4021
  %s4024 = sor.u32 256, 112
  %4025 = vbcast.lane.b32.xlu0 %v948, %s4024
  %v4026 = vpop.permute.xlu0 %4025
  %s4028 = sor.u32 256, 120
  %4029 = vbcast.lane.b32.xlu0 %v948, %s4028
  %v4030 = vpop.permute.xlu0 %4029
  %s4032 = sor.u32 256, 112
  %4033 = vbcast.lane.b32.xlu0 %v959, %s4032
  %v4034 = vpop.permute.xlu0 %4033
  %s4036 = sor.u32 256, 120
  %4037 = vbcast.lane.b32.xlu0 %v959, %s4036
  %v4038 = vpop.permute.xlu0 %4037
  %v4103 = vmul.f32 %v607, %v3786
  %v4104 = vmul.f32 %v610, %v3790
  %v4105 = vmul.f32 %v607, %v3794
  %v4106 = vmul.f32 %v610, %v3798
  %v4107 = vmul.f32 %v607, %v3802
  %v4108 = vmul.f32 %v610, %v3806
  %v4109 = vmul.f32 %v607, %v3810
  %v4110 = vmul.f32 %v610, %v3814
  %v4111 = vmul.f32 %v607, %v3818
  %v4112 = vmul.f32 %v610, %v3822
  %v4113 = vmul.f32 %v607, %v3826
  %v4114 = vmul.f32 %v610, %v3830
  %v4115 = vmul.f32 %v607, %v3834
  %v4116 = vmul.f32 %v610, %v3838
  %v4117 = vmul.f32 %v607, %v3842
  %v4118 = vmul.f32 %v610, %v3846
  %v4119 = vmul.f32 %v607, %v3850
  %v4120 = vmul.f32 %v610, %v3854
  %v4121 = vmul.f32 %v607, %v3858
  %v4122 = vmul.f32 %v610, %v3862
  %v4123 = vmul.f32 %v607, %v3866
  %v4124 = vmul.f32 %v610, %v3870
  %v4125 = vmul.f32 %v607, %v3874
  %v4126 = vmul.f32 %v610, %v3878
  %v4127 = vmul.f32 %v607, %v3882
  %v4128 = vmul.f32 %v610, %v3886
  %v4129 = vmul.f32 %v607, %v3890
  %v4130 = vmul.f32 %v610, %v3894
  %v4131 = vmul.f32 %v607, %v3898
  %v4132 = vmul.f32 %v610, %v3902
  %v4133 = vmul.f32 %v607, %v3906
  %v4134 = vmul.f32 %v610, %v3910
  %v4135 = vmul.f32 %v607, %v3914
  %v4136 = vmul.f32 %v610, %v3918
  %v4137 = vmul.f32 %v607, %v3922
  %v4138 = vmul.f32 %v610, %v3926
  %v4139 = vmul.f32 %v607, %v3930
  %v4140 = vmul.f32 %v610, %v3934
  %v4141 = vmul.f32 %v607, %v3938
  %v4142 = vmul.f32 %v610, %v3942
  %v4143 = vmul.f32 %v607, %v3946
  %v4144 = vmul.f32 %v610, %v3950
  %v4145 = vmul.f32 %v607, %v3954
  %v4146 = vmul.f32 %v610, %v3958
  %v4147 = vmul.f32 %v607, %v3962
  %v4148 = vmul.f32 %v610, %v3966
  %v4149 = vmul.f32 %v607, %v3970
  %v4150 = vmul.f32 %v610, %v3974
  %v4151 = vmul.f32 %v607, %v3978
  %v4152 = vmul.f32 %v610, %v3982
  %v4153 = vmul.f32 %v607, %v3986
  %v4154 = vmul.f32 %v610, %v3990
  %v4155 = vmul.f32 %v607, %v3994
  %v4156 = vmul.f32 %v610, %v3998
  %v4157 = vmul.f32 %v607, %v4002
  %v4158 = vmul.f32 %v610, %v4006
  %v4159 = vmul.f32 %v607, %v4010
  %v4160 = vmul.f32 %v610, %v4014
  %v4161 = vmul.f32 %v607, %v4018
  %v4162 = vmul.f32 %v610, %v4022
  %v4163 = vmul.f32 %v607, %v4026
  %v4164 = vmul.f32 %v610, %v4030
  %v4165 = vmul.f32 %v607, %v4034
  %v4166 = vmul.f32 %v610, %v4038
  %v4167 = vadd.f32 %v3719, %v4103
  %v4168 = vadd.f32 %v3720, %v4104
  %v4169 = vadd.f32 %v3721, %v4105
  %v4170 = vadd.f32 %v3722, %v4106
  %v4171 = vadd.f32 %v3723, %v4107
  %v4172 = vadd.f32 %v3724, %v4108
  %v4173 = vadd.f32 %v3725, %v4109
  %v4174 = vadd.f32 %v3726, %v4110
  %v4175 = vadd.f32 %v3727, %v4111
  %v4176 = vadd.f32 %v3728, %v4112
  %v4177 = vadd.f32 %v3729, %v4113
  %v4178 = vadd.f32 %v3730, %v4114
  %v4179 = vadd.f32 %v3731, %v4115
  %v4180 = vadd.f32 %v3732, %v4116
  %v4181 = vadd.f32 %v3733, %v4117
  %v4182 = vadd.f32 %v3734, %v4118
  %v4183 = vadd.f32 %v3735, %v4119
  %v4184 = vadd.f32 %v3736, %v4120
  %v4185 = vadd.f32 %v3737, %v4121
  %v4186 = vadd.f32 %v3738, %v4122
  %v4187 = vadd.f32 %v3739, %v4123
  %v4188 = vadd.f32 %v3740, %v4124
  %v4189 = vadd.f32 %v3741, %v4125
  %v4190 = vadd.f32 %v3742, %v4126
  %v4191 = vadd.f32 %v3743, %v4127
  %v4192 = vadd.f32 %v3744, %v4128
  %v4193 = vadd.f32 %v3745, %v4129
  %v4194 = vadd.f32 %v3746, %v4130
  %v4195 = vadd.f32 %v3747, %v4131
  %v4196 = vadd.f32 %v3748, %v4132
  %v4197 = vadd.f32 %v3749, %v4133
  %v4198 = vadd.f32 %v3750, %v4134
  %v4199 = vadd.f32 %v3751, %v4135
  %v4200 = vadd.f32 %v3752, %v4136
  %v4201 = vadd.f32 %v3753, %v4137
  %v4202 = vadd.f32 %v3754, %v4138
  %v4203 = vadd.f32 %v3755, %v4139
  %v4204 = vadd.f32 %v3756, %v4140
  %v4205 = vadd.f32 %v3757, %v4141
  %v4206 = vadd.f32 %v3758, %v4142
  %v4207 = vadd.f32 %v3759, %v4143
  %v4208 = vadd.f32 %v3760, %v4144
  %v4209 = vadd.f32 %v3761, %v4145
  %v4210 = vadd.f32 %v3762, %v4146
  %v4211 = vadd.f32 %v3763, %v4147
  %v4212 = vadd.f32 %v3764, %v4148
  %v4213 = vadd.f32 %v3765, %v4149
  %v4214 = vadd.f32 %v3766, %v4150
  %v4215 = vadd.f32 %v3767, %v4151
  %v4216 = vadd.f32 %v3768, %v4152
  %v4217 = vadd.f32 %v3769, %v4153
  %v4218 = vadd.f32 %v3770, %v4154
  %v4219 = vadd.f32 %v3771, %v4155
  %v4220 = vadd.f32 %v3772, %v4156
  %v4221 = vadd.f32 %v3773, %v4157
  %v4222 = vadd.f32 %v3774, %v4158
  %v4223 = vadd.f32 %v3775, %v4159
  %v4224 = vadd.f32 %v3776, %v4160
  %v4225 = vadd.f32 %v3777, %v4161
  %v4226 = vadd.f32 %v3778, %v4162
  %v4227 = vadd.f32 %v3779, %v4163
  %v4228 = vadd.f32 %v3780, %v4164
  %v4229 = vadd.f32 %v3781, %v4165
  %v4230 = vadd.f32 %v3782, %v4166
  %v4231 = vmul.f32 %v4167, 0.5
  %v4232 = vmul.f32 %v4168, 0.5
  %v4233 = vmul.f32 %v4169, 0.5
  %v4234 = vmul.f32 %v4170, 0.5
  %v4235 = vmul.f32 %v4171, 0.5
  %v4236 = vmul.f32 %v4172, 0.5
  %v4237 = vmul.f32 %v4173, 0.5
  %v4238 = vmul.f32 %v4174, 0.5
  %v4239 = vmul.f32 %v4175, 0.5
  %v4240 = vmul.f32 %v4176, 0.5
  %v4241 = vmul.f32 %v4177, 0.5
  %v4242 = vmul.f32 %v4178, 0.5
  %v4243 = vmul.f32 %v4179, 0.5
  %v4244 = vmul.f32 %v4180, 0.5
  %v4245 = vmul.f32 %v4181, 0.5
  %v4246 = vmul.f32 %v4182, 0.5
  %v4247 = vmul.f32 %v4183, 0.5
  %v4248 = vmul.f32 %v4184, 0.5
  %v4249 = vmul.f32 %v4185, 0.5
  %v4250 = vmul.f32 %v4186, 0.5
  %v4251 = vmul.f32 %v4187, 0.5
  %v4252 = vmul.f32 %v4188, 0.5
  %v4253 = vmul.f32 %v4189, 0.5
  %v4254 = vmul.f32 %v4190, 0.5
  %v4255 = vmul.f32 %v4191, 0.5
  %v4256 = vmul.f32 %v4192, 0.5
  %v4257 = vmul.f32 %v4193, 0.5
  %v4258 = vmul.f32 %v4194, 0.5
  %v4259 = vmul.f32 %v4195, 0.5
  %v4260 = vmul.f32 %v4196, 0.5
  %v4261 = vmul.f32 %v4197, 0.5
  %v4262 = vmul.f32 %v4198, 0.5
  %v4263 = vmul.f32 %v4199, 0.5
  %v4264 = vmul.f32 %v4200, 0.5
  %v4265 = vmul.f32 %v4201, 0.5
  %v4266 = vmul.f32 %v4202, 0.5
  %v4267 = vmul.f32 %v4203, 0.5
  %v4268 = vmul.f32 %v4204, 0.5
  %v4269 = vmul.f32 %v4205, 0.5
  %v4270 = vmul.f32 %v4206, 0.5
  %v4271 = vmul.f32 %v4207, 0.5
  %v4272 = vmul.f32 %v4208, 0.5
  %v4273 = vmul.f32 %v4209, 0.5
  %v4274 = vmul.f32 %v4210, 0.5
  %v4275 = vmul.f32 %v4211, 0.5
  %v4276 = vmul.f32 %v4212, 0.5
  %v4277 = vmul.f32 %v4213, 0.5
  %v4278 = vmul.f32 %v4214, 0.5
  %v4279 = vmul.f32 %v4215, 0.5
  %v4280 = vmul.f32 %v4216, 0.5
  %v4281 = vmul.f32 %v4217, 0.5
  %v4282 = vmul.f32 %v4218, 0.5
  %v4283 = vmul.f32 %v4219, 0.5
  %v4284 = vmul.f32 %v4220, 0.5
  %v4285 = vmul.f32 %v4221, 0.5
  %v4286 = vmul.f32 %v4222, 0.5
  %v4287 = vmul.f32 %v4223, 0.5
  %v4288 = vmul.f32 %v4224, 0.5
  %v4289 = vmul.f32 %v4225, 0.5
  %v4290 = vmul.f32 %v4226, 0.5
  %v4291 = vmul.f32 %v4227, 0.5
  %v4292 = vmul.f32 %v4228, 0.5
  %v4293 = vmul.f32 %v4229, 0.5
  %v4294 = vmul.f32 %v4230, 0.5
  %v4295 = vmax.f32 %v4231, 0.0
  %v4296 = vmax.f32 %v4232, 0.0
  %v4297 = vmax.f32 %v4233, 0.0
  %v4298 = vmax.f32 %v4234, 0.0
  %v4299 = vmax.f32 %v4235, 0.0
  %v4300 = vmax.f32 %v4236, 0.0
  %v4301 = vmax.f32 %v4237, 0.0
  %v4302 = vmax.f32 %v4238, 0.0
  %v4303 = vmax.f32 %v4239, 0.0
  %v4304 = vmax.f32 %v4240, 0.0
  %v4305 = vmax.f32 %v4241, 0.0
  %v4306 = vmax.f32 %v4242, 0.0
  %v4307 = vmax.f32 %v4243, 0.0
  %v4308 = vmax.f32 %v4244, 0.0
  %v4309 = vmax.f32 %v4245, 0.0
  %v4310 = vmax.f32 %v4246, 0.0
  %v4311 = vmax.f32 %v4247, 0.0
  %v4312 = vmax.f32 %v4248, 0.0
  %v4313 = vmax.f32 %v4249, 0.0
  %v4314 = vmax.f32 %v4250, 0.0
  %v4315 = vmax.f32 %v4251, 0.0
  %v4316 = vmax.f32 %v4252, 0.0
  %v4317 = vmax.f32 %v4253, 0.0
  %v4318 = vmax.f32 %v4254, 0.0
  %v4319 = vmax.f32 %v4255, 0.0
  %v4320 = vmax.f32 %v4256, 0.0
  %v4321 = vmax.f32 %v4257, 0.0
  %v4322 = vmax.f32 %v4258, 0.0
  %v4323 = vmax.f32 %v4259, 0.0
  %v4324 = vmax.f32 %v4260, 0.0
  %v4325 = vmax.f32 %v4261, 0.0
  %v4326 = vmax.f32 %v4262, 0.0
  %v4327 = vmax.f32 %v4263, 0.0
  %v4328 = vmax.f32 %v4264, 0.0
  %v4329 = vmax.f32 %v4265, 0.0
  %v4330 = vmax.f32 %v4266, 0.0
  %v4331 = vmax.f32 %v4267, 0.0
  %v4332 = vmax.f32 %v4268, 0.0
  %v4333 = vmax.f32 %v4269, 0.0
  %v4334 = vmax.f32 %v4270, 0.0
  %v4335 = vmax.f32 %v4271, 0.0
  %v4336 = vmax.f32 %v4272, 0.0
  %v4337 = vmax.f32 %v4273, 0.0
  %v4338 = vmax.f32 %v4274, 0.0
  %v4339 = vmax.f32 %v4275, 0.0
  %v4340 = vmax.f32 %v4276, 0.0
  %v4341 = vmax.f32 %v4277, 0.0
  %v4342 = vmax.f32 %v4278, 0.0
  %v4343 = vmax.f32 %v4279, 0.0
  %v4344 = vmax.f32 %v4280, 0.0
  %v4345 = vmax.f32 %v4281, 0.0
  %v4346 = vmax.f32 %v4282, 0.0
  %v4347 = vmax.f32 %v4283, 0.0
  %v4348 = vmax.f32 %v4284, 0.0
  %v4349 = vmax.f32 %v4285, 0.0
  %v4350 = vmax.f32 %v4286, 0.0
  %v4351 = vmax.f32 %v4287, 0.0
  %v4352 = vmax.f32 %v4288, 0.0
  %v4353 = vmax.f32 %v4289, 0.0
  %v4354 = vmax.f32 %v4290, 0.0
  %v4355 = vmax.f32 %v4291, 0.0
  %v4356 = vmax.f32 %v4292, 0.0
  %v4357 = vmax.f32 %v4293, 0.0
  %v4358 = vmax.f32 %v4294, 0.0
  %4423 = vset.pattern.permute.xlu0 0
  %4424 = vperm.xlu0 %4423, %v4295
  %v4425 = vpop.permute.xlu0 %4424
  %4426 = vset.pattern.permute.xlu0 0
  %4427 = vperm.xlu0 %4426, %v4296
  %v4428 = vpop.permute.xlu0 %4427
  %4429 = vset.pattern.permute.xlu0 0
  %4430 = vperm.xlu0 %4429, %v4297
  %v4431 = vpop.permute.xlu0 %4430
  %4432 = vset.pattern.permute.xlu0 0
  %4433 = vperm.xlu0 %4432, %v4298
  %v4434 = vpop.permute.xlu0 %4433
  %4435 = vset.pattern.permute.xlu0 0
  %4436 = vperm.xlu0 %4435, %v4299
  %v4437 = vpop.permute.xlu0 %4436
  %4438 = vset.pattern.permute.xlu0 0
  %4439 = vperm.xlu0 %4438, %v4300
  %v4440 = vpop.permute.xlu0 %4439
  %4441 = vset.pattern.permute.xlu0 0
  %4442 = vperm.xlu0 %4441, %v4301
  %v4443 = vpop.permute.xlu0 %4442
  %4444 = vset.pattern.permute.xlu0 0
  %4445 = vperm.xlu0 %4444, %v4302
  %v4446 = vpop.permute.xlu0 %4445
  %4447 = vset.pattern.permute.xlu0 0
  %4448 = vperm.xlu0 %4447, %v4303
  %v4449 = vpop.permute.xlu0 %4448
  %4450 = vset.pattern.permute.xlu0 0
  %4451 = vperm.xlu0 %4450, %v4304
  %v4452 = vpop.permute.xlu0 %4451
  %4453 = vset.pattern.permute.xlu0 0
  %4454 = vperm.xlu0 %4453, %v4305
  %v4455 = vpop.permute.xlu0 %4454
  %4456 = vset.pattern.permute.xlu0 0
  %4457 = vperm.xlu0 %4456, %v4306
  %v4458 = vpop.permute.xlu0 %4457
  %4459 = vset.pattern.permute.xlu0 0
  %4460 = vperm.xlu0 %4459, %v4307
  %v4461 = vpop.permute.xlu0 %4460
  %4462 = vset.pattern.permute.xlu0 0
  %4463 = vperm.xlu0 %4462, %v4308
  %v4464 = vpop.permute.xlu0 %4463
  %4465 = vset.pattern.permute.xlu0 0
  %4466 = vperm.xlu0 %4465, %v4309
  %v4467 = vpop.permute.xlu0 %4466
  %4468 = vset.pattern.permute.xlu0 0
  %4469 = vperm.xlu0 %4468, %v4310
  %v4470 = vpop.permute.xlu0 %4469
  %4471 = vset.pattern.permute.xlu0 0
  %4472 = vperm.xlu0 %4471, %v4311
  %v4473 = vpop.permute.xlu0 %4472
  %4474 = vset.pattern.permute.xlu0 0
  %4475 = vperm.xlu0 %4474, %v4312
  %v4476 = vpop.permute.xlu0 %4475
  %4477 = vset.pattern.permute.xlu0 0
  %4478 = vperm.xlu0 %4477, %v4313
  %v4479 = vpop.permute.xlu0 %4478
  %4480 = vset.pattern.permute.xlu0 0
  %4481 = vperm.xlu0 %4480, %v4314
  %v4482 = vpop.permute.xlu0 %4481
  %4483 = vset.pattern.permute.xlu0 0
  %4484 = vperm.xlu0 %4483, %v4315
  %v4485 = vpop.permute.xlu0 %4484
  %4486 = vset.pattern.permute.xlu0 0
  %4487 = vperm.xlu0 %4486, %v4316
  %v4488 = vpop.permute.xlu0 %4487
  %4489 = vset.pattern.permute.xlu0 0
  %4490 = vperm.xlu0 %4489, %v4317
  %v4491 = vpop.permute.xlu0 %4490
  %4492 = vset.pattern.permute.xlu0 0
  %4493 = vperm.xlu0 %4492, %v4318
  %v4494 = vpop.permute.xlu0 %4493
  %4495 = vset.pattern.permute.xlu0 0
  %4496 = vperm.xlu0 %4495, %v4319
  %v4497 = vpop.permute.xlu0 %4496
  %4498 = vset.pattern.permute.xlu0 0
  %4499 = vperm.xlu0 %4498, %v4320
  %v4500 = vpop.permute.xlu0 %4499
  %4501 = vset.pattern.permute.xlu0 0
  %4502 = vperm.xlu0 %4501, %v4321
  %v4503 = vpop.permute.xlu0 %4502
  %4504 = vset.pattern.permute.xlu0 0
  %4505 = vperm.xlu0 %4504, %v4322
  %v4506 = vpop.permute.xlu0 %4505
  %4507 = vset.pattern.permute.xlu0 0
  %4508 = vperm.xlu0 %4507, %v4323
  %v4509 = vpop.permute.xlu0 %4508
  %4510 = vset.pattern.permute.xlu0 0
  %4511 = vperm.xlu0 %4510, %v4324
  %v4512 = vpop.permute.xlu0 %4511
  %4513 = vset.pattern.permute.xlu0 0
  %4514 = vperm.xlu0 %4513, %v4325
  %v4515 = vpop.permute.xlu0 %4514
  %4516 = vset.pattern.permute.xlu0 0
  %4517 = vperm.xlu0 %4516, %v4326
  %v4518 = vpop.permute.xlu0 %4517
  %4519 = vset.pattern.permute.xlu0 0
  %4520 = vperm.xlu0 %4519, %v4327
  %v4521 = vpop.permute.xlu0 %4520
  %4522 = vset.pattern.permute.xlu0 0
  %4523 = vperm.xlu0 %4522, %v4328
  %v4524 = vpop.permute.xlu0 %4523
  %4525 = vset.pattern.permute.xlu0 0
  %4526 = vperm.xlu0 %4525, %v4329
  %v4527 = vpop.permute.xlu0 %4526
  %4528 = vset.pattern.permute.xlu0 0
  %4529 = vperm.xlu0 %4528, %v4330
  %v4530 = vpop.permute.xlu0 %4529
  %4531 = vset.pattern.permute.xlu0 0
  %4532 = vperm.xlu0 %4531, %v4331
  %v4533 = vpop.permute.xlu0 %4532
  %4534 = vset.pattern.permute.xlu0 0
  %4535 = vperm.xlu0 %4534, %v4332
  %v4536 = vpop.permute.xlu0 %4535
  %4537 = vset.pattern.permute.xlu0 0
  %4538 = vperm.xlu0 %4537, %v4333
  %v4539 = vpop.permute.xlu0 %4538
  %4540 = vset.pattern.permute.xlu0 0
  %4541 = vperm.xlu0 %4540, %v4334
  %v4542 = vpop.permute.xlu0 %4541
  %4543 = vset.pattern.permute.xlu0 0
  %4544 = vperm.xlu0 %4543, %v4335
  %v4545 = vpop.permute.xlu0 %4544
  %4546 = vset.pattern.permute.xlu0 0
  %4547 = vperm.xlu0 %4546, %v4336
  %v4548 = vpop.permute.xlu0 %4547
  %4549 = vset.pattern.permute.xlu0 0
  %4550 = vperm.xlu0 %4549, %v4337
  %v4551 = vpop.permute.xlu0 %4550
  %4552 = vset.pattern.permute.xlu0 0
  %4553 = vperm.xlu0 %4552, %v4338
  %v4554 = vpop.permute.xlu0 %4553
  %4555 = vset.pattern.permute.xlu0 0
  %4556 = vperm.xlu0 %4555, %v4339
  %v4557 = vpop.permute.xlu0 %4556
  %4558 = vset.pattern.permute.xlu0 0
  %4559 = vperm.xlu0 %4558, %v4340
  %v4560 = vpop.permute.xlu0 %4559
  %4561 = vset.pattern.permute.xlu0 0
  %4562 = vperm.xlu0 %4561, %v4341
  %v4563 = vpop.permute.xlu0 %4562
  %4564 = vset.pattern.permute.xlu0 0
  %4565 = vperm.xlu0 %4564, %v4342
  %v4566 = vpop.permute.xlu0 %4565
  %4567 = vset.pattern.permute.xlu0 0
  %4568 = vperm.xlu0 %4567, %v4343
  %v4569 = vpop.permute.xlu0 %4568
  %4570 = vset.pattern.permute.xlu0 0
  %4571 = vperm.xlu0 %4570, %v4344
  %v4572 = vpop.permute.xlu0 %4571
  %4573 = vset.pattern.permute.xlu0 0
  %4574 = vperm.xlu0 %4573, %v4345
  %v4575 = vpop.permute.xlu0 %4574
  %4576 = vset.pattern.permute.xlu0 0
  %4577 = vperm.xlu0 %4576, %v4346
  %v4578 = vpop.permute.xlu0 %4577
  %4579 = vset.pattern.permute.xlu0 0
  %4580 = vperm.xlu0 %4579, %v4347
  %v4581 = vpop.permute.xlu0 %4580
  %4582 = vset.pattern.permute.xlu0 0
  %4583 = vperm.xlu0 %4582, %v4348
  %v4584 = vpop.permute.xlu0 %4583
  %4585 = vset.pattern.permute.xlu0 0
  %4586 = vperm.xlu0 %4585, %v4349
  %v4587 = vpop.permute.xlu0 %4586
  %4588 = vset.pattern.permute.xlu0 0
  %4589 = vperm.xlu0 %4588, %v4350
  %v4590 = vpop.permute.xlu0 %4589
  %4591 = vset.pattern.permute.xlu0 0
  %4592 = vperm.xlu0 %4591, %v4351
  %v4593 = vpop.permute.xlu0 %4592
  %4594 = vset.pattern.permute.xlu0 0
  %4595 = vperm.xlu0 %4594, %v4352
  %v4596 = vpop.permute.xlu0 %4595
  %4597 = vset.pattern.permute.xlu0 0
  %4598 = vperm.xlu0 %4597, %v4353
  %v4599 = vpop.permute.xlu0 %4598
  %4600 = vset.pattern.permute.xlu0 0
  %4601 = vperm.xlu0 %4600, %v4354
  %v4602 = vpop.permute.xlu0 %4601
  %4603 = vset.pattern.permute.xlu0 0
  %4604 = vperm.xlu0 %4603, %v4355
  %v4605 = vpop.permute.xlu0 %4604
  %4606 = vset.pattern.permute.xlu0 0
  %4607 = vperm.xlu0 %4606, %v4356
  %v4608 = vpop.permute.xlu0 %4607
  %4609 = vset.pattern.permute.xlu0 0
  %4610 = vperm.xlu0 %4609, %v4357
  %v4611 = vpop.permute.xlu0 %4610
  %4612 = vset.pattern.permute.xlu0 0
  %4613 = vperm.xlu0 %4612, %v4358
  %v4614 = vpop.permute.xlu0 %4613
  %v4615 = vlaneseq
  %v4616 = vand.u32 %v4615, 127
  %v4617 = vlaneseq
  %v4618 = vshrl.u32 %v4617, 7
  %v4619 = vsub.s32 %v4616, %v4618
  %v4620 = vrot.slane %v4425, %v4619
  %v4621 = vadd.s32 %v4616, 4294967288
  %v4622 = vlaneseq
  %v4623 = vshrl.u32 %v4622, 7
  %v4624 = vsub.s32 %v4621, %v4623
  %v4625 = vrot.slane %v4428, %v4624
  %vm4626 = vcmask 130112
  %v4627 = vsel %vm4626, %v4625, %v4620
  %v4628 = vlaneseq
  %v4629 = vshrl.u32 %v4628, 7
  %v4630 = vsub.s32 %v4616, %v4629
  %v4631 = vrot.slane %v4431, %v4630
  %v4632 = vlaneseq
  %v4633 = vshrl.u32 %v4632, 7
  %v4634 = vsub.s32 %v4621, %v4633
  %v4635 = vrot.slane %v4434, %v4634
  %v4636 = vsel %vm4626, %v4635, %v4631
  %v4637 = vlaneseq
  %v4638 = vshrl.u32 %v4637, 7
  %v4639 = vsub.s32 %v4616, %v4638
  %v4640 = vrot.slane %v4437, %v4639
  %v4641 = vlaneseq
  %v4642 = vshrl.u32 %v4641, 7
  %v4643 = vsub.s32 %v4621, %v4642
  %v4644 = vrot.slane %v4440, %v4643
  %v4645 = vsel %vm4626, %v4644, %v4640
  %v4646 = vlaneseq
  %v4647 = vshrl.u32 %v4646, 7
  %v4648 = vsub.s32 %v4616, %v4647
  %v4649 = vrot.slane %v4443, %v4648
  %v4650 = vlaneseq
  %v4651 = vshrl.u32 %v4650, 7
  %v4652 = vsub.s32 %v4621, %v4651
  %v4653 = vrot.slane %v4446, %v4652
  %v4654 = vsel %vm4626, %v4653, %v4649
  %v4655 = vlaneseq
  %v4656 = vshrl.u32 %v4655, 7
  %v4657 = vsub.s32 %v4616, %v4656
  %v4658 = vrot.slane %v4449, %v4657
  %v4659 = vlaneseq
  %v4660 = vshrl.u32 %v4659, 7
  %v4661 = vsub.s32 %v4621, %v4660
  %v4662 = vrot.slane %v4452, %v4661
  %v4663 = vsel %vm4626, %v4662, %v4658
  %v4664 = vlaneseq
  %v4665 = vshrl.u32 %v4664, 7
  %v4666 = vsub.s32 %v4616, %v4665
  %v4667 = vrot.slane %v4455, %v4666
  %v4668 = vlaneseq
  %v4669 = vshrl.u32 %v4668, 7
  %v4670 = vsub.s32 %v4621, %v4669
  %v4671 = vrot.slane %v4458, %v4670
  %v4672 = vsel %vm4626, %v4671, %v4667
  %v4673 = vlaneseq
  %v4674 = vshrl.u32 %v4673, 7
  %v4675 = vsub.s32 %v4616, %v4674
  %v4676 = vrot.slane %v4461, %v4675
  %v4677 = vlaneseq
  %v4678 = vshrl.u32 %v4677, 7
  %v4679 = vsub.s32 %v4621, %v4678
  %v4680 = vrot.slane %v4464, %v4679
  %v4681 = vsel %vm4626, %v4680, %v4676
  %v4682 = vlaneseq
  %v4683 = vshrl.u32 %v4682, 7
  %v4684 = vsub.s32 %v4616, %v4683
  %v4685 = vrot.slane %v4467, %v4684
  %v4686 = vlaneseq
  %v4687 = vshrl.u32 %v4686, 7
  %v4688 = vsub.s32 %v4621, %v4687
  %v4689 = vrot.slane %v4470, %v4688
  %v4690 = vsel %vm4626, %v4689, %v4685
  %v4691 = vlaneseq
  %v4692 = vshrl.u32 %v4691, 7
  %v4693 = vsub.s32 %v4616, %v4692
  %v4694 = vrot.slane %v4473, %v4693
  %v4695 = vlaneseq
  %v4696 = vshrl.u32 %v4695, 7
  %v4697 = vsub.s32 %v4621, %v4696
  %v4698 = vrot.slane %v4476, %v4697
  %v4699 = vsel %vm4626, %v4698, %v4694
  %v4700 = vlaneseq
  %v4701 = vshrl.u32 %v4700, 7
  %v4702 = vsub.s32 %v4616, %v4701
  %v4703 = vrot.slane %v4479, %v4702
  %v4704 = vlaneseq
  %v4705 = vshrl.u32 %v4704, 7
  %v4706 = vsub.s32 %v4621, %v4705
  %v4707 = vrot.slane %v4482, %v4706
  %v4708 = vsel %vm4626, %v4707, %v4703
  %v4709 = vlaneseq
  %v4710 = vshrl.u32 %v4709, 7
  %v4711 = vsub.s32 %v4616, %v4710
  %v4712 = vrot.slane %v4485, %v4711
  %v4713 = vlaneseq
  %v4714 = vshrl.u32 %v4713, 7
  %v4715 = vsub.s32 %v4621, %v4714
  %v4716 = vrot.slane %v4488, %v4715
  %v4717 = vsel %vm4626, %v4716, %v4712
  %v4718 = vlaneseq
  %v4719 = vshrl.u32 %v4718, 7
  %v4720 = vsub.s32 %v4616, %v4719
  %v4721 = vrot.slane %v4491, %v4720
  %v4722 = vlaneseq
  %v4723 = vshrl.u32 %v4722, 7
  %v4724 = vsub.s32 %v4621, %v4723
  %v4725 = vrot.slane %v4494, %v4724
  %v4726 = vsel %vm4626, %v4725, %v4721
  %v4727 = vlaneseq
  %v4728 = vshrl.u32 %v4727, 7
  %v4729 = vsub.s32 %v4616, %v4728
  %v4730 = vrot.slane %v4497, %v4729
  %v4731 = vlaneseq
  %v4732 = vshrl.u32 %v4731, 7
  %v4733 = vsub.s32 %v4621, %v4732
  %v4734 = vrot.slane %v4500, %v4733
  %v4735 = vsel %vm4626, %v4734, %v4730
  %v4736 = vlaneseq
  %v4737 = vshrl.u32 %v4736, 7
  %v4738 = vsub.s32 %v4616, %v4737
  %v4739 = vrot.slane %v4503, %v4738
  %v4740 = vlaneseq
  %v4741 = vshrl.u32 %v4740, 7
  %v4742 = vsub.s32 %v4621, %v4741
  %v4743 = vrot.slane %v4506, %v4742
  %v4744 = vsel %vm4626, %v4743, %v4739
  %v4745 = vlaneseq
  %v4746 = vshrl.u32 %v4745, 7
  %v4747 = vsub.s32 %v4616, %v4746
  %v4748 = vrot.slane %v4509, %v4747
  %v4749 = vlaneseq
  %v4750 = vshrl.u32 %v4749, 7
  %v4751 = vsub.s32 %v4621, %v4750
  %v4752 = vrot.slane %v4512, %v4751
  %v4753 = vsel %vm4626, %v4752, %v4748
  %v4754 = vlaneseq
  %v4755 = vshrl.u32 %v4754, 7
  %v4756 = vsub.s32 %v4616, %v4755
  %v4757 = vrot.slane %v4515, %v4756
  %v4758 = vlaneseq
  %v4759 = vshrl.u32 %v4758, 7
  %v4760 = vsub.s32 %v4621, %v4759
  %v4761 = vrot.slane %v4518, %v4760
  %v4762 = vsel %vm4626, %v4761, %v4757
  %v4763 = vlaneseq
  %v4764 = vshrl.u32 %v4763, 7
  %v4765 = vsub.s32 %v4616, %v4764
  %v4766 = vrot.slane %v4521, %v4765
  %v4767 = vlaneseq
  %v4768 = vshrl.u32 %v4767, 7
  %v4769 = vsub.s32 %v4621, %v4768
  %v4770 = vrot.slane %v4524, %v4769
  %v4771 = vsel %vm4626, %v4770, %v4766
  %v4772 = vlaneseq
  %v4773 = vshrl.u32 %v4772, 7
  %v4774 = vsub.s32 %v4616, %v4773
  %v4775 = vrot.slane %v4527, %v4774
  %v4776 = vlaneseq
  %v4777 = vshrl.u32 %v4776, 7
  %v4778 = vsub.s32 %v4621, %v4777
  %v4779 = vrot.slane %v4530, %v4778
  %v4780 = vsel %vm4626, %v4779, %v4775
  %v4781 = vlaneseq
  %v4782 = vshrl.u32 %v4781, 7
  %v4783 = vsub.s32 %v4616, %v4782
  %v4784 = vrot.slane %v4533, %v4783
  %v4785 = vlaneseq
  %v4786 = vshrl.u32 %v4785, 7
  %v4787 = vsub.s32 %v4621, %v4786
  %v4788 = vrot.slane %v4536, %v4787
  %v4789 = vsel %vm4626, %v4788, %v4784
  %v4790 = vlaneseq
  %v4791 = vshrl.u32 %v4790, 7
  %v4792 = vsub.s32 %v4616, %v4791
  %v4793 = vrot.slane %v4539, %v4792
  %v4794 = vlaneseq
  %v4795 = vshrl.u32 %v4794, 7
  %v4796 = vsub.s32 %v4621, %v4795
  %v4797 = vrot.slane %v4542, %v4796
  %v4798 = vsel %vm4626, %v4797, %v4793
  %v4799 = vlaneseq
  %v4800 = vshrl.u32 %v4799, 7
  %v4801 = vsub.s32 %v4616, %v4800
  %v4802 = vrot.slane %v4545, %v4801
  %v4803 = vlaneseq
  %v4804 = vshrl.u32 %v4803, 7
  %v4805 = vsub.s32 %v4621, %v4804
  %v4806 = vrot.slane %v4548, %v4805
  %v4807 = vsel %vm4626, %v4806, %v4802
  %v4808 = vlaneseq
  %v4809 = vshrl.u32 %v4808, 7
  %v4810 = vsub.s32 %v4616, %v4809
  %v4811 = vrot.slane %v4551, %v4810
  %v4812 = vlaneseq
  %v4813 = vshrl.u32 %v4812, 7
  %v4814 = vsub.s32 %v4621, %v4813
  %v4815 = vrot.slane %v4554, %v4814
  %v4816 = vsel %vm4626, %v4815, %v4811
  %v4817 = vlaneseq
  %v4818 = vshrl.u32 %v4817, 7
  %v4819 = vsub.s32 %v4616, %v4818
  %v4820 = vrot.slane %v4557, %v4819
  %v4821 = vlaneseq
  %v4822 = vshrl.u32 %v4821, 7
  %v4823 = vsub.s32 %v4621, %v4822
  %v4824 = vrot.slane %v4560, %v4823
  %v4825 = vsel %vm4626, %v4824, %v4820
  %v4826 = vlaneseq
  %v4827 = vshrl.u32 %v4826, 7
  %v4828 = vsub.s32 %v4616, %v4827
  %v4829 = vrot.slane %v4563, %v4828
  %v4830 = vlaneseq
  %v4831 = vshrl.u32 %v4830, 7
  %v4832 = vsub.s32 %v4621, %v4831
  %v4833 = vrot.slane %v4566, %v4832
  %v4834 = vsel %vm4626, %v4833, %v4829
  %v4835 = vlaneseq
  %v4836 = vshrl.u32 %v4835, 7
  %v4837 = vsub.s32 %v4616, %v4836
  %v4838 = vrot.slane %v4569, %v4837
  %v4839 = vlaneseq
  %v4840 = vshrl.u32 %v4839, 7
  %v4841 = vsub.s32 %v4621, %v4840
  %v4842 = vrot.slane %v4572, %v4841
  %v4843 = vsel %vm4626, %v4842, %v4838
  %v4844 = vlaneseq
  %v4845 = vshrl.u32 %v4844, 7
  %v4846 = vsub.s32 %v4616, %v4845
  %v4847 = vrot.slane %v4575, %v4846
  %v4848 = vlaneseq
  %v4849 = vshrl.u32 %v4848, 7
  %v4850 = vsub.s32 %v4621, %v4849
  %v4851 = vrot.slane %v4578, %v4850
  %v4852 = vsel %vm4626, %v4851, %v4847
  %v4853 = vlaneseq
  %v4854 = vshrl.u32 %v4853, 7
  %v4855 = vsub.s32 %v4616, %v4854
  %v4856 = vrot.slane %v4581, %v4855
  %v4857 = vlaneseq
  %v4858 = vshrl.u32 %v4857, 7
  %v4859 = vsub.s32 %v4621, %v4858
  %v4860 = vrot.slane %v4584, %v4859
  %v4861 = vsel %vm4626, %v4860, %v4856
  %v4862 = vlaneseq
  %v4863 = vshrl.u32 %v4862, 7
  %v4864 = vsub.s32 %v4616, %v4863
  %v4865 = vrot.slane %v4587, %v4864
  %v4866 = vlaneseq
  %v4867 = vshrl.u32 %v4866, 7
  %v4868 = vsub.s32 %v4621, %v4867
  %v4869 = vrot.slane %v4590, %v4868
  %v4870 = vsel %vm4626, %v4869, %v4865
  %v4871 = vlaneseq
  %v4872 = vshrl.u32 %v4871, 7
  %v4873 = vsub.s32 %v4616, %v4872
  %v4874 = vrot.slane %v4593, %v4873
  %v4875 = vlaneseq
  %v4876 = vshrl.u32 %v4875, 7
  %v4877 = vsub.s32 %v4621, %v4876
  %v4878 = vrot.slane %v4596, %v4877
  %v4879 = vsel %vm4626, %v4878, %v4874
  %v4880 = vlaneseq
  %v4881 = vshrl.u32 %v4880, 7
  %v4882 = vsub.s32 %v4616, %v4881
  %v4883 = vrot.slane %v4599, %v4882
  %v4884 = vlaneseq
  %v4885 = vshrl.u32 %v4884, 7
  %v4886 = vsub.s32 %v4621, %v4885
  %v4887 = vrot.slane %v4602, %v4886
  %v4888 = vsel %vm4626, %v4887, %v4883
  %v4889 = vlaneseq
  %v4890 = vshrl.u32 %v4889, 7
  %v4891 = vsub.s32 %v4616, %v4890
  %v4892 = vrot.slane %v4605, %v4891
  %v4893 = vlaneseq
  %v4894 = vshrl.u32 %v4893, 7
  %v4895 = vsub.s32 %v4621, %v4894
  %v4896 = vrot.slane %v4608, %v4895
  %v4897 = vsel %vm4626, %v4896, %v4892
  %v4898 = vlaneseq
  %v4899 = vshrl.u32 %v4898, 7
  %v4900 = vsub.s32 %v4616, %v4899
  %v4901 = vrot.slane %v4611, %v4900
  %v4902 = vlaneseq
  %v4903 = vshrl.u32 %v4902, 7
  %v4904 = vsub.s32 %v4621, %v4903
  %v4905 = vrot.slane %v4614, %v4904
  %v4906 = vsel %vm4626, %v4905, %v4901
  %vm4907 = vcmask 1041409
  %v4908 = vsel %vm4907, %v4636, %v4627
  %vm4909 = vcmask 1042434
  %v4910 = vsel %vm4909, %v4645, %v4908
  %vm4911 = vcmask 1043459
  %v4912 = vsel %vm4911, %v4654, %v4910
  %vm4913 = vcmask 1044484
  %v4914 = vsel %vm4913, %v4663, %v4912
  %vm4915 = vcmask 1045509
  %v4916 = vsel %vm4915, %v4672, %v4914
  %vm4917 = vcmask 1046534
  %v4918 = vsel %vm4917, %v4681, %v4916
  %vm4919 = vcmask 1047559
  %v4920 = vsel %vm4919, %v4690, %v4918
  %v4921 = vsel %vm4907, %v4708, %v4699
  %v4922 = vsel %vm4909, %v4717, %v4921
  %v4923 = vsel %vm4911, %v4726, %v4922
  %v4924 = vsel %vm4913, %v4735, %v4923
  %v4925 = vsel %vm4915, %v4744, %v4924
  %v4926 = vsel %vm4917, %v4753, %v4925
  %v4927 = vsel %vm4919, %v4762, %v4926
  %v4928 = vsel %vm4907, %v4780, %v4771
  %v4929 = vsel %vm4909, %v4789, %v4928
  %v4930 = vsel %vm4911, %v4798, %v4929
  %v4931 = vsel %vm4913, %v4807, %v4930
  %v4932 = vsel %vm4915, %v4816, %v4931
  %v4933 = vsel %vm4917, %v4825, %v4932
  %v4934 = vsel %vm4919, %v4834, %v4933
  %v4935 = vsel %vm4907, %v4852, %v4843
  %v4936 = vsel %vm4909, %v4861, %v4935
  %v4937 = vsel %vm4911, %v4870, %v4936
  %v4938 = vsel %vm4913, %v4879, %v4937
  %v4939 = vsel %vm4915, %v4888, %v4938
  %v4940 = vsel %vm4917, %v4897, %v4939
  %v4941 = vsel %vm4919, %v4906, %v4940
  %vm4946 = vcmask 130048
  %4947 = vst.msk [vmem:[%s4] sm:$0xff] %vm4946, %v4920
  %4948 = vst.msk [vmem:[%s4 + $0x8] sm:$0xff] %vm4946, %v4927
  %4949 = vst.msk [vmem:[%s4 + $0x10] sm:$0xff] %vm4946, %v4934
  %4950 = vst.msk [vmem:[%s4 + $0x18] sm:$0xff] %vm4946, %v4941
  // Predicated region
  $region18: #{tpu_custom_call.1} parent=0 // pred_check
    _
  $region19: #{tpu_custom_call.1} parent=0 // pred_check_branch
    %4952 = sbr.rel (0) target = $region21
  $region20: #{tpu_custom_call.1} parent=0 // pred_region
    _
  $region21: #{tpu_custom_call.1} parent=0 // pred_fallthru
    _
  // Predicated region
  $region22: #{tpu_custom_call.1} parent=0 // pred_check
    _
  $region23: #{tpu_custom_call.1} parent=0 // pred_check_branch
    %4954 = sbr.rel (0) target = $region25
  $region24: #{tpu_custom_call.1} parent=0 // pred_region
    _
  $region25: #{tpu_custom_call.1} parent=0 // pred_fallthru
    _

</llo_original>
